<compile_context>
chip_gen: v7x
topology: tpu7x:2x2x1
jax: 0.10.0
libtpu: 0.0.40
codegen_flags: <defaults>
</compile_context>

<pallas_src>
import functools
import math

import jax
import jax.numpy as jnp
from jax.experimental import pallas as pl
from jax.experimental.pallas import tpu as pltpu


# ---------------------------------------------------------------------------
# math helpers (shared by the kernel and the pure-JAX reference)
# ---------------------------------------------------------------------------
def _layernorm(x, w, b, eps=1e-5):
    mu = jnp.mean(x, axis=-1, keepdims=True)
    var = jnp.mean((x - mu) ** 2, axis=-1, keepdims=True)
    return (x - mu) * jax.lax.rsqrt(var + eps) * w + b


def _gelu_exact(x):
    # PyTorch nn.functional.gelu default (erf form) == Whisper "gelu".
    return 0.5 * x * (1.0 + jax.lax.erf(x * 0.7071067811865476))


def _softmax_last(x):
    x = x - jnp.max(x, axis=-1, keepdims=True)
    e = jnp.exp(x)
    return e / jnp.sum(e, axis=-1, keepdims=True)


GLOBAL_ORDER = ["we", "be", "mt", "lnfw", "lnfb", "pw", "pb"]
LAYER_ORDER = ["ln1w", "ln1b", "qw", "qb", "kw", "vw", "vb", "ow", "ob",
               "ln2w", "ln2b", "f1w", "f1b", "f2w", "f2b"]

_NEG_BIG = -1e30   # finite "-inf" for the online-softmax running max


# ---------------------------------------------------------------------------
# Pallas kernel: one (batch-block b, layer l) grid step
# ---------------------------------------------------------------------------
def mae_decoder_kernel(num_heads, kv_tile, approx_recip,
                       x_ref, mask_ref,
                       we_ref, be_ref, mt_ref, lnfw_ref, lnfb_ref, pw_ref, pb_ref,
                       ln1w_ref, ln1b_ref, qw_ref, qb_ref, kw_ref, vw_ref, vb_ref,
                       ow_ref, ob_ref, ln2w_ref, ln2b_ref,
                       f1w_ref, f1b_ref, f2w_ref, f2b_ref,
                       o_ref, h_ref, k_scr, v_scr, ctx_scr):
    layer = pl.program_id(1)
    n_layers = pl.num_programs(1)
    cdt = we_ref.dtype          # MXU compute dtype (bf16 or f32); accum is f32
    H = num_heads

    Bb, T, D = h_ref.shape
    M = Bb * T                  # batch folded into the matmul M dimension
    dh = D // H
    n_kv = T // kv_tile

    # ----- first layer step: decoder_embed + mask-token blending (f32) -----
    @pl.when(layer == 0)
    def _embed():
        x = x_ref[...].reshape(M, x_ref.shape[-1])                 # (M, E) cdt
        m = mask_ref[...].reshape(M, 1)                            # (M, 1) f32
        h0 = jnp.dot(x, we_ref[...],
                     preferred_element_type=jnp.float32) + be_ref[...]
        h_ref[...] = (h0 * (1.0 - m) + mt_ref[...] * m).reshape(Bb, T, D)

    h = h_ref[...].reshape(M, D)                                   # (M, D) f32

    # --------------------- self-attention (pre-LN) ---------------------
    hn = _layernorm(h, ln1w_ref[0], ln1b_ref[0]).astype(cdt)       # (M, D)

    # full-width projections (1/sqrt(dh) pre-folded into qw/qb host-side)
    q = jnp.dot(hn, qw_ref[0], preferred_element_type=jnp.float32) + qb_ref[0]
    k = jnp.dot(hn, kw_ref[0], preferred_element_type=jnp.float32)  # no k bias
    v = jnp.dot(hn, vw_ref[0], preferred_element_type=jnp.float32) + vb_ref[0]

    q3 = q.reshape(Bb, T, D).astype(cdt)
    k3 = k.reshape(Bb, T, D)
    v3 = v.reshape(Bb, T, D)

    # per-head online-softmax (flash) over key tiles; heads via static lane
    # slices of the lane-dense projections (no 4-D transpose needed).
    for hh in range(H):
        sl = slice(hh * dh, (hh + 1) * dh)
        k_scr[...] = k3[:, :, sl].astype(cdt)                      # (Bb, T, dh)
        v_scr[...] = v3[:, :, sl].astype(cdt)
        q_h = q3[:, :, sl]                                         # (Bb, T, dh)

        m0 = jnp.full((Bb, T, 1), _NEG_BIG, jnp.float32)
        l0 = jnp.zeros((Bb, T, 1), jnp.float32)
        a0 = jnp.zeros((Bb, T, dh), jnp.float32)

        def kv_step(i, carry, q_h=q_h):
            m_i, l_i, acc = carry
            off = pl.multiple_of(i * kv_tile, kv_tile)
            k_t = k_scr[:, pl.ds(off, kv_tile), :]                 # (Bb, kv, dh)
            v_t = v_scr[:, pl.ds(off, kv_tile), :]
            s = jnp.einsum("bqd,bkd->bqk", q_h, k_t,
                           preferred_element_type=jnp.float32)     # (Bb, T, kv)
            m_new = jnp.maximum(m_i, jnp.max(s, axis=-1, keepdims=True))
            alpha = jnp.exp(m_i - m_new)
            # NOTE: exp kept in f32 everywhere (v5e has no bf16 EUP); the
            # probabilities are cast to the compute dtype only for the P.V
            # matmul below.
            p = jnp.exp(s - m_new)
            l_new = alpha * l_i + jnp.sum(p, axis=-1, keepdims=True)
            acc_new = alpha * acc + jnp.einsum(
                "bqk,bkd->bqd", p.astype(cdt), v_t,
                preferred_element_type=jnp.float32)
            return m_new, l_new, acc_new

        m_i, l_i, acc = jax.lax.fori_loop(0, n_kv, kv_step, (m0, l0, a0))
        if approx_recip:
            ctx_h = acc * pl.reciprocal(l_i, approx=True)
        else:
            ctx_h = acc / l_i
        ctx_scr[:, :, sl] = ctx_h.astype(cdt)

    # single full-width attention output projection + residual
    ctx = ctx_scr[...].reshape(M, D)                               # (M, D) cdt
    attn = jnp.dot(ctx, ow_ref[0],
                   preferred_element_type=jnp.float32) + ob_ref[0]
    h = h + attn

    # --------------------------- MLP (pre-LN) ---------------------------
    hn2 = _layernorm(h, ln2w_ref[0], ln2b_ref[0]).astype(cdt)
    f = jnp.dot(hn2, f1w_ref[0],
                preferred_element_type=jnp.float32) + f1b_ref[0]
    f = _gelu_exact(f)
    f = jnp.dot(f.astype(cdt), f2w_ref[0],
                preferred_element_type=jnp.float32) + f2b_ref[0]
    h = h + f
    h_ref[...] = h.reshape(Bb, T, D)

    # ----- last layer step: final LayerNorm + prediction head -----
    @pl.when(layer == n_layers - 1)
    def _head():
        hf = _layernorm(h, lnfw_ref[...], lnfb_ref[...])
        out = jnp.dot(hf.astype(cdt), pw_ref[...],
                      preferred_element_type=jnp.float32) + pb_ref[...]
        o_ref[...] = out.reshape(Bb, T, -1).astype(o_ref.dtype)


# ---------------------------------------------------------------------------
# wrapper helpers
# ---------------------------------------------------------------------------
def _zero_map(ndim, b, l):
    return (0,) * ndim


def _layer_map(ndim, b, l):
    return (l,) + (0,) * (ndim - 1)


def _bytes(shape, dtype):
    return math.prod(shape) * jnp.dtype(dtype).itemsize


def _auto_batch_block(batch, cap=8):
    """Largest divisor of `batch` (<= cap) keeping >= 2 parallel grid steps."""
    best = 1
    for bb in range(1, min(batch, cap) + 1):
        if batch % bb == 0 and batch // bb >= 2:
            best = bb
    return best


def _auto_kv_tile(total_frames, target=512):
    if total_frames <= target:
        return total_frames
    for c in range(target, 7, -1):
        if total_frames % c == 0 and c % 8 == 0:
            return c
    for c in range(target, 0, -1):
        if total_frames % c == 0:
            return c
    return total_frames


def _vmem_limit_bytes(est):
    try:
        info = pltpu.get_tpu_info()
        phys = int(getattr(info, "vmem_capacity_bytes", 64 * 2**20))
    except Exception:
        phys = 64 * 2**20                        # conservative (v7x physical)
    cap = min(100 * 2**20, max(32 * 2**20, phys - 16 * 2**20))
    want = max(32 * 2**20, int(1.5 * est) + 4 * 2**20)
    return int(min(cap, want))


# ---------------------------------------------------------------------------
# wrapper
# ---------------------------------------------------------------------------
def simple_mae_decoder(x, masked_indices, params, *, num_heads, depth,
                       compute_dtype=jnp.bfloat16, batch_block=None,
                       kv_tile=None, out_dtype=None):
    B, T, E = x.shape
    D = params["we"].shape[1]
    F = params["f1w"].shape[-1]
    P = params["pw"].shape[1]
    assert D % num_heads == 0
    dh = D // num_heads
    cdt = jnp.dtype(compute_dtype)
    odt = jnp.dtype(out_dtype) if out_dtype is not None else jnp.dtype(x.dtype)
    approx_recip = bool(cdt != jnp.dtype(jnp.float32))

    Bb = batch_block if batch_block is not None else _auto_batch_block(B)
    assert B % Bb == 0
    nB = B // Bb
    kt = kv_tile if kv_tile is not None else _auto_kv_tile(T)
    assert T % kt == 0

    # lane-dense prediction head: pad output dim to a multiple of 128
    Ppad = max(128, ((P + 127) // 128) * 128)
    pw_pad = jnp.zeros((D, Ppad), params["pw"].dtype).at[:, :P].set(params["pw"])
    pb_pad = jnp.zeros((1, Ppad), params["pb"].dtype).at[:, :P].set(params["pb"])

    scale = float(dh) ** -0.5   # folded into q_proj weight/bias host-side

    glob = dict(
        we=params["we"].astype(cdt),
        be=params["be"], mt=params["mt"],
        lnfw=params["lnfw"], lnfb=params["lnfb"],
        pw=pw_pad.astype(cdt), pb=pb_pad,
    )
    lay = dict(
        ln1w=params["ln1w"], ln1b=params["ln1b"],
        qw=(params["qw"] * scale).astype(cdt), qb=params["qb"] * scale,
        kw=params["kw"].astype(cdt),
        vw=params["vw"].astype(cdt), vb=params["vb"],
        ow=params["ow"].astype(cdt), ob=params["ob"],
        ln2w=params["ln2w"], ln2b=params["ln2b"],
        f1w=params["f1w"].astype(cdt), f1b=params["f1b"],
        f2w=params["f2w"].astype(cdt), f2b=params["f2b"],
    )
    global_vals = [glob[k] for k in GLOBAL_ORDER]
    layer_vals = [lay[k] for k in LAYER_ORDER]

    x_c = x.astype(cdt)                                            # MXU operand
    mask = masked_indices.astype(jnp.float32)[..., None]           # (B, T, 1)

    in_specs = (
        [pl.BlockSpec((Bb, T, E), lambda b, l: (b, 0, 0)),
         pl.BlockSpec((Bb, T, 1), lambda b, l: (b, 0, 0))]
        + [pl.BlockSpec(w.shape, functools.partial(_zero_map, w.ndim))
           for w in global_vals]
        + [pl.BlockSpec((1,) + w.shape[1:], functools.partial(_layer_map, w.ndim))
           for w in layer_vals]
    )
    # TODO(synk): constant global-weight specs could use pipeline_mode=
    # pl.Buffered(1) to drop their second buffer; left default-buffered here.

    # VMEM estimate: double-buffered one-layer weights + globals + I/O blocks
    # + scratch + flash-bounded intermediates.
    M = Bb * T
    c = cdt.itemsize
    layer_blk = sum(_bytes(w.shape[1:], w.dtype) for w in layer_vals)
    glob_blk = sum(_bytes(w.shape, w.dtype) for w in global_vals)
    io_blk = (_bytes((Bb, T, E), cdt) + _bytes((Bb, T, 1), jnp.float32)
              + _bytes((Bb, T, Ppad), odt))
    scratch_b = (_bytes((Bb, T, D), jnp.float32) + 2 * _bytes((Bb, T, dh), cdt)
                 + _bytes((Bb, T, D), cdt))
    inter = (4 * M * D * 4            # q, k, v, attn (f32)
             + 2 * M * D * c          # cdt copies of hn / q
             + 3 * Bb * T * kt * 4    # flash score / prob tiles
             + 2 * M * F * 4          # MLP hidden
             + M * Ppad * 4)          # prediction-head accumulator
    est = 2 * layer_blk + 2 * glob_blk + 2 * io_blk + scratch_b + inter
    vmem_limit = _vmem_limit_bytes(est)

    kernel = functools.partial(mae_decoder_kernel, num_heads, kt, approx_recip)

    out = pl.pallas_call(
        kernel,
        out_shape=jax.ShapeDtypeStruct((B, T, Ppad), odt),
        grid=(nB, depth),
        in_specs=in_specs,
        out_specs=pl.BlockSpec((Bb, T, Ppad), lambda b, l: (b, 0, 0)),
        scratch_shapes=[
            pltpu.VMEM((Bb, T, D), jnp.float32),    # residual carry
            pltpu.VMEM((Bb, T, dh), cdt),           # current-head K
            pltpu.VMEM((Bb, T, dh), cdt),           # current-head V
            pltpu.VMEM((Bb, T, D), cdt),            # merged attention context
        ],
        compiler_params=pltpu.CompilerParams(
            dimension_semantics=("parallel", "arbitrary"),
            vmem_limit_bytes=vmem_limit),
    )(x_c, mask, *global_vals, *layer_vals)

    return out[..., :P]


# ---------------------------------------------------------------------------
# deterministic parameter construction (shapes follow the module __init__)
# ---------------------------------------------------------------------------
def make_params(key, encoder_embed_dim, decoder_embed_dim, depth, output_patch_dim):
    E, D, P = encoder_embed_dim, decoder_embed_dim, output_patch_dim
    F = 4 * D   # encoder_ffn_dim = decoder_embed_dim * 4
    ks = jax.random.split(key, 12)
    rnd = lambda k, shape, s=0.02: jax.random.normal(k, shape, jnp.float32) * s
    return dict(
        we=rnd(ks[0], (E, D)), be=jnp.zeros((1, D), jnp.float32),
        mt=rnd(ks[1], (1, D)),                             # mask_token, std=0.02
        ln1w=jnp.ones((depth, 1, D), jnp.float32), ln1b=jnp.zeros((depth, 1, D), jnp.float32),
        qw=rnd(ks[2], (depth, D, D)), qb=rnd(ks[3], (depth, 1, D)),
        kw=rnd(ks[4], (depth, D, D)),                      # k_proj has no bias in Whisper
        vw=rnd(ks[5], (depth, D, D)), vb=rnd(ks[6], (depth, 1, D)),
        ow=rnd(ks[7], (depth, D, D)), ob=jnp.zeros((depth, 1, D), jnp.float32),
        ln2w=jnp.ones((depth, 1, D), jnp.float32), ln2b=jnp.zeros((depth, 1, D), jnp.float32),
        f1w=rnd(ks[8], (depth, D, F)), f1b=rnd(ks[9], (depth, 1, F)),
        f2w=rnd(ks[10], (depth, F, D)), f2b=jnp.zeros((depth, 1, D), jnp.float32),
        lnfw=jnp.ones((1, D), jnp.float32), lnfb=jnp.zeros((1, D), jnp.float32),
        pw=rnd(ks[11], (D, P)), pb=jnp.zeros((1, P), jnp.float32),
    )


# ---------------------------------------------------------------------------
# pure-JAX reference (same math, for the sanity check)
# ---------------------------------------------------------------------------
def reference(x, masked_indices, params, *, num_heads, depth):
    p = params
    B, T, E = x.shape
    D = p["we"].shape[1]
    dh = D // num_heads
    scale = float(dh) ** -0.5

    h = x @ p["we"] + p["be"]
    m = masked_indices.astype(h.dtype)[..., None]
    h = h * (1.0 - m) + p["mt"][None] * m

    for l in range(depth):
        res = h
        hn = _layernorm(h, p["ln1w"][l], p["ln1b"][l])
        q = (hn @ p["qw"][l] + p["qb"][l]) * scale
        k = hn @ p["kw"][l]
        v = hn @ p["vw"][l] + p["vb"][l]
        qh = q.reshape(B, T, num_heads, dh).transpose(0, 2, 1, 3)
        kh = k.reshape(B, T, num_heads, dh).transpose(0, 2, 1, 3)
        vh = v.reshape(B, T, num_heads, dh).transpose(0, 2, 1, 3)
        s = jnp.einsum("bhtd,bhsd->bhts", qh, kh)
        pr = _softmax_last(s)
        ctx = jnp.einsum("bhts,bhsd->bhtd", pr, vh).transpose(0, 2, 1, 3).reshape(B, T, D)
        h = res + (ctx @ p["ow"][l] + p["ob"][l])

        res = h
        hn = _layernorm(h, p["ln2w"][l], p["ln2b"][l])
        f = _gelu_exact(hn @ p["f1w"][l] + p["f1b"][l])
        h = res + (f @ p["f2w"][l] + p["f2b"][l])

    h = _layernorm(h, p["lnfw"], p["lnfb"])
    return h @ p["pw"] + p["pb"]


# ---------------------------------------------------------------------------
if __name__ == "__main__":
    # small shapes consistent with the module's forward
    B, T = 2, 16                   # batch, total_frames
    E, D = 32, 32                  # encoder_embed_dim, decoder_embed_dim
    DEPTH, H = 2, 4                # decoder_depth, decoder_num_heads
    P = 16                         # output_patch_dim

    key = jax.random.PRNGKey(0)
    kx, km, kp = jax.random.split(key, 3)

    x = jax.random.normal(kx, (B, T, E), jnp.float32)
    masked_indices = jax.random.uniform(km, (B, T)) < 0.5          # boolean mask
    params = make_params(kp, E, D, DEPTH, P)

    ref = reference(x, masked_indices, params, num_heads=H, depth=DEPTH)

    # exact-precision path: f32 MXU operands, exact reciprocal, f32 output,
    # default batch-blocking (Bb=1 so the parallel grid extent stays 2),
    # kv_tile=8 -> 2-tile online-softmax path is exercised and verified.
    out_f32 = simple_mae_decoder(x, masked_indices, params,
                                 num_heads=H, depth=DEPTH,
                                 compute_dtype=jnp.float32, kv_tile=8)
    out_f32 = jax.block_until_ready(out_f32)
    assert out_f32.shape == (B, T, P)
    assert jnp.allclose(out_f32, ref, atol=1e-3, rtol=1e-3), "f32 kernel mismatch"

    # performance path: bf16 MXU operands (f32 accumulation), approx
    # reciprocal, bf16 HBM writeback, explicit batch blocking (Bb=2).
    out_bf16 = simple_mae_decoder(x, masked_indices, params,
                                  num_heads=H, depth=DEPTH,
                                  compute_dtype=jnp.bfloat16,
                                  batch_block=2, kv_tile=8,
                                  out_dtype=jnp.bfloat16)
    out_bf16 = jax.block_until_ready(out_bf16)
    assert out_bf16.shape == (B, T, P)
    assert jnp.allclose(out_bf16.astype(jnp.float32), ref,
                        atol=2e-2, rtol=2e-2), "bf16 kernel mismatch"

    print("KERNEL_OK")
</pallas_src>

<mosaic_0001>
module attributes {stable_mosaic.version = 11 : i64} {
  func.func @mae_decoder_kernel(%arg0: i32, %arg1: i32, %arg2: memref<1x16x32xf32, #tpu.memory_space<vmem>>, %arg3: memref<1x16x1xf32, #tpu.memory_space<vmem>>, %arg4: memref<32x32xf32, #tpu.memory_space<vmem>>, %arg5: memref<1x32xf32, #tpu.memory_space<vmem>>, %arg6: memref<1x32xf32, #tpu.memory_space<vmem>>, %arg7: memref<1x32xf32, #tpu.memory_space<vmem>>, %arg8: memref<1x32xf32, #tpu.memory_space<vmem>>, %arg9: memref<32x128xf32, #tpu.memory_space<vmem>>, %arg10: memref<1x128xf32, #tpu.memory_space<vmem>>, %arg11: memref<1x1x32xf32, #tpu.memory_space<vmem>>, %arg12: memref<1x1x32xf32, #tpu.memory_space<vmem>>, %arg13: memref<1x32x32xf32, #tpu.memory_space<vmem>>, %arg14: memref<1x1x32xf32, #tpu.memory_space<vmem>>, %arg15: memref<1x32x32xf32, #tpu.memory_space<vmem>>, %arg16: memref<1x32x32xf32, #tpu.memory_space<vmem>>, %arg17: memref<1x1x32xf32, #tpu.memory_space<vmem>>, %arg18: memref<1x32x32xf32, #tpu.memory_space<vmem>>, %arg19: memref<1x1x32xf32, #tpu.memory_space<vmem>>, %arg20: memref<1x1x32xf32, #tpu.memory_space<vmem>>, %arg21: memref<1x1x32xf32, #tpu.memory_space<vmem>>, %arg22: memref<1x32x128xf32, #tpu.memory_space<vmem>>, %arg23: memref<1x1x128xf32, #tpu.memory_space<vmem>>, %arg24: memref<1x128x32xf32, #tpu.memory_space<vmem>>, %arg25: memref<1x1x32xf32, #tpu.memory_space<vmem>>, %arg26: memref<1x16x128xf32, #tpu.memory_space<vmem>>, %arg27: memref<1x16x32xf32, #tpu.memory_space<vmem>>, %arg28: memref<1x16x8xf32, #tpu.memory_space<vmem>>, %arg29: memref<1x16x8xf32, #tpu.memory_space<vmem>>, %arg30: memref<1x16x32xf32, #tpu.memory_space<vmem>>) attributes {dimension_semantics = [#tpu.dimension_semantics<parallel>, #tpu.dimension_semantics<arbitrary>], iteration_bounds = array<i64: 2, 2>, scalar_prefetch = 0 : i64, scratch_operands = 4 : i64, tpu.core_type = #tpu.core_type<tc>, window_params = [{transform_indices = @transform_0, window_bounds = array<i64: 1, 16, 32>}, {transform_indices = @transform_1, window_bounds = array<i64: 1, 16, 1>}, {pipeline_mode = #tpu.pipeline_mode<synchronous>, transform_indices = @transform_2, window_bounds = array<i64: 32, 32>}, {pipeline_mode = #tpu.pipeline_mode<synchronous>, transform_indices = @transform_3, window_bounds = array<i64: 1, 32>}, {pipeline_mode = #tpu.pipeline_mode<synchronous>, transform_indices = @transform_4, window_bounds = array<i64: 1, 32>}, {pipeline_mode = #tpu.pipeline_mode<synchronous>, transform_indices = @transform_5, window_bounds = array<i64: 1, 32>}, {pipeline_mode = #tpu.pipeline_mode<synchronous>, transform_indices = @transform_6, window_bounds = array<i64: 1, 32>}, {pipeline_mode = #tpu.pipeline_mode<synchronous>, transform_indices = @transform_7, window_bounds = array<i64: 32, 128>}, {pipeline_mode = #tpu.pipeline_mode<synchronous>, transform_indices = @transform_8, window_bounds = array<i64: 1, 128>}, {transform_indices = @transform_9, window_bounds = array<i64: 1, 1, 32>}, {transform_indices = @transform_10, window_bounds = array<i64: 1, 1, 32>}, {transform_indices = @transform_11, window_bounds = array<i64: 1, 32, 32>}, {transform_indices = @transform_12, window_bounds = array<i64: 1, 1, 32>}, {transform_indices = @transform_13, window_bounds = array<i64: 1, 32, 32>}, {transform_indices = @transform_14, window_bounds = array<i64: 1, 32, 32>}, {transform_indices = @transform_15, window_bounds = array<i64: 1, 1, 32>}, {transform_indices = @transform_16, window_bounds = array<i64: 1, 32, 32>}, {transform_indices = @transform_17, window_bounds = array<i64: 1, 1, 32>}, {transform_indices = @transform_18, window_bounds = array<i64: 1, 1, 32>}, {transform_indices = @transform_19, window_bounds = array<i64: 1, 1, 32>}, {transform_indices = @transform_20, window_bounds = array<i64: 1, 32, 128>}, {transform_indices = @transform_21, window_bounds = array<i64: 1, 1, 128>}, {transform_indices = @transform_22, window_bounds = array<i64: 1, 128, 32>}, {transform_indices = @transform_23, window_bounds = array<i64: 1, 1, 32>}, {transform_indices = @transform_24, window_bounds = array<i64: 1, 16, 128>}]} {
    %c0_i32 = arith.constant 0 : i32
    %0 = arith.cmpi eq, %arg1, %c0_i32 : i32
    %1 = arith.extui %0 : i1 to i32
    %c0_i32_0 = arith.constant 0 : i32
    %2 = arith.cmpi ne, %1, %c0_i32_0 : i32
    scf.if %2 {
      %c0_133 = arith.constant 0 : index
      %c0_134 = arith.constant 0 : index
      %c0_135 = arith.constant 0 : index
      %167 = vector.load %arg2[%c0_133, %c0_134, %c0_135] : memref<1x16x32xf32, #tpu.memory_space<vmem>>, vector<1x16x32xf32>
      %168 = vector.shape_cast %167 : vector<1x16x32xf32> to vector<16x32xf32>
      %c0_136 = arith.constant 0 : index
      %c0_137 = arith.constant 0 : index
      %c0_138 = arith.constant 0 : index
      %169 = vector.load %arg3[%c0_136, %c0_137, %c0_138] : memref<1x16x1xf32, #tpu.memory_space<vmem>>, vector<1x16x1xf32>
      %170 = vector.shape_cast %169 : vector<1x16x1xf32> to vector<16x1xf32>
      %c0_139 = arith.constant 0 : index
      %c0_140 = arith.constant 0 : index
      %171 = vector.load %arg4[%c0_139, %c0_140] : memref<32x32xf32, #tpu.memory_space<vmem>>, vector<32x32xf32>
      %cst_141 = arith.constant dense<0.000000e+00> : vector<16x32xf32>
      %172 = tpu.matmul %168, %171, %cst_141 {dimension_numbers = #tpu.dot_dimension_numbers<[1], [0], [0], [1], [0, 0, 1, 1], [], []>} : vector<16x32xf32>, vector<32x32xf32>, vector<16x32xf32> -> vector<16x32xf32>
      %c0_142 = arith.constant 0 : index
      %c0_143 = arith.constant 0 : index
      %173 = vector.load %arg5[%c0_142, %c0_143] : memref<1x32xf32, #tpu.memory_space<vmem>>, vector<1x32xf32>
      %174 = vector.broadcast %173 : vector<1x32xf32> to vector<16x32xf32>
      %175 = arith.addf %172, %174 : vector<16x32xf32>
      %cst_144 = arith.constant 1.000000e+00 : f32
      %176 = vector.broadcast %cst_144 : f32 to vector<16x1xf32>
      %177 = arith.subf %176, %170 : vector<16x1xf32>
      %178 = vector.broadcast %177 : vector<16x1xf32> to vector<16x32xf32>
      %179 = arith.mulf %175, %178 : vector<16x32xf32>
      %c0_145 = arith.constant 0 : index
      %c0_146 = arith.constant 0 : index
      %180 = vector.load %arg6[%c0_145, %c0_146] : memref<1x32xf32, #tpu.memory_space<vmem>>, vector<1x32xf32>
      %181 = vector.broadcast %180 : vector<1x32xf32> to vector<16x32xf32>
      %182 = vector.broadcast %170 : vector<16x1xf32> to vector<16x32xf32>
      %183 = arith.mulf %181, %182 : vector<16x32xf32>
      %184 = arith.addf %179, %183 : vector<16x32xf32>
      %185 = vector.shape_cast %184 : vector<16x32xf32> to vector<1x16x32xf32>
      %c0_147 = arith.constant 0 : index
      %c0_148 = arith.constant 0 : index
      %c0_149 = arith.constant 0 : index
      %186 = vector.load %arg27[%c0_147, %c0_148, %c0_149] : memref<1x16x32xf32, #tpu.memory_space<vmem>>, vector<1x16x32xf32>
      tpu.vector_store %arg27[%c0_147, %c0_148, %c0_149], %185 {strides = array<i32>} : memref<1x16x32xf32, #tpu.memory_space<vmem>>, vector<1x16x32xf32>,
    } else {
    }
    %c0 = arith.constant 0 : index
    %c0_1 = arith.constant 0 : index
    %c0_2 = arith.constant 0 : index
    %3 = vector.load %arg27[%c0, %c0_1, %c0_2] : memref<1x16x32xf32, #tpu.memory_space<vmem>>, vector<1x16x32xf32>
    %4 = vector.shape_cast %3 : vector<1x16x32xf32> to vector<16x32xf32>
    %c0_3 = arith.constant 0 : index
    %c0_4 = arith.constant 0 : index
    %c0_5 = arith.constant 0 : index
    %5 = vector.load %arg11[%c0_3, %c0_4, %c0_5] : memref<1x1x32xf32, #tpu.memory_space<vmem>>, vector<1x1x32xf32>
    %6 = vector.shape_cast %5 : vector<1x1x32xf32> to vector<1x32xf32>
    %c0_6 = arith.constant 0 : index
    %c0_7 = arith.constant 0 : index
    %c0_8 = arith.constant 0 : index
    %7 = vector.load %arg12[%c0_6, %c0_7, %c0_8] : memref<1x1x32xf32, #tpu.memory_space<vmem>>, vector<1x1x32xf32>
    %8 = vector.shape_cast %7 : vector<1x1x32xf32> to vector<1x32xf32>
    %cst = arith.constant dense<0.000000e+00> : vector<16xf32>
    %9 = vector.multi_reduction <add>, %4, %cst [1] : vector<16x32xf32> to vector<16xf32>
    %10 = vector.shape_cast %9 : vector<16xf32> to vector<16x1xf32>
    %cst_9 = arith.constant 3.200000e+01 : f32
    %11 = vector.broadcast %cst_9 : f32 to vector<16x1xf32>
    %12 = arith.divf %10, %11 : vector<16x1xf32>
    %13 = vector.broadcast %12 : vector<16x1xf32> to vector<16x32xf32>
    %14 = arith.subf %4, %13 : vector<16x32xf32>
    %15 = arith.mulf %14, %14 : vector<16x32xf32>
    %cst_10 = arith.constant dense<0.000000e+00> : vector<16xf32>
    %16 = vector.multi_reduction <add>, %15, %cst_10 [1] : vector<16x32xf32> to vector<16xf32>
    %17 = vector.shape_cast %16 : vector<16xf32> to vector<16x1xf32>
    %cst_11 = arith.constant 3.200000e+01 : f32
    %18 = vector.broadcast %cst_11 : f32 to vector<16x1xf32>
    %19 = arith.divf %17, %18 : vector<16x1xf32>
    %20 = vector.broadcast %12 : vector<16x1xf32> to vector<16x32xf32>
    %21 = arith.subf %4, %20 : vector<16x32xf32>
    %cst_12 = arith.constant 9.99999974E-6 : f32
    %22 = vector.broadcast %cst_12 : f32 to vector<16x1xf32>
    %23 = arith.addf %19, %22 : vector<16x1xf32>
    %24 = math.rsqrt %23 : vector<16x1xf32>
    %25 = vector.broadcast %24 : vector<16x1xf32> to vector<16x32xf32>
    %26 = arith.mulf %21, %25 : vector<16x32xf32>
    %27 = vector.broadcast %6 : vector<1x32xf32> to vector<16x32xf32>
    %28 = arith.mulf %26, %27 : vector<16x32xf32>
    %29 = vector.broadcast %8 : vector<1x32xf32> to vector<16x32xf32>
    %30 = arith.addf %28, %29 : vector<16x32xf32>
    %c0_13 = arith.constant 0 : index
    %c0_14 = arith.constant 0 : index
    %c0_15 = arith.constant 0 : index
    %31 = vector.load %arg13[%c0_13, %c0_14, %c0_15] : memref<1x32x32xf32, #tpu.memory_space<vmem>>, vector<1x32x32xf32>
    %32 = vector.shape_cast %31 : vector<1x32x32xf32> to vector<32x32xf32>
    %cst_16 = arith.constant dense<0.000000e+00> : vector<16x32xf32>
    %33 = tpu.matmul %30, %32, %cst_16 {dimension_numbers = #tpu.dot_dimension_numbers<[1], [0], [0], [1], [0, 0, 1, 1], [], []>} : vector<16x32xf32>, vector<32x32xf32>, vector<16x32xf32> -> vector<16x32xf32>
    %c0_17 = arith.constant 0 : index
    %c0_18 = arith.constant 0 : index
    %c0_19 = arith.constant 0 : index
    %34 = vector.load %arg14[%c0_17, %c0_18, %c0_19] : memref<1x1x32xf32, #tpu.memory_space<vmem>>, vector<1x1x32xf32>
    %35 = vector.shape_cast %34 : vector<1x1x32xf32> to vector<1x32xf32>
    %36 = vector.broadcast %35 : vector<1x32xf32> to vector<16x32xf32>
    %37 = arith.addf %33, %36 : vector<16x32xf32>
    %c0_20 = arith.constant 0 : index
    %c0_21 = arith.constant 0 : index
    %c0_22 = arith.constant 0 : index
    %38 = vector.load %arg15[%c0_20, %c0_21, %c0_22] : memref<1x32x32xf32, #tpu.memory_space<vmem>>, vector<1x32x32xf32>
    %39 = vector.shape_cast %38 : vector<1x32x32xf32> to vector<32x32xf32>
    %cst_23 = arith.constant dense<0.000000e+00> : vector<16x32xf32>
    %40 = tpu.matmul %30, %39, %cst_23 {dimension_numbers = #tpu.dot_dimension_numbers<[1], [0], [0], [1], [0, 0, 1, 1], [], []>} : vector<16x32xf32>, vector<32x32xf32>, vector<16x32xf32> -> vector<16x32xf32>
    %c0_24 = arith.constant 0 : index
    %c0_25 = arith.constant 0 : index
    %c0_26 = arith.constant 0 : index
    %41 = vector.load %arg16[%c0_24, %c0_25, %c0_26] : memref<1x32x32xf32, #tpu.memory_space<vmem>>, vector<1x32x32xf32>
    %42 = vector.shape_cast %41 : vector<1x32x32xf32> to vector<32x32xf32>
    %cst_27 = arith.constant dense<0.000000e+00> : vector<16x32xf32>
    %43 = tpu.matmul %30, %42, %cst_27 {dimension_numbers = #tpu.dot_dimension_numbers<[1], [0], [0], [1], [0, 0, 1, 1], [], []>} : vector<16x32xf32>, vector<32x32xf32>, vector<16x32xf32> -> vector<16x32xf32>
    %c0_28 = arith.constant 0 : index
    %c0_29 = arith.constant 0 : index
    %c0_30 = arith.constant 0 : index
    %44 = vector.load %arg17[%c0_28, %c0_29, %c0_30] : memref<1x1x32xf32, #tpu.memory_space<vmem>>, vector<1x1x32xf32>
    %45 = vector.shape_cast %44 : vector<1x1x32xf32> to vector<1x32xf32>
    %46 = vector.broadcast %45 : vector<1x32xf32> to vector<16x32xf32>
    %47 = arith.addf %43, %46 : vector<16x32xf32>
    %48 = vector.shape_cast %37 : vector<16x32xf32> to vector<1x16x32xf32>
    %49 = vector.shape_cast %40 : vector<16x32xf32> to vector<1x16x32xf32>
    %50 = vector.shape_cast %47 : vector<16x32xf32> to vector<1x16x32xf32>
    %51 = vector.extract_strided_slice %49 {offsets = [0, 0, 0], sizes = [1, 16, 8], strides = [1, 1, 1]} : vector<1x16x32xf32> to vector<1x16x8xf32>
    %c0_31 = arith.constant 0 : index
    %c0_32 = arith.constant 0 : index
    %c0_33 = arith.constant 0 : index
    %52 = vector.load %arg28[%c0_31, %c0_32, %c0_33] : memref<1x16x8xf32, #tpu.memory_space<vmem>>, vector<1x16x8xf32>
    tpu.vector_store %arg28[%c0_31, %c0_32, %c0_33], %51 {strides = array<i32>} : memref<1x16x8xf32, #tpu.memory_space<vmem>>, vector<1x16x8xf32>,
    %53 = vector.extract_strided_slice %50 {offsets = [0, 0, 0], sizes = [1, 16, 8], strides = [1, 1, 1]} : vector<1x16x32xf32> to vector<1x16x8xf32>
    %c0_34 = arith.constant 0 : index
    %c0_35 = arith.constant 0 : index
    %c0_36 = arith.constant 0 : index
    %54 = vector.load %arg29[%c0_34, %c0_35, %c0_36] : memref<1x16x8xf32, #tpu.memory_space<vmem>>, vector<1x16x8xf32>
    tpu.vector_store %arg29[%c0_34, %c0_35, %c0_36], %53 {strides = array<i32>} : memref<1x16x8xf32, #tpu.memory_space<vmem>>, vector<1x16x8xf32>,
    %55 = vector.extract_strided_slice %48 {offsets = [0, 0, 0], sizes = [1, 16, 8], strides = [1, 1, 1]} : vector<1x16x32xf32> to vector<1x16x8xf32>
    %cst_37 = arith.constant -1.000000e+30 : f32
    %56 = vector.broadcast %cst_37 : f32 to vector<1x16x1xf32>
    %cst_38 = arith.constant 0.000000e+00 : f32
    %57 = vector.broadcast %cst_38 : f32 to vector<1x16x1xf32>
    %cst_39 = arith.constant 0.000000e+00 : f32
    %58 = vector.broadcast %cst_39 : f32 to vector<1x16x8xf32>
    %c0_i32_40 = arith.constant 0 : i32
    %c2_i32 = arith.constant 2 : i32
    %59 = arith.addi %c0_i32_40, %c2_i32 : i32
    %c1_i32 = arith.constant 1 : i32
    %60:3 = scf.for %arg31 = %c0_i32_40 to %59 step %c1_i32 iter_args(%arg32 = %56, %arg33 = %57, %arg34 = %58) -> (vector<1x16x1xf32>, vector<1x16x1xf32>, vector<1x16x8xf32>)  : i32 {
      %c8_i32 = arith.constant 8 : i32
      %167 = arith.muli %arg31, %c8_i32 : i32
      %168 = tpu.assume_multiple %167, 8 : i32
      %c0_133 = arith.constant 0 : index
      %169 = arith.index_cast %168 : i32 to index
      %c0_134 = arith.constant 0 : index
      %170 = vector.load %arg28[%c0_133, %169, %c0_134] : memref<1x16x8xf32, #tpu.memory_space<vmem>>, vector<1x8x8xf32>
      %c0_135 = arith.constant 0 : index
      %171 = arith.index_cast %168 : i32 to index
      %c0_136 = arith.constant 0 : index
      %172 = vector.load %arg29[%c0_135, %171, %c0_136] : memref<1x16x8xf32, #tpu.memory_space<vmem>>, vector<1x8x8xf32>
      "tpu.trace_start"() <{level = 10 : i32, message = "bqd,bkd->bqk"}> : () -> ()
      %cst_137 = arith.constant dense<0.000000e+00> : vector<1x16x8xf32>
      %173 = tpu.matmul %55, %170, %cst_137 {dimension_numbers = #tpu.dot_dimension_numbers<[2], [2], [1], [1], [0, 0, 0, 1, 1, 1], [0], [0]>} : vector<1x16x8xf32>, vector<1x8x8xf32>, vector<1x16x8xf32> -> vector<1x16x8xf32>
      "tpu.trace_stop"() : () -> ()
      %cst_138 = arith.constant dense<0xFF800000> : vector<1x16xf32>
      %174 = vector.multi_reduction <maximumf>, %173, %cst_138 [2] : vector<1x16x8xf32> to vector<1x16xf32>
      %175 = vector.shape_cast %174 : vector<1x16xf32> to vector<1x16x1xf32>
      %176 = arith.maximumf %arg32, %175 : vector<1x16x1xf32>
      %177 = arith.subf %arg32, %176 : vector<1x16x1xf32>
      %178 = math.exp %177 : vector<1x16x1xf32>
      %179 = vector.broadcast %176 : vector<1x16x1xf32> to vector<1x16x8xf32>
      %180 = arith.subf %173, %179 : vector<1x16x8xf32>
      %181 = math.exp %180 : vector<1x16x8xf32>
      %182 = arith.mulf %178, %arg33 : vector<1x16x1xf32>
      %cst_139 = arith.constant dense<0.000000e+00> : vector<1x16xf32>
      %183 = vector.multi_reduction <add>, %181, %cst_139 [2] : vector<1x16x8xf32> to vector<1x16xf32>
      %184 = vector.shape_cast %183 : vector<1x16xf32> to vector<1x16x1xf32>
      %185 = arith.addf %182, %184 : vector<1x16x1xf32>
      %186 = vector.broadcast %178 : vector<1x16x1xf32> to vector<1x16x8xf32>
      %187 = arith.mulf %186, %arg34 : vector<1x16x8xf32>
      "tpu.trace_start"() <{level = 10 : i32, message = "bqk,bkd->bqd"}> : () -> ()
      %cst_140 = arith.constant dense<0.000000e+00> : vector<1x16x8xf32>
      %188 = tpu.matmul %181, %172, %cst_140 {dimension_numbers = #tpu.dot_dimension_numbers<[2], [1], [1], [2], [0, 0, 0, 1, 1, 2], [0], [0]>} : vector<1x16x8xf32>, vector<1x8x8xf32>, vector<1x16x8xf32> -> vector<1x16x8xf32>
      "tpu.trace_stop"() : () -> ()
      %189 = arith.addf %187, %188 : vector<1x16x8xf32>
      scf.yield %176, %185, %189 : vector<1x16x1xf32>, vector<1x16x1xf32>, vector<1x16x8xf32>
    }
    %c2_i32_41 = arith.constant 2 : i32
    %61 = vector.broadcast %60#1 : vector<1x16x1xf32> to vector<1x16x8xf32>
    %62 = arith.divf %60#2, %61 : vector<1x16x8xf32>
    %c0_42 = arith.constant 0 : index
    %c0_43 = arith.constant 0 : index
    %c0_44 = arith.constant 0 : index
    %63 = vector.load %arg30[%c0_42, %c0_43, %c0_44] : memref<1x16x32xf32, #tpu.memory_space<vmem>>, vector<1x16x8xf32>
    tpu.vector_store %arg30[%c0_42, %c0_43, %c0_44], %62 {strides = array<i32>} : memref<1x16x32xf32, #tpu.memory_space<vmem>>, vector<1x16x8xf32>,
    %64 = vector.extract_strided_slice %49 {offsets = [0, 0, 8], sizes = [1, 16, 8], strides = [1, 1, 1]} : vector<1x16x32xf32> to vector<1x16x8xf32>
    %c0_45 = arith.constant 0 : index
    %c0_46 = arith.constant 0 : index
    %c0_47 = arith.constant 0 : index
    %65 = vector.load %arg28[%c0_45, %c0_46, %c0_47] : memref<1x16x8xf32, #tpu.memory_space<vmem>>, vector<1x16x8xf32>
    tpu.vector_store %arg28[%c0_45, %c0_46, %c0_47], %64 {strides = array<i32>} : memref<1x16x8xf32, #tpu.memory_space<vmem>>, vector<1x16x8xf32>,
    %66 = vector.extract_strided_slice %50 {offsets = [0, 0, 8], sizes = [1, 16, 8], strides = [1, 1, 1]} : vector<1x16x32xf32> to vector<1x16x8xf32>
    %c0_48 = arith.constant 0 : index
    %c0_49 = arith.constant 0 : index
    %c0_50 = arith.constant 0 : index
    %67 = vector.load %arg29[%c0_48, %c0_49, %c0_50] : memref<1x16x8xf32, #tpu.memory_space<vmem>>, vector<1x16x8xf32>
    tpu.vector_store %arg29[%c0_48, %c0_49, %c0_50], %66 {strides = array<i32>} : memref<1x16x8xf32, #tpu.memory_space<vmem>>, vector<1x16x8xf32>,
    %68 = vector.extract_strided_slice %48 {offsets = [0, 0, 8], sizes = [1, 16, 8], strides = [1, 1, 1]} : vector<1x16x32xf32> to vector<1x16x8xf32>
    %cst_51 = arith.constant -1.000000e+30 : f32
    %69 = vector.broadcast %cst_51 : f32 to vector<1x16x1xf32>
    %cst_52 = arith.constant 0.000000e+00 : f32
    %70 = vector.broadcast %cst_52 : f32 to vector<1x16x1xf32>
    %cst_53 = arith.constant 0.000000e+00 : f32
    %71 = vector.broadcast %cst_53 : f32 to vector<1x16x8xf32>
    %c0_i32_54 = arith.constant 0 : i32
    %c2_i32_55 = arith.constant 2 : i32
    %72 = arith.addi %c0_i32_54, %c2_i32_55 : i32
    %c1_i32_56 = arith.constant 1 : i32
    %73:3 = scf.for %arg31 = %c0_i32_54 to %72 step %c1_i32_56 iter_args(%arg32 = %69, %arg33 = %70, %arg34 = %71) -> (vector<1x16x1xf32>, vector<1x16x1xf32>, vector<1x16x8xf32>)  : i32 {
      %c8_i32 = arith.constant 8 : i32
      %167 = arith.muli %arg31, %c8_i32 : i32
      %168 = tpu.assume_multiple %167, 8 : i32
      %c0_133 = arith.constant 0 : index
      %169 = arith.index_cast %168 : i32 to index
      %c0_134 = arith.constant 0 : index
      %170 = vector.load %arg28[%c0_133, %169, %c0_134] : memref<1x16x8xf32, #tpu.memory_space<vmem>>, vector<1x8x8xf32>
      %c0_135 = arith.constant 0 : index
      %171 = arith.index_cast %168 : i32 to index
      %c0_136 = arith.constant 0 : index
      %172 = vector.load %arg29[%c0_135, %171, %c0_136] : memref<1x16x8xf32, #tpu.memory_space<vmem>>, vector<1x8x8xf32>
      "tpu.trace_start"() <{level = 10 : i32, message = "bqd,bkd->bqk"}> : () -> ()
      %cst_137 = arith.constant dense<0.000000e+00> : vector<1x16x8xf32>
      %173 = tpu.matmul %68, %170, %cst_137 {dimension_numbers = #tpu.dot_dimension_numbers<[2], [2], [1], [1], [0, 0, 0, 1, 1, 1], [0], [0]>} : vector<1x16x8xf32>, vector<1x8x8xf32>, vector<1x16x8xf32> -> vector<1x16x8xf32>
      "tpu.trace_stop"() : () -> ()
      %cst_138 = arith.constant dense<0xFF800000> : vector<1x16xf32>
      %174 = vector.multi_reduction <maximumf>, %173, %cst_138 [2] : vector<1x16x8xf32> to vector<1x16xf32>
      %175 = vector.shape_cast %174 : vector<1x16xf32> to vector<1x16x1xf32>
      %176 = arith.maximumf %arg32, %175 : vector<1x16x1xf32>
      %177 = arith.subf %arg32, %176 : vector<1x16x1xf32>
      %178 = math.exp %177 : vector<1x16x1xf32>
      %179 = vector.broadcast %176 : vector<1x16x1xf32> to vector<1x16x8xf32>
      %180 = arith.subf %173, %179 : vector<1x16x8xf32>
      %181 = math.exp %180 : vector<1x16x8xf32>
      %182 = arith.mulf %178, %arg33 : vector<1x16x1xf32>
      %cst_139 = arith.constant dense<0.000000e+00> : vector<1x16xf32>
      %183 = vector.multi_reduction <add>, %181, %cst_139 [2] : vector<1x16x8xf32> to vector<1x16xf32>
      %184 = vector.shape_cast %183 : vector<1x16xf32> to vector<1x16x1xf32>
      %185 = arith.addf %182, %184 : vector<1x16x1xf32>
      %186 = vector.broadcast %178 : vector<1x16x1xf32> to vector<1x16x8xf32>
      %187 = arith.mulf %186, %arg34 : vector<1x16x8xf32>
      "tpu.trace_start"() <{level = 10 : i32, message = "bqk,bkd->bqd"}> : () -> ()
      %cst_140 = arith.constant dense<0.000000e+00> : vector<1x16x8xf32>
      %188 = tpu.matmul %181, %172, %cst_140 {dimension_numbers = #tpu.dot_dimension_numbers<[2], [1], [1], [2], [0, 0, 0, 1, 1, 2], [0], [0]>} : vector<1x16x8xf32>, vector<1x8x8xf32>, vector<1x16x8xf32> -> vector<1x16x8xf32>
      "tpu.trace_stop"() : () -> ()
      %189 = arith.addf %187, %188 : vector<1x16x8xf32>
      scf.yield %176, %185, %189 : vector<1x16x1xf32>, vector<1x16x1xf32>, vector<1x16x8xf32>
    }
    %c2_i32_57 = arith.constant 2 : i32
    %74 = vector.broadcast %73#1 : vector<1x16x1xf32> to vector<1x16x8xf32>
    %75 = arith.divf %73#2, %74 : vector<1x16x8xf32>
    %c0_58 = arith.constant 0 : index
    %c0_59 = arith.constant 0 : index
    %c8 = arith.constant 8 : index
    %76 = vector.load %arg30[%c0_58, %c0_59, %c8] : memref<1x16x32xf32, #tpu.memory_space<vmem>>, vector<1x16x8xf32>
    tpu.vector_store %arg30[%c0_58, %c0_59, %c8], %75 {strides = array<i32>} : memref<1x16x32xf32, #tpu.memory_space<vmem>>, vector<1x16x8xf32>,
    %77 = vector.extract_strided_slice %49 {offsets = [0, 0, 16], sizes = [1, 16, 8], strides = [1, 1, 1]} : vector<1x16x32xf32> to vector<1x16x8xf32>
    %c0_60 = arith.constant 0 : index
    %c0_61 = arith.constant 0 : index
    %c0_62 = arith.constant 0 : index
    %78 = vector.load %arg28[%c0_60, %c0_61, %c0_62] : memref<1x16x8xf32, #tpu.memory_space<vmem>>, vector<1x16x8xf32>
    tpu.vector_store %arg28[%c0_60, %c0_61, %c0_62], %77 {strides = array<i32>} : memref<1x16x8xf32, #tpu.memory_space<vmem>>, vector<1x16x8xf32>,
    %79 = vector.extract_strided_slice %50 {offsets = [0, 0, 16], sizes = [1, 16, 8], strides = [1, 1, 1]} : vector<1x16x32xf32> to vector<1x16x8xf32>
    %c0_63 = arith.constant 0 : index
    %c0_64 = arith.constant 0 : index
    %c0_65 = arith.constant 0 : index
    %80 = vector.load %arg29[%c0_63, %c0_64, %c0_65] : memref<1x16x8xf32, #tpu.memory_space<vmem>>, vector<1x16x8xf32>
    tpu.vector_store %arg29[%c0_63, %c0_64, %c0_65], %79 {strides = array<i32>} : memref<1x16x8xf32, #tpu.memory_space<vmem>>, vector<1x16x8xf32>,
    %81 = vector.extract_strided_slice %48 {offsets = [0, 0, 16], sizes = [1, 16, 8], strides = [1, 1, 1]} : vector<1x16x32xf32> to vector<1x16x8xf32>
    %cst_66 = arith.constant -1.000000e+30 : f32
    %82 = vector.broadcast %cst_66 : f32 to vector<1x16x1xf32>
    %cst_67 = arith.constant 0.000000e+00 : f32
    %83 = vector.broadcast %cst_67 : f32 to vector<1x16x1xf32>
    %cst_68 = arith.constant 0.000000e+00 : f32
    %84 = vector.broadcast %cst_68 : f32 to vector<1x16x8xf32>
    %c0_i32_69 = arith.constant 0 : i32
    %c2_i32_70 = arith.constant 2 : i32
    %85 = arith.addi %c0_i32_69, %c2_i32_70 : i32
    %c1_i32_71 = arith.constant 1 : i32
    %86:3 = scf.for %arg31 = %c0_i32_69 to %85 step %c1_i32_71 iter_args(%arg32 = %82, %arg33 = %83, %arg34 = %84) -> (vector<1x16x1xf32>, vector<1x16x1xf32>, vector<1x16x8xf32>)  : i32 {
      %c8_i32 = arith.constant 8 : i32
      %167 = arith.muli %arg31, %c8_i32 : i32
      %168 = tpu.assume_multiple %167, 8 : i32
      %c0_133 = arith.constant 0 : index
      %169 = arith.index_cast %168 : i32 to index
      %c0_134 = arith.constant 0 : index
      %170 = vector.load %arg28[%c0_133, %169, %c0_134] : memref<1x16x8xf32, #tpu.memory_space<vmem>>, vector<1x8x8xf32>
      %c0_135 = arith.constant 0 : index
      %171 = arith.index_cast %168 : i32 to index
      %c0_136 = arith.constant 0 : index
      %172 = vector.load %arg29[%c0_135, %171, %c0_136] : memref<1x16x8xf32, #tpu.memory_space<vmem>>, vector<1x8x8xf32>
      "tpu.trace_start"() <{level = 10 : i32, message = "bqd,bkd->bqk"}> : () -> ()
      %cst_137 = arith.constant dense<0.000000e+00> : vector<1x16x8xf32>
      %173 = tpu.matmul %81, %170, %cst_137 {dimension_numbers = #tpu.dot_dimension_numbers<[2], [2], [1], [1], [0, 0, 0, 1, 1, 1], [0], [0]>} : vector<1x16x8xf32>, vector<1x8x8xf32>, vector<1x16x8xf32> -> vector<1x16x8xf32>
      "tpu.trace_stop"() : () -> ()
      %cst_138 = arith.constant dense<0xFF800000> : vector<1x16xf32>
      %174 = vector.multi_reduction <maximumf>, %173, %cst_138 [2] : vector<1x16x8xf32> to vector<1x16xf32>
      %175 = vector.shape_cast %174 : vector<1x16xf32> to vector<1x16x1xf32>
      %176 = arith.maximumf %arg32, %175 : vector<1x16x1xf32>
      %177 = arith.subf %arg32, %176 : vector<1x16x1xf32>
      %178 = math.exp %177 : vector<1x16x1xf32>
      %179 = vector.broadcast %176 : vector<1x16x1xf32> to vector<1x16x8xf32>
      %180 = arith.subf %173, %179 : vector<1x16x8xf32>
      %181 = math.exp %180 : vector<1x16x8xf32>
      %182 = arith.mulf %178, %arg33 : vector<1x16x1xf32>
      %cst_139 = arith.constant dense<0.000000e+00> : vector<1x16xf32>
      %183 = vector.multi_reduction <add>, %181, %cst_139 [2] : vector<1x16x8xf32> to vector<1x16xf32>
      %184 = vector.shape_cast %183 : vector<1x16xf32> to vector<1x16x1xf32>
      %185 = arith.addf %182, %184 : vector<1x16x1xf32>
      %186 = vector.broadcast %178 : vector<1x16x1xf32> to vector<1x16x8xf32>
      %187 = arith.mulf %186, %arg34 : vector<1x16x8xf32>
      "tpu.trace_start"() <{level = 10 : i32, message = "bqk,bkd->bqd"}> : () -> ()
      %cst_140 = arith.constant dense<0.000000e+00> : vector<1x16x8xf32>
      %188 = tpu.matmul %181, %172, %cst_140 {dimension_numbers = #tpu.dot_dimension_numbers<[2], [1], [1], [2], [0, 0, 0, 1, 1, 2], [0], [0]>} : vector<1x16x8xf32>, vector<1x8x8xf32>, vector<1x16x8xf32> -> vector<1x16x8xf32>
      "tpu.trace_stop"() : () -> ()
      %189 = arith.addf %187, %188 : vector<1x16x8xf32>
      scf.yield %176, %185, %189 : vector<1x16x1xf32>, vector<1x16x1xf32>, vector<1x16x8xf32>
    }
    %c2_i32_72 = arith.constant 2 : i32
    %87 = vector.broadcast %86#1 : vector<1x16x1xf32> to vector<1x16x8xf32>
    %88 = arith.divf %86#2, %87 : vector<1x16x8xf32>
    %c0_73 = arith.constant 0 : index
    %c0_74 = arith.constant 0 : index
    %c16 = arith.constant 16 : index
    %89 = vector.load %arg30[%c0_73, %c0_74, %c16] : memref<1x16x32xf32, #tpu.memory_space<vmem>>, vector<1x16x8xf32>
    tpu.vector_store %arg30[%c0_73, %c0_74, %c16], %88 {strides = array<i32>} : memref<1x16x32xf32, #tpu.memory_space<vmem>>, vector<1x16x8xf32>,
    %90 = vector.extract_strided_slice %49 {offsets = [0, 0, 24], sizes = [1, 16, 8], strides = [1, 1, 1]} : vector<1x16x32xf32> to vector<1x16x8xf32>
    %c0_75 = arith.constant 0 : index
    %c0_76 = arith.constant 0 : index
    %c0_77 = arith.constant 0 : index
    %91 = vector.load %arg28[%c0_75, %c0_76, %c0_77] : memref<1x16x8xf32, #tpu.memory_space<vmem>>, vector<1x16x8xf32>
    tpu.vector_store %arg28[%c0_75, %c0_76, %c0_77], %90 {strides = array<i32>} : memref<1x16x8xf32, #tpu.memory_space<vmem>>, vector<1x16x8xf32>,
    %92 = vector.extract_strided_slice %50 {offsets = [0, 0, 24], sizes = [1, 16, 8], strides = [1, 1, 1]} : vector<1x16x32xf32> to vector<1x16x8xf32>
    %c0_78 = arith.constant 0 : index
    %c0_79 = arith.constant 0 : index
    %c0_80 = arith.constant 0 : index
    %93 = vector.load %arg29[%c0_78, %c0_79, %c0_80] : memref<1x16x8xf32, #tpu.memory_space<vmem>>, vector<1x16x8xf32>
    tpu.vector_store %arg29[%c0_78, %c0_79, %c0_80], %92 {strides = array<i32>} : memref<1x16x8xf32, #tpu.memory_space<vmem>>, vector<1x16x8xf32>,
    %94 = vector.extract_strided_slice %48 {offsets = [0, 0, 24], sizes = [1, 16, 8], strides = [1, 1, 1]} : vector<1x16x32xf32> to vector<1x16x8xf32>
    %cst_81 = arith.constant -1.000000e+30 : f32
    %95 = vector.broadcast %cst_81 : f32 to vector<1x16x1xf32>
    %cst_82 = arith.constant 0.000000e+00 : f32
    %96 = vector.broadcast %cst_82 : f32 to vector<1x16x1xf32>
    %cst_83 = arith.constant 0.000000e+00 : f32
    %97 = vector.broadcast %cst_83 : f32 to vector<1x16x8xf32>
    %c0_i32_84 = arith.constant 0 : i32
    %c2_i32_85 = arith.constant 2 : i32
    %98 = arith.addi %c0_i32_84, %c2_i32_85 : i32
    %c1_i32_86 = arith.constant 1 : i32
    %99:3 = scf.for %arg31 = %c0_i32_84 to %98 step %c1_i32_86 iter_args(%arg32 = %95, %arg33 = %96, %arg34 = %97) -> (vector<1x16x1xf32>, vector<1x16x1xf32>, vector<1x16x8xf32>)  : i32 {
      %c8_i32 = arith.constant 8 : i32
      %167 = arith.muli %arg31, %c8_i32 : i32
      %168 = tpu.assume_multiple %167, 8 : i32
      %c0_133 = arith.constant 0 : index
      %169 = arith.index_cast %168 : i32 to index
      %c0_134 = arith.constant 0 : index
      %170 = vector.load %arg28[%c0_133, %169, %c0_134] : memref<1x16x8xf32, #tpu.memory_space<vmem>>, vector<1x8x8xf32>
      %c0_135 = arith.constant 0 : index
      %171 = arith.index_cast %168 : i32 to index
      %c0_136 = arith.constant 0 : index
      %172 = vector.load %arg29[%c0_135, %171, %c0_136] : memref<1x16x8xf32, #tpu.memory_space<vmem>>, vector<1x8x8xf32>
      "tpu.trace_start"() <{level = 10 : i32, message = "bqd,bkd->bqk"}> : () -> ()
      %cst_137 = arith.constant dense<0.000000e+00> : vector<1x16x8xf32>
      %173 = tpu.matmul %94, %170, %cst_137 {dimension_numbers = #tpu.dot_dimension_numbers<[2], [2], [1], [1], [0, 0, 0, 1, 1, 1], [0], [0]>} : vector<1x16x8xf32>, vector<1x8x8xf32>, vector<1x16x8xf32> -> vector<1x16x8xf32>
      "tpu.trace_stop"() : () -> ()
      %cst_138 = arith.constant dense<0xFF800000> : vector<1x16xf32>
      %174 = vector.multi_reduction <maximumf>, %173, %cst_138 [2] : vector<1x16x8xf32> to vector<1x16xf32>
      %175 = vector.shape_cast %174 : vector<1x16xf32> to vector<1x16x1xf32>
      %176 = arith.maximumf %arg32, %175 : vector<1x16x1xf32>
      %177 = arith.subf %arg32, %176 : vector<1x16x1xf32>
      %178 = math.exp %177 : vector<1x16x1xf32>
      %179 = vector.broadcast %176 : vector<1x16x1xf32> to vector<1x16x8xf32>
      %180 = arith.subf %173, %179 : vector<1x16x8xf32>
      %181 = math.exp %180 : vector<1x16x8xf32>
      %182 = arith.mulf %178, %arg33 : vector<1x16x1xf32>
      %cst_139 = arith.constant dense<0.000000e+00> : vector<1x16xf32>
      %183 = vector.multi_reduction <add>, %181, %cst_139 [2] : vector<1x16x8xf32> to vector<1x16xf32>
      %184 = vector.shape_cast %183 : vector<1x16xf32> to vector<1x16x1xf32>
      %185 = arith.addf %182, %184 : vector<1x16x1xf32>
      %186 = vector.broadcast %178 : vector<1x16x1xf32> to vector<1x16x8xf32>
      %187 = arith.mulf %186, %arg34 : vector<1x16x8xf32>
      "tpu.trace_start"() <{level = 10 : i32, message = "bqk,bkd->bqd"}> : () -> ()
      %cst_140 = arith.constant dense<0.000000e+00> : vector<1x16x8xf32>
      %188 = tpu.matmul %181, %172, %cst_140 {dimension_numbers = #tpu.dot_dimension_numbers<[2], [1], [1], [2], [0, 0, 0, 1, 1, 2], [0], [0]>} : vector<1x16x8xf32>, vector<1x8x8xf32>, vector<1x16x8xf32> -> vector<1x16x8xf32>
      "tpu.trace_stop"() : () -> ()
      %189 = arith.addf %187, %188 : vector<1x16x8xf32>
      scf.yield %176, %185, %189 : vector<1x16x1xf32>, vector<1x16x1xf32>, vector<1x16x8xf32>
    }
    %c2_i32_87 = arith.constant 2 : i32
    %100 = vector.broadcast %99#1 : vector<1x16x1xf32> to vector<1x16x8xf32>
    %101 = arith.divf %99#2, %100 : vector<1x16x8xf32>
    %c0_88 = arith.constant 0 : index
    %c0_89 = arith.constant 0 : index
    %c24 = arith.constant 24 : index
    %102 = vector.load %arg30[%c0_88, %c0_89, %c24] : memref<1x16x32xf32, #tpu.memory_space<vmem>>, vector<1x16x8xf32>
    tpu.vector_store %arg30[%c0_88, %c0_89, %c24], %101 {strides = array<i32>} : memref<1x16x32xf32, #tpu.memory_space<vmem>>, vector<1x16x8xf32>,
    %c0_90 = arith.constant 0 : index
    %c0_91 = arith.constant 0 : index
    %c0_92 = arith.constant 0 : index
    %103 = vector.load %arg30[%c0_90, %c0_91, %c0_92] : memref<1x16x32xf32, #tpu.memory_space<vmem>>, vector<1x16x32xf32>
    %104 = vector.shape_cast %103 : vector<1x16x32xf32> to vector<16x32xf32>
    %c0_93 = arith.constant 0 : index
    %c0_94 = arith.constant 0 : index
    %c0_95 = arith.constant 0 : index
    %105 = vector.load %arg18[%c0_93, %c0_94, %c0_95] : memref<1x32x32xf32, #tpu.memory_space<vmem>>, vector<1x32x32xf32>
    %106 = vector.shape_cast %105 : vector<1x32x32xf32> to vector<32x32xf32>
    %cst_96 = arith.constant dense<0.000000e+00> : vector<16x32xf32>
    %107 = tpu.matmul %104, %106, %cst_96 {dimension_numbers = #tpu.dot_dimension_numbers<[1], [0], [0], [1], [0, 0, 1, 1], [], []>} : vector<16x32xf32>, vector<32x32xf32>, vector<16x32xf32> -> vector<16x32xf32>
    %c0_97 = arith.constant 0 : index
    %c0_98 = arith.constant 0 : index
    %c0_99 = arith.constant 0 : index
    %108 = vector.load %arg19[%c0_97, %c0_98, %c0_99] : memref<1x1x32xf32, #tpu.memory_space<vmem>>, vector<1x1x32xf32>
    %109 = vector.shape_cast %108 : vector<1x1x32xf32> to vector<1x32xf32>
    %110 = vector.broadcast %109 : vector<1x32xf32> to vector<16x32xf32>
    %111 = arith.addf %107, %110 : vector<16x32xf32>
    %112 = arith.addf %4, %111 : vector<16x32xf32>
    %c0_100 = arith.constant 0 : index
    %c0_101 = arith.constant 0 : index
    %c0_102 = arith.constant 0 : index
    %113 = vector.load %arg20[%c0_100, %c0_101, %c0_102] : memref<1x1x32xf32, #tpu.memory_space<vmem>>, vector<1x1x32xf32>
    %114 = vector.shape_cast %113 : vector<1x1x32xf32> to vector<1x32xf32>
    %c0_103 = arith.constant 0 : index
    %c0_104 = arith.constant 0 : index
    %c0_105 = arith.constant 0 : index
    %115 = vector.load %arg21[%c0_103, %c0_104, %c0_105] : memref<1x1x32xf32, #tpu.memory_space<vmem>>, vector<1x1x32xf32>
    %116 = vector.shape_cast %115 : vector<1x1x32xf32> to vector<1x32xf32>
    %cst_106 = arith.constant dense<0.000000e+00> : vector<16xf32>
    %117 = vector.multi_reduction <add>, %112, %cst_106 [1] : vector<16x32xf32> to vector<16xf32>
    %118 = vector.shape_cast %117 : vector<16xf32> to vector<16x1xf32>
    %cst_107 = arith.constant 3.200000e+01 : f32
    %119 = vector.broadcast %cst_107 : f32 to vector<16x1xf32>
    %120 = arith.divf %118, %119 : vector<16x1xf32>
    %121 = vector.broadcast %120 : vector<16x1xf32> to vector<16x32xf32>
    %122 = arith.subf %112, %121 : vector<16x32xf32>
    %123 = arith.mulf %122, %122 : vector<16x32xf32>
    %cst_108 = arith.constant dense<0.000000e+00> : vector<16xf32>
    %124 = vector.multi_reduction <add>, %123, %cst_108 [1] : vector<16x32xf32> to vector<16xf32>
    %125 = vector.shape_cast %124 : vector<16xf32> to vector<16x1xf32>
    %cst_109 = arith.constant 3.200000e+01 : f32
    %126 = vector.broadcast %cst_109 : f32 to vector<16x1xf32>
    %127 = arith.divf %125, %126 : vector<16x1xf32>
    %128 = vector.broadcast %120 : vector<16x1xf32> to vector<16x32xf32>
    %129 = arith.subf %112, %128 : vector<16x32xf32>
    %cst_110 = arith.constant 9.99999974E-6 : f32
    %130 = vector.broadcast %cst_110 : f32 to vector<16x1xf32>
    %131 = arith.addf %127, %130 : vector<16x1xf32>
    %132 = math.rsqrt %131 : vector<16x1xf32>
    %133 = vector.broadcast %132 : vector<16x1xf32> to vector<16x32xf32>
    %134 = arith.mulf %129, %133 : vector<16x32xf32>
    %135 = vector.broadcast %114 : vector<1x32xf32> to vector<16x32xf32>
    %136 = arith.mulf %134, %135 : vector<16x32xf32>
    %137 = vector.broadcast %116 : vector<1x32xf32> to vector<16x32xf32>
    %138 = arith.addf %136, %137 : vector<16x32xf32>
    %c0_111 = arith.constant 0 : index
    %c0_112 = arith.constant 0 : index
    %c0_113 = arith.constant 0 : index
    %139 = vector.load %arg22[%c0_111, %c0_112, %c0_113] : memref<1x32x128xf32, #tpu.memory_space<vmem>>, vector<1x32x128xf32>
    %140 = vector.shape_cast %139 : vector<1x32x128xf32> to vector<32x128xf32>
    %cst_114 = arith.constant dense<0.000000e+00> : vector<16x128xf32>
    %141 = tpu.matmul %138, %140, %cst_114 {dimension_numbers = #tpu.dot_dimension_numbers<[1], [0], [0], [1], [0, 0, 1, 1], [], []>} : vector<16x32xf32>, vector<32x128xf32>, vector<16x128xf32> -> vector<16x128xf32>
    %c0_115 = arith.constant 0 : index
    %c0_116 = arith.constant 0 : index
    %c0_117 = arith.constant 0 : index
    %142 = vector.load %arg23[%c0_115, %c0_116, %c0_117] : memref<1x1x128xf32, #tpu.memory_space<vmem>>, vector<1x1x128xf32>
    %143 = vector.shape_cast %142 : vector<1x1x128xf32> to vector<1x128xf32>
    %144 = vector.broadcast %143 : vector<1x128xf32> to vector<16x128xf32>
    %145 = arith.addf %141, %144 : vector<16x128xf32>
    %cst_118 = arith.constant 5.000000e-01 : f32
    %146 = vector.broadcast %cst_118 : f32 to vector<16x128xf32>
    %147 = arith.mulf %146, %145 : vector<16x128xf32>
    %cst_119 = arith.constant 0.707106769 : f32
    %148 = vector.broadcast %cst_119 : f32 to vector<16x128xf32>
    %149 = arith.mulf %145, %148 : vector<16x128xf32>
    %150 = math.erf %149 : vector<16x128xf32>
    %cst_120 = arith.constant 1.000000e+00 : f32
    %151 = vector.broadcast %cst_120 : f32 to vector<16x128xf32>
    %152 = arith.addf %151, %150 : vector<16x128xf32>
    %153 = arith.mulf %147, %152 : vector<16x128xf32>
    %c0_121 = arith.constant 0 : index
    %c0_122 = arith.constant 0 : index
    %c0_123 = arith.constant 0 : index
    %154 = vector.load %arg24[%c0_121, %c0_122, %c0_123] : memref<1x128x32xf32, #tpu.memory_space<vmem>>, vector<1x128x32xf32>
    %155 = vector.shape_cast %154 : vector<1x128x32xf32> to vector<128x32xf32>
    %cst_124 = arith.constant dense<0.000000e+00> : vector<16x32xf32>
    %156 = tpu.matmul %153, %155, %cst_124 {dimension_numbers = #tpu.dot_dimension_numbers<[1], [0], [0], [1], [0, 0, 1, 1], [], []>} : vector<16x128xf32>, vector<128x32xf32>, vector<16x32xf32> -> vector<16x32xf32>
    %c0_125 = arith.constant 0 : index
    %c0_126 = arith.constant 0 : index
    %c0_127 = arith.constant 0 : index
    %157 = vector.load %arg25[%c0_125, %c0_126, %c0_127] : memref<1x1x32xf32, #tpu.memory_space<vmem>>, vector<1x1x32xf32>
    %158 = vector.shape_cast %157 : vector<1x1x32xf32> to vector<1x32xf32>
    %159 = vector.broadcast %158 : vector<1x32xf32> to vector<16x32xf32>
    %160 = arith.addf %156, %159 : vector<16x32xf32>
    %161 = arith.addf %112, %160 : vector<16x32xf32>
    %162 = vector.shape_cast %161 : vector<16x32xf32> to vector<1x16x32xf32>
    %c0_128 = arith.constant 0 : index
    %c0_129 = arith.constant 0 : index
    %c0_130 = arith.constant 0 : index
    %163 = vector.load %arg27[%c0_128, %c0_129, %c0_130] : memref<1x16x32xf32, #tpu.memory_space<vmem>>, vector<1x16x32xf32>
    tpu.vector_store %arg27[%c0_128, %c0_129, %c0_130], %162 {strides = array<i32>} : memref<1x16x32xf32, #tpu.memory_space<vmem>>, vector<1x16x32xf32>,
    %c1_i32_131 = arith.constant 1 : i32
    %164 = arith.cmpi eq, %arg1, %c1_i32_131 : i32
    %165 = arith.extui %164 : i1 to i32
    %c0_i32_132 = arith.constant 0 : i32
    %166 = arith.cmpi ne, %165, %c0_i32_132 : i32
    scf.if %166 {
      %c0_133 = arith.constant 0 : index
      %c0_134 = arith.constant 0 : index
      %167 = vector.load %arg7[%c0_133, %c0_134] : memref<1x32xf32, #tpu.memory_space<vmem>>, vector<1x32xf32>
      %c0_135 = arith.constant 0 : index
      %c0_136 = arith.constant 0 : index
      %168 = vector.load %arg8[%c0_135, %c0_136] : memref<1x32xf32, #tpu.memory_space<vmem>>, vector<1x32xf32>
      %cst_137 = arith.constant dense<0.000000e+00> : vector<16xf32>
      %169 = vector.multi_reduction <add>, %161, %cst_137 [1] : vector<16x32xf32> to vector<16xf32>
      %170 = vector.shape_cast %169 : vector<16xf32> to vector<16x1xf32>
      %cst_138 = arith.constant 3.200000e+01 : f32
      %171 = vector.broadcast %cst_138 : f32 to vector<16x1xf32>
      %172 = arith.divf %170, %171 : vector<16x1xf32>
      %173 = vector.broadcast %172 : vector<16x1xf32> to vector<16x32xf32>
      %174 = arith.subf %161, %173 : vector<16x32xf32>
      %175 = arith.mulf %174, %174 : vector<16x32xf32>
      %cst_139 = arith.constant dense<0.000000e+00> : vector<16xf32>
      %176 = vector.multi_reduction <add>, %175, %cst_139 [1] : vector<16x32xf32> to vector<16xf32>
      %177 = vector.shape_cast %176 : vector<16xf32> to vector<16x1xf32>
      %cst_140 = arith.constant 3.200000e+01 : f32
      %178 = vector.broadcast %cst_140 : f32 to vector<16x1xf32>
      %179 = arith.divf %177, %178 : vector<16x1xf32>
      %180 = vector.broadcast %172 : vector<16x1xf32> to vector<16x32xf32>
      %181 = arith.subf %161, %180 : vector<16x32xf32>
      %cst_141 = arith.constant 9.99999974E-6 : f32
      %182 = vector.broadcast %cst_141 : f32 to vector<16x1xf32>
      %183 = arith.addf %179, %182 : vector<16x1xf32>
      %184 = math.rsqrt %183 : vector<16x1xf32>
      %185 = vector.broadcast %184 : vector<16x1xf32> to vector<16x32xf32>
      %186 = arith.mulf %181, %185 : vector<16x32xf32>
      %187 = vector.broadcast %167 : vector<1x32xf32> to vector<16x32xf32>
      %188 = arith.mulf %186, %187 : vector<16x32xf32>
      %189 = vector.broadcast %168 : vector<1x32xf32> to vector<16x32xf32>
      %190 = arith.addf %188, %189 : vector<16x32xf32>
      %c0_142 = arith.constant 0 : index
      %c0_143 = arith.constant 0 : index
      %191 = vector.load %arg9[%c0_142, %c0_143] : memref<32x128xf32, #tpu.memory_space<vmem>>, vector<32x128xf32>
      %cst_144 = arith.constant dense<0.000000e+00> : vector<16x128xf32>
      %192 = tpu.matmul %190, %191, %cst_144 {dimension_numbers = #tpu.dot_dimension_numbers<[1], [0], [0], [1], [0, 0, 1, 1], [], []>} : vector<16x32xf32>, vector<32x128xf32>, vector<16x128xf32> -> vector<16x128xf32>
      %c0_145 = arith.constant 0 : index
      %c0_146 = arith.constant 0 : index
      %193 = vector.load %arg10[%c0_145, %c0_146] : memref<1x128xf32, #tpu.memory_space<vmem>>, vector<1x128xf32>
      %194 = vector.broadcast %193 : vector<1x128xf32> to vector<16x128xf32>
      %195 = arith.addf %192, %194 : vector<16x128xf32>
      %196 = vector.shape_cast %195 : vector<16x128xf32> to vector<1x16x128xf32>
      %c0_147 = arith.constant 0 : index
      %c0_148 = arith.constant 0 : index
      %c0_149 = arith.constant 0 : index
      %197 = vector.load %arg26[%c0_147, %c0_148, %c0_149] : memref<1x16x128xf32, #tpu.memory_space<vmem>>, vector<1x16x128xf32>
      tpu.vector_store %arg26[%c0_147, %c0_148, %c0_149], %196 {strides = array<i32>} : memref<1x16x128xf32, #tpu.memory_space<vmem>>, vector<1x16x128xf32>,
    } else {
    }
    return
  }
  func.func @transform_0(%arg0: i32, %arg1: i32) -> (i32, i32, i32) {
    %c0_i32 = arith.constant 0 : i32
    %c0_i32_0 = arith.constant 0 : i32
    %c0_i32_1 = arith.constant 0 : i32
    return %arg0, %c0_i32, %c0_i32_0 : i32, i32, i32
  }
  func.func @transform_1(%arg0: i32, %arg1: i32) -> (i32, i32, i32) {
    %c0_i32 = arith.constant 0 : i32
    %c0_i32_0 = arith.constant 0 : i32
    %c0_i32_1 = arith.constant 0 : i32
    return %arg0, %c0_i32, %c0_i32_0 : i32, i32, i32
  }
  func.func @transform_2(%arg0: i32, %arg1: i32) -> (i32, i32) {
    %c0_i32 = arith.constant 0 : i32
    %c0_i32_0 = arith.constant 0 : i32
    %c0_i32_1 = arith.constant 0 : i32
    return %c0_i32, %c0_i32_0 : i32, i32
  }
  func.func @transform_3(%arg0: i32, %arg1: i32) -> (i32, i32) {
    %c0_i32 = arith.constant 0 : i32
    %c0_i32_0 = arith.constant 0 : i32
    %c0_i32_1 = arith.constant 0 : i32
    return %c0_i32, %c0_i32_0 : i32, i32
  }
  func.func @transform_4(%arg0: i32, %arg1: i32) -> (i32, i32) {
    %c0_i32 = arith.constant 0 : i32
    %c0_i32_0 = arith.constant 0 : i32
    %c0_i32_1 = arith.constant 0 : i32
    return %c0_i32, %c0_i32_0 : i32, i32
  }
  func.func @transform_5(%arg0: i32, %arg1: i32) -> (i32, i32) {
    %c0_i32 = arith.constant 0 : i32
    %c0_i32_0 = arith.constant 0 : i32
    %c0_i32_1 = arith.constant 0 : i32
    return %c0_i32, %c0_i32_0 : i32, i32
  }
  func.func @transform_6(%arg0: i32, %arg1: i32) -> (i32, i32) {
    %c0_i32 = arith.constant 0 : i32
    %c0_i32_0 = arith.constant 0 : i32
    %c0_i32_1 = arith.constant 0 : i32
    return %c0_i32, %c0_i32_0 : i32, i32
  }
  func.func @transform_7(%arg0: i32, %arg1: i32) -> (i32, i32) {
    %c0_i32 = arith.constant 0 : i32
    %c0_i32_0 = arith.constant 0 : i32
    %c0_i32_1 = arith.constant 0 : i32
    return %c0_i32, %c0_i32_0 : i32, i32
  }
  func.func @transform_8(%arg0: i32, %arg1: i32) -> (i32, i32) {
    %c0_i32 = arith.constant 0 : i32
    %c0_i32_0 = arith.constant 0 : i32
    %c0_i32_1 = arith.constant 0 : i32
    return %c0_i32, %c0_i32_0 : i32, i32
  }
  func.func @transform_9(%arg0: i32, %arg1: i32) -> (i32, i32, i32) {
    %c0_i32 = arith.constant 0 : i32
    %c0_i32_0 = arith.constant 0 : i32
    %c0_i32_1 = arith.constant 0 : i32
    return %arg1, %c0_i32, %c0_i32_0 : i32, i32, i32
  }
  func.func @transform_10(%arg0: i32, %arg1: i32) -> (i32, i32, i32) {
    %c0_i32 = arith.constant 0 : i32
    %c0_i32_0 = arith.constant 0 : i32
    %c0_i32_1 = arith.constant 0 : i32
    return %arg1, %c0_i32, %c0_i32_0 : i32, i32, i32
  }
  func.func @transform_11(%arg0: i32, %arg1: i32) -> (i32, i32, i32) {
    %c0_i32 = arith.constant 0 : i32
    %c0_i32_0 = arith.constant 0 : i32
    %c0_i32_1 = arith.constant 0 : i32
    return %arg1, %c0_i32, %c0_i32_0 : i32, i32, i32
  }
  func.func @transform_12(%arg0: i32, %arg1: i32) -> (i32, i32, i32) {
    %c0_i32 = arith.constant 0 : i32
    %c0_i32_0 = arith.constant 0 : i32
    %c0_i32_1 = arith.constant 0 : i32
    return %arg1, %c0_i32, %c0_i32_0 : i32, i32, i32
  }
  func.func @transform_13(%arg0: i32, %arg1: i32) -> (i32, i32, i32) {
    %c0_i32 = arith.constant 0 : i32
    %c0_i32_0 = arith.constant 0 : i32
    %c0_i32_1 = arith.constant 0 : i32
    return %arg1, %c0_i32, %c0_i32_0 : i32, i32, i32
  }
  func.func @transform_14(%arg0: i32, %arg1: i32) -> (i32, i32, i32) {
    %c0_i32 = arith.constant 0 : i32
    %c0_i32_0 = arith.constant 0 : i32
    %c0_i32_1 = arith.constant 0 : i32
    return %arg1, %c0_i32, %c0_i32_0 : i32, i32, i32
  }
  func.func @transform_15(%arg0: i32, %arg1: i32) -> (i32, i32, i32) {
    %c0_i32 = arith.constant 0 : i32
    %c0_i32_0 = arith.constant 0 : i32
    %c0_i32_1 = arith.constant 0 : i32
    return %arg1, %c0_i32, %c0_i32_0 : i32, i32, i32
  }
  func.func @transform_16(%arg0: i32, %arg1: i32) -> (i32, i32, i32) {
    %c0_i32 = arith.constant 0 : i32
    %c0_i32_0 = arith.constant 0 : i32
    %c0_i32_1 = arith.constant 0 : i32
    return %arg1, %c0_i32, %c0_i32_0 : i32, i32, i32
  }
  func.func @transform_17(%arg0: i32, %arg1: i32) -> (i32, i32, i32) {
    %c0_i32 = arith.constant 0 : i32
    %c0_i32_0 = arith.constant 0 : i32
    %c0_i32_1 = arith.constant 0 : i32
    return %arg1, %c0_i32, %c0_i32_0 : i32, i32, i32
  }
  func.func @transform_18(%arg0: i32, %arg1: i32) -> (i32, i32, i32) {
    %c0_i32 = arith.constant 0 : i32
    %c0_i32_0 = arith.constant 0 : i32
    %c0_i32_1 = arith.constant 0 : i32
    return %arg1, %c0_i32, %c0_i32_0 : i32, i32, i32
  }
  func.func @transform_19(%arg0: i32, %arg1: i32) -> (i32, i32, i32) {
    %c0_i32 = arith.constant 0 : i32
    %c0_i32_0 = arith.constant 0 : i32
    %c0_i32_1 = arith.constant 0 : i32
    return %arg1, %c0_i32, %c0_i32_0 : i32, i32, i32
  }
  func.func @transform_20(%arg0: i32, %arg1: i32) -> (i32, i32, i32) {
    %c0_i32 = arith.constant 0 : i32
    %c0_i32_0 = arith.constant 0 : i32
    %c0_i32_1 = arith.constant 0 : i32
    return %arg1, %c0_i32, %c0_i32_0 : i32, i32, i32
  }
  func.func @transform_21(%arg0: i32, %arg1: i32) -> (i32, i32, i32) {
    %c0_i32 = arith.constant 0 : i32
    %c0_i32_0 = arith.constant 0 : i32
    %c0_i32_1 = arith.constant 0 : i32
    return %arg1, %c0_i32, %c0_i32_0 : i32, i32, i32
  }
  func.func @transform_22(%arg0: i32, %arg1: i32) -> (i32, i32, i32) {
    %c0_i32 = arith.constant 0 : i32
    %c0_i32_0 = arith.constant 0 : i32
    %c0_i32_1 = arith.constant 0 : i32
    return %arg1, %c0_i32, %c0_i32_0 : i32, i32, i32
  }
  func.func @transform_23(%arg0: i32, %arg1: i32) -> (i32, i32, i32) {
    %c0_i32 = arith.constant 0 : i32
    %c0_i32_0 = arith.constant 0 : i32
    %c0_i32_1 = arith.constant 0 : i32
    return %arg1, %c0_i32, %c0_i32_0 : i32, i32, i32
  }
  func.func @transform_24(%arg0: i32, %arg1: i32) -> (i32, i32, i32) {
    %c0_i32 = arith.constant 0 : i32
    %c0_i32_0 = arith.constant 0 : i32
    %c0_i32_1 = arith.constant 0 : i32
    return %arg0, %c0_i32, %c0_i32_0 : i32, i32, i32
  }
}

</mosaic_0001>

<llo_original>
// kernel: tpu_custom_call.1
$region0: #{tpu_custom_call.1}
  #allocation0 [shape = 'u32[]', space=smem, size = 0x4, offset = 0x4, fixed_abs, tag = 'smem constant byte address 0x4 - core index']
  #allocation1 [shape = 'u32[144,128]{1,0:T(1,128)}', space=vmem, size = 0x12000, scoped, tag = 'internal scratch']
  #allocation2 [shape = 'f32[1,16,32]{2,1,0:T(8,128)}', space=vmem, size = 0x2000, scoped, tag = 'scratch operand']
  #allocation3 [shape = 'f32[1,16,8]{2,1,0:T(8,128)}', space=vmem, size = 0x2000, scoped, tag = 'scratch operand']
  #allocation4 [shape = 'f32[1,16,8]{2,1,0:T(8,128)}', space=vmem, size = 0x2000, scoped, tag = 'scratch operand']
  #allocation5 [shape = 'f32[1,16,32]{2,1,0:T(8,128)}', space=vmem, size = 0x2000, scoped, tag = 'scratch operand']
  %s0 = inlined_call_operand.vmem [shape: f32[2,16,32], index: 0, kind: input, shape index: {}]
  %s1 = inlined_call_operand.vmem [shape: f32[2,16,1], index: 1, kind: input, shape index: {}]
  %s2 = inlined_call_operand.hbm [shape: f32[32,32], index: 2, kind: input, shape index: {}]
  %s3 = inlined_call_operand.vmem [shape: f32[1,32], index: 3, kind: input, shape index: {}]
  %s4 = inlined_call_operand.hbm [shape: f32[1,32], index: 4, kind: input, shape index: {}]
  %s5 = inlined_call_operand.vmem [shape: f32[1,32], index: 5, kind: input, shape index: {}]
  %s6 = inlined_call_operand.vmem [shape: f32[1,32], index: 6, kind: input, shape index: {}]
  %s7 = inlined_call_operand.hbm [shape: f32[32,128], index: 7, kind: input, shape index: {}]
  %s8 = inlined_call_operand.hbm [shape: f32[1,128], index: 8, kind: input, shape index: {}]
  %s9 = inlined_call_operand.vmem [shape: f32[2,1,32], index: 9, kind: input, shape index: {}]
  %s10 = inlined_call_operand.vmem [shape: f32[2,1,32], index: 10, kind: input, shape index: {}]
  %s11 = inlined_call_operand.vmem [shape: f32[2,32,32], index: 11, kind: input, shape index: {}]
  %s12 = inlined_call_operand.vmem [shape: f32[2,1,32], index: 12, kind: input, shape index: {}]
  %s13 = inlined_call_operand.vmem [shape: f32[2,32,32], index: 13, kind: input, shape index: {}]
  %s14 = inlined_call_operand.vmem [shape: f32[2,32,32], index: 14, kind: input, shape index: {}]
  %s15 = inlined_call_operand.vmem [shape: f32[2,1,32], index: 15, kind: input, shape index: {}]
  %s16 = inlined_call_operand.vmem [shape: f32[2,32,32], index: 16, kind: input, shape index: {}]
  %s17 = inlined_call_operand.vmem [shape: f32[2,1,32], index: 17, kind: input, shape index: {}]
  %s18 = inlined_call_operand.vmem [shape: f32[2,1,32], index: 18, kind: input, shape index: {}]
  %s19 = inlined_call_operand.vmem [shape: f32[2,1,32], index: 19, kind: input, shape index: {}]
  %s20 = inlined_call_operand.vmem [shape: f32[2,32,128], index: 20, kind: input, shape index: {}]
  %s21 = inlined_call_operand.vmem [shape: f32[2,1,128], index: 21, kind: input, shape index: {}]
  %s22 = inlined_call_operand.vmem [shape: f32[2,128,32], index: 22, kind: input, shape index: {}]
  %s23 = inlined_call_operand.vmem [shape: f32[2,1,32], index: 23, kind: input, shape index: {}]
  %s24 = inlined_call_operand.hbm [shape: f32[2,16,128], index: 24, kind: output, shape index: {}]
  %s25 = sld [smem:[#allocation0]]
  $region181: #{tpu_custom_call.1} parent=0
    _
  %s27 = ssub.s32 1, %s25
  %s28 = scalar_select 0, %s27, %s25
  $region1: #{tpu_custom_call.1} parent=0
    #allocation6 [shape = 'u8[16384]{0}', space=vmem, size = 0x4000, scoped, tag = 'input window, operand 2, single buffered']
    #allocation7 [shape = 's32[2]{0}', space=sflag, size = 0x8, scoped, tag = 'scoped memory for tpu_custom_call.1']
    #allocation8 [shape = 's32[2]{0}', space=sflag, size = 0x8, scoped, tag = 'scoped memory for tpu_custom_call.1']
    #allocation9 [shape = 'u8[512]{0}', space=vmem, size = 0x400, scoped, tag = 'input window, operand 4, single buffered']
    #allocation10 [shape = 's32[1]{0}', space=sflag, size = 0x4, scoped, tag = 'scoped memory for tpu_custom_call.1']
    #allocation11 [shape = 'u8[16384]{0}', space=vmem, size = 0x4000, scoped, tag = 'input window, operand 7, single buffered']
    #allocation12 [shape = 'u8[512]{0}', space=vmem, size = 0x400, scoped, tag = 'input window, operand 8, single buffered']
    #allocation13 [shape = 's32[1]{0}', space=sflag, size = 0x4, scoped, tag = 'scoped memory for tpu_custom_call.1']
    #allocation14 [shape = 'u8[16384]{0}', space=vmem, size = 0x4000, scoped, tag = 'output window, operand 0']
    %29 = vsyncpa [#allocation7], 0
    %30 = vsyncpa [#allocation10], 0
    %31 = vsyncpa [#allocation13], 0
    %32 = vsyncpa [#allocation8], 0
    %s33 = scalar_lea.sflag [#allocation8], 1
    %34 = vsyncpa %s33, 0
    loop: start=0, step=1, limit=6
    $region2: #{tpu_custom_call.1} parent=1 // loop_pre_header
      _
    $region3: #{tpu_custom_call.1} parent=1 // loop_header
      %s36 = sphi 0, %s40
      %p37 = scmp.ge.s32.totalorder %s36, 6
      %s43 = sphi 0, %s55
      %s44 = sphi 0, %s51
      %s45 = sphi 0, %s43
      %s46 = sphi 0, %s44
      %s47 = sphi 0, %s45
      %s48 = sphi 0, %s46
      %s58 = sphi 0, %s60
      %s61 = sphi 0, %s58
      %s62 = sphi 0, %s61
      %s78 = sphi 0, %s62
      %s84 = sphi 0, %s86
      %s87 = sphi 0, %s84
      %s88 = sphi 0, %s87
      %s104 = sphi 0, %s88
      %s108 = sphi 0, %s108
      %s110 = sphi 0, %s108
      %s111 = sphi 0, %s110
      %s125 = sphi 0, %s111
      %s129 = sphi 0, %s129
      %s131 = sphi 0, %s129
      %s132 = sphi 0, %s131
      %s146 = sphi 0, %s132
      %s150 = sphi 0, %s150
      %s152 = sphi 0, %s150
      %s153 = sphi 0, %s152
      %s167 = sphi 0, %s153
      %s171 = sphi 0, %s171
      %s173 = sphi 0, %s171
      %s174 = sphi 0, %s173
      %s188 = sphi 0, %s174
      %s192 = sphi 0, %s192
      %s194 = sphi 0, %s192
      %s195 = sphi 0, %s194
      %s209 = sphi 0, %s195
      %s213 = sphi 0, %s213
      %s215 = sphi 0, %s213
      %s216 = sphi 0, %s215
      %s230 = sphi 0, %s216
      %s234 = sphi 0, %s234
      %s236 = sphi 0, %s234
      %s237 = sphi 0, %s236
      %s251 = sphi 0, %s237
      %s257 = sphi 0, %s259
      %s260 = sphi 0, %s257
      %s261 = sphi 0, %s260
      %s277 = sphi 0, %s261
      %s283 = sphi 0, %s285
      %s286 = sphi 0, %s283
      %s287 = sphi 0, %s286
      %s303 = sphi 0, %s287
      %s309 = sphi 0, %s311
      %s312 = sphi 0, %s309
      %s313 = sphi 0, %s312
      %s329 = sphi 0, %s313
      %s335 = sphi 0, %s337
      %s338 = sphi 0, %s335
      %s339 = sphi 0, %s338
      %s355 = sphi 0, %s339
      %s361 = sphi 0, %s363
      %s364 = sphi 0, %s361
      %s365 = sphi 0, %s364
      %s381 = sphi 0, %s365
      %s387 = sphi 0, %s389
      %s390 = sphi 0, %s387
      %s391 = sphi 0, %s390
      %s407 = sphi 0, %s391
      %s413 = sphi 0, %s415
      %s416 = sphi 0, %s413
      %s417 = sphi 0, %s416
      %s433 = sphi 0, %s417
      %s439 = sphi 0, %s441
      %s442 = sphi 0, %s439
      %s443 = sphi 0, %s442
      %s459 = sphi 0, %s443
      %s465 = sphi 0, %s467
      %s468 = sphi 0, %s465
      %s469 = sphi 0, %s468
      %s485 = sphi 0, %s469
      %s491 = sphi 0, %s493
      %s494 = sphi 0, %s491
      %s495 = sphi 0, %s494
      %s511 = sphi 0, %s495
      %s517 = sphi 0, %s519
      %s520 = sphi 0, %s517
      %s521 = sphi 0, %s520
      %s537 = sphi 0, %s521
      %s543 = sphi 0, %s545
      %s546 = sphi 0, %s543
      %s547 = sphi 0, %s546
      %s563 = sphi 0, %s547
      %s569 = sphi 0, %s571
      %s572 = sphi 0, %s569
      %s573 = sphi 0, %s572
      %s589 = sphi 0, %s573
      %s595 = sphi 0, %s597
      %s598 = sphi 0, %s595
      %s599 = sphi 0, %s598
      %s615 = sphi 0, %s599
      %s621 = sphi 0, %s623
      %s624 = sphi 0, %s621
      %s625 = sphi 0, %s624
      %s641 = sphi 0, %s625
      %s647 = sphi 0, %s649
      %s650 = sphi 0, %s647
      %s651 = sphi 0, %s650
      %s667 = sphi 0, %s651
    $region4: #{tpu_custom_call.1} parent=1 // loop_header_branch
      %39 = sbr.rel (%p37) target = $region8
    $region5: #{tpu_custom_call.1} parent=1 // loop_body
      %s41 = ssub.s32 %s36, 1
      %s42 = ssub.s32 %s36, 2
      %s49 = sadd.s32 1, %s44
      %p50 = scmp.ge.s32.totalorder %s49, 2
      %s51 = scalar_select %p50, 0, %s49
      %s52 = sadd.s32 1, %s43
      %s53 = scalar_select %p50, %s52, %s43
      %p54 = scmp.ge.s32.totalorder %s53, 2
      %s55 = scalar_select %p54, 0, %s53
      %s56 = ssub.s32 %s43, %s55
      %p57 = scmp.eq.s32.totalorder %s56, 0
      %s59 = sadd.s32 %s58, 1
      %s60 = scalar_select %p57, %s58, %s59
      %p63 = pneg %p57
      %p64 = scmp.eq.s32.totalorder %s36, 3
      %p65 = por %p63, %p64
      %p66 = scmp.ne.s32.totalorder %s58, %s61
      %p67 = scmp.eq.s32.totalorder %s36, 0
      %p68 = por %p66, %p67
      %p69 = scmp.ne.s32.totalorder %s58, %s61
      %p70 = scmp.eq.s32.totalorder %s41, 3
      %p71 = por %p69, %p70
      %p72 = scmp.ne.s32.totalorder %s61, %s62
      %p73 = scmp.eq.s32.totalorder %s41, 0
      %p74 = por %p72, %p73
      %p75 = scmp.ne.s32.totalorder %s61, %s62
      %p76 = scmp.eq.s32.totalorder %s42, 3
      %p77 = por %p75, %p76
      %p79 = scmp.ne.s32.totalorder %s62, %s78
      %p80 = scmp.eq.s32.totalorder %s42, 0
      %p81 = por %p79, %p80
      %s82 = ssub.s32 %s43, %s55
      %p83 = scmp.eq.s32.totalorder %s82, 0
      %s85 = sadd.s32 %s84, 1
      %s86 = scalar_select %p83, %s84, %s85
      %p89 = pneg %p83
      %p90 = scmp.eq.s32.totalorder %s36, 3
      %p91 = por %p89, %p90
      %p92 = scmp.ne.s32.totalorder %s84, %s87
      %p93 = scmp.eq.s32.totalorder %s36, 0
      %p94 = por %p92, %p93
      %p95 = scmp.ne.s32.totalorder %s84, %s87
      %p96 = scmp.eq.s32.totalorder %s41, 3
      %p97 = por %p95, %p96
      %p98 = scmp.ne.s32.totalorder %s87, %s88
      %p99 = scmp.eq.s32.totalorder %s41, 0
      %p100 = por %p98, %p99
      %p101 = scmp.ne.s32.totalorder %s87, %s88
      %p102 = scmp.eq.s32.totalorder %s42, 3
      %p103 = por %p101, %p102
      %p105 = scmp.ne.s32.totalorder %s88, %s104
      %p106 = scmp.eq.s32.totalorder %s42, 0
      %p107 = por %p105, %p106
      %s109 = sadd.s32 %s108, 1
      %p112 = scmp.eq.s32.totalorder %s36, 3
      %p113 = scmp.ne.s32.totalorder %s108, %s110
      %p114 = scmp.eq.s32.totalorder %s36, 0
      %p115 = por %p113, %p114
      %p116 = scmp.ne.s32.totalorder %s108, %s110
      %p117 = scmp.eq.s32.totalorder %s41, 3
      %p118 = por %p116, %p117
      %p119 = scmp.ne.s32.totalorder %s110, %s111
      %p120 = scmp.eq.s32.totalorder %s41, 0
      %p121 = por %p119, %p120
      %p122 = scmp.ne.s32.totalorder %s110, %s111
      %p123 = scmp.eq.s32.totalorder %s42, 3
      %p124 = por %p122, %p123
      %p126 = scmp.ne.s32.totalorder %s111, %s125
      %p127 = scmp.eq.s32.totalorder %s42, 0
      %p128 = por %p126, %p127
      %s130 = sadd.s32 %s129, 1
      %p133 = scmp.eq.s32.totalorder %s36, 3
      %p134 = scmp.ne.s32.totalorder %s129, %s131
      %p135 = scmp.eq.s32.totalorder %s36, 0
      %p136 = por %p134, %p135
      %p137 = scmp.ne.s32.totalorder %s129, %s131
      %p138 = scmp.eq.s32.totalorder %s41, 3
      %p139 = por %p137, %p138
      %p140 = scmp.ne.s32.totalorder %s131, %s132
      %p141 = scmp.eq.s32.totalorder %s41, 0
      %p142 = por %p140, %p141
      %p143 = scmp.ne.s32.totalorder %s131, %s132
      %p144 = scmp.eq.s32.totalorder %s42, 3
      %p145 = por %p143, %p144
      %p147 = scmp.ne.s32.totalorder %s132, %s146
      %p148 = scmp.eq.s32.totalorder %s42, 0
      %p149 = por %p147, %p148
      %s151 = sadd.s32 %s150, 1
      %p154 = scmp.eq.s32.totalorder %s36, 3
      %p155 = scmp.ne.s32.totalorder %s150, %s152
      %p156 = scmp.eq.s32.totalorder %s36, 0
      %p157 = por %p155, %p156
      %p158 = scmp.ne.s32.totalorder %s150, %s152
      %p159 = scmp.eq.s32.totalorder %s41, 3
      %p160 = por %p158, %p159
      %p161 = scmp.ne.s32.totalorder %s152, %s153
      %p162 = scmp.eq.s32.totalorder %s41, 0
      %p163 = por %p161, %p162
      %p164 = scmp.ne.s32.totalorder %s152, %s153
      %p165 = scmp.eq.s32.totalorder %s42, 3
      %p166 = por %p164, %p165
      %p168 = scmp.ne.s32.totalorder %s153, %s167
      %p169 = scmp.eq.s32.totalorder %s42, 0
      %p170 = por %p168, %p169
      %s172 = sadd.s32 %s171, 1
      %p175 = scmp.eq.s32.totalorder %s36, 3
      %p176 = scmp.ne.s32.totalorder %s171, %s173
      %p177 = scmp.eq.s32.totalorder %s36, 0
      %p178 = por %p176, %p177
      %p179 = scmp.ne.s32.totalorder %s171, %s173
      %p180 = scmp.eq.s32.totalorder %s41, 3
      %p181 = por %p179, %p180
      %p182 = scmp.ne.s32.totalorder %s173, %s174
      %p183 = scmp.eq.s32.totalorder %s41, 0
      %p184 = por %p182, %p183
      %p185 = scmp.ne.s32.totalorder %s173, %s174
      %p186 = scmp.eq.s32.totalorder %s42, 3
      %p187 = por %p185, %p186
      %p189 = scmp.ne.s32.totalorder %s174, %s188
      %p190 = scmp.eq.s32.totalorder %s42, 0
      %p191 = por %p189, %p190
      %s193 = sadd.s32 %s192, 1
      %p196 = scmp.eq.s32.totalorder %s36, 3
      %p197 = scmp.ne.s32.totalorder %s192, %s194
      %p198 = scmp.eq.s32.totalorder %s36, 0
      %p199 = por %p197, %p198
      %p200 = scmp.ne.s32.totalorder %s192, %s194
      %p201 = scmp.eq.s32.totalorder %s41, 3
      %p202 = por %p200, %p201
      %p203 = scmp.ne.s32.totalorder %s194, %s195
      %p204 = scmp.eq.s32.totalorder %s41, 0
      %p205 = por %p203, %p204
      %p206 = scmp.ne.s32.totalorder %s194, %s195
      %p207 = scmp.eq.s32.totalorder %s42, 3
      %p208 = por %p206, %p207
      %p210 = scmp.ne.s32.totalorder %s195, %s209
      %p211 = scmp.eq.s32.totalorder %s42, 0
      %p212 = por %p210, %p211
      %s214 = sadd.s32 %s213, 1
      %p217 = scmp.eq.s32.totalorder %s36, 3
      %p218 = scmp.ne.s32.totalorder %s213, %s215
      %p219 = scmp.eq.s32.totalorder %s36, 0
      %p220 = por %p218, %p219
      %p221 = scmp.ne.s32.totalorder %s213, %s215
      %p222 = scmp.eq.s32.totalorder %s41, 3
      %p223 = por %p221, %p222
      %p224 = scmp.ne.s32.totalorder %s215, %s216
      %p225 = scmp.eq.s32.totalorder %s41, 0
      %p226 = por %p224, %p225
      %p227 = scmp.ne.s32.totalorder %s215, %s216
      %p228 = scmp.eq.s32.totalorder %s42, 3
      %p229 = por %p227, %p228
      %p231 = scmp.ne.s32.totalorder %s216, %s230
      %p232 = scmp.eq.s32.totalorder %s42, 0
      %p233 = por %p231, %p232
      %s235 = sadd.s32 %s234, 1
      %p238 = scmp.eq.s32.totalorder %s36, 3
      %p239 = scmp.ne.s32.totalorder %s234, %s236
      %p240 = scmp.eq.s32.totalorder %s36, 0
      %p241 = por %p239, %p240
      %p242 = scmp.ne.s32.totalorder %s234, %s236
      %p243 = scmp.eq.s32.totalorder %s41, 3
      %p244 = por %p242, %p243
      %p245 = scmp.ne.s32.totalorder %s236, %s237
      %p246 = scmp.eq.s32.totalorder %s41, 0
      %p247 = por %p245, %p246
      %p248 = scmp.ne.s32.totalorder %s236, %s237
      %p249 = scmp.eq.s32.totalorder %s42, 3
      %p250 = por %p248, %p249
      %p252 = scmp.ne.s32.totalorder %s237, %s251
      %p253 = scmp.eq.s32.totalorder %s42, 0
      %p254 = por %p252, %p253
      %s255 = ssub.s32 %s44, %s51
      %p256 = scmp.eq.s32.totalorder %s255, 0
      %s258 = sadd.s32 %s257, 1
      %s259 = scalar_select %p256, %s257, %s258
      %p262 = pneg %p256
      %p263 = scmp.eq.s32.totalorder %s36, 3
      %p264 = por %p262, %p263
      %p265 = scmp.ne.s32.totalorder %s257, %s260
      %p266 = scmp.eq.s32.totalorder %s36, 0
      %p267 = por %p265, %p266
      %p268 = scmp.ne.s32.totalorder %s257, %s260
      %p269 = scmp.eq.s32.totalorder %s41, 3
      %p270 = por %p268, %p269
      %p271 = scmp.ne.s32.totalorder %s260, %s261
      %p272 = scmp.eq.s32.totalorder %s41, 0
      %p273 = por %p271, %p272
      %p274 = scmp.ne.s32.totalorder %s260, %s261
      %p275 = scmp.eq.s32.totalorder %s42, 3
      %p276 = por %p274, %p275
      %p278 = scmp.ne.s32.totalorder %s261, %s277
      %p279 = scmp.eq.s32.totalorder %s42, 0
      %p280 = por %p278, %p279
      %s281 = ssub.s32 %s44, %s51
      %p282 = scmp.eq.s32.totalorder %s281, 0
      %s284 = sadd.s32 %s283, 1
      %s285 = scalar_select %p282, %s283, %s284
      %p288 = pneg %p282
      %p289 = scmp.eq.s32.totalorder %s36, 3
      %p290 = por %p288, %p289
      %p291 = scmp.ne.s32.totalorder %s283, %s286
      %p292 = scmp.eq.s32.totalorder %s36, 0
      %p293 = por %p291, %p292
      %p294 = scmp.ne.s32.totalorder %s283, %s286
      %p295 = scmp.eq.s32.totalorder %s41, 3
      %p296 = por %p294, %p295
      %p297 = scmp.ne.s32.totalorder %s286, %s287
      %p298 = scmp.eq.s32.totalorder %s41, 0
      %p299 = por %p297, %p298
      %p300 = scmp.ne.s32.totalorder %s286, %s287
      %p301 = scmp.eq.s32.totalorder %s42, 3
      %p302 = por %p300, %p301
      %p304 = scmp.ne.s32.totalorder %s287, %s303
      %p305 = scmp.eq.s32.totalorder %s42, 0
      %p306 = por %p304, %p305
      %s307 = ssub.s32 %s44, %s51
      %p308 = scmp.eq.s32.totalorder %s307, 0
      %s310 = sadd.s32 %s309, 1
      %s311 = scalar_select %p308, %s309, %s310
      %p314 = pneg %p308
      %p315 = scmp.eq.s32.totalorder %s36, 3
      %p316 = por %p314, %p315
      %p317 = scmp.ne.s32.totalorder %s309, %s312
      %p318 = scmp.eq.s32.totalorder %s36, 0
      %p319 = por %p317, %p318
      %p320 = scmp.ne.s32.totalorder %s309, %s312
      %p321 = scmp.eq.s32.totalorder %s41, 3
      %p322 = por %p320, %p321
      %p323 = scmp.ne.s32.totalorder %s312, %s313
      %p324 = scmp.eq.s32.totalorder %s41, 0
      %p325 = por %p323, %p324
      %p326 = scmp.ne.s32.totalorder %s312, %s313
      %p327 = scmp.eq.s32.totalorder %s42, 3
      %p328 = por %p326, %p327
      %p330 = scmp.ne.s32.totalorder %s313, %s329
      %p331 = scmp.eq.s32.totalorder %s42, 0
      %p332 = por %p330, %p331
      %s333 = ssub.s32 %s44, %s51
      %p334 = scmp.eq.s32.totalorder %s333, 0
      %s336 = sadd.s32 %s335, 1
      %s337 = scalar_select %p334, %s335, %s336
      %p340 = pneg %p334
      %p341 = scmp.eq.s32.totalorder %s36, 3
      %p342 = por %p340, %p341
      %p343 = scmp.ne.s32.totalorder %s335, %s338
      %p344 = scmp.eq.s32.totalorder %s36, 0
      %p345 = por %p343, %p344
      %p346 = scmp.ne.s32.totalorder %s335, %s338
      %p347 = scmp.eq.s32.totalorder %s41, 3
      %p348 = por %p346, %p347
      %p349 = scmp.ne.s32.totalorder %s338, %s339
      %p350 = scmp.eq.s32.totalorder %s41, 0
      %p351 = por %p349, %p350
      %p352 = scmp.ne.s32.totalorder %s338, %s339
      %p353 = scmp.eq.s32.totalorder %s42, 3
      %p354 = por %p352, %p353
      %p356 = scmp.ne.s32.totalorder %s339, %s355
      %p357 = scmp.eq.s32.totalorder %s42, 0
      %p358 = por %p356, %p357
      %s359 = ssub.s32 %s44, %s51
      %p360 = scmp.eq.s32.totalorder %s359, 0
      %s362 = sadd.s32 %s361, 1
      %s363 = scalar_select %p360, %s361, %s362
      %p366 = pneg %p360
      %p367 = scmp.eq.s32.totalorder %s36, 3
      %p368 = por %p366, %p367
      %p369 = scmp.ne.s32.totalorder %s361, %s364
      %p370 = scmp.eq.s32.totalorder %s36, 0
      %p371 = por %p369, %p370
      %p372 = scmp.ne.s32.totalorder %s361, %s364
      %p373 = scmp.eq.s32.totalorder %s41, 3
      %p374 = por %p372, %p373
      %p375 = scmp.ne.s32.totalorder %s364, %s365
      %p376 = scmp.eq.s32.totalorder %s41, 0
      %p377 = por %p375, %p376
      %p378 = scmp.ne.s32.totalorder %s364, %s365
      %p379 = scmp.eq.s32.totalorder %s42, 3
      %p380 = por %p378, %p379
      %p382 = scmp.ne.s32.totalorder %s365, %s381
      %p383 = scmp.eq.s32.totalorder %s42, 0
      %p384 = por %p382, %p383
      %s385 = ssub.s32 %s44, %s51
      %p386 = scmp.eq.s32.totalorder %s385, 0
      %s388 = sadd.s32 %s387, 1
      %s389 = scalar_select %p386, %s387, %s388
      %p392 = pneg %p386
      %p393 = scmp.eq.s32.totalorder %s36, 3
      %p394 = por %p392, %p393
      %p395 = scmp.ne.s32.totalorder %s387, %s390
      %p396 = scmp.eq.s32.totalorder %s36, 0
      %p397 = por %p395, %p396
      %p398 = scmp.ne.s32.totalorder %s387, %s390
      %p399 = scmp.eq.s32.totalorder %s41, 3
      %p400 = por %p398, %p399
      %p401 = scmp.ne.s32.totalorder %s390, %s391
      %p402 = scmp.eq.s32.totalorder %s41, 0
      %p403 = por %p401, %p402
      %p404 = scmp.ne.s32.totalorder %s390, %s391
      %p405 = scmp.eq.s32.totalorder %s42, 3
      %p406 = por %p404, %p405
      %p408 = scmp.ne.s32.totalorder %s391, %s407
      %p409 = scmp.eq.s32.totalorder %s42, 0
      %p410 = por %p408, %p409
      %s411 = ssub.s32 %s44, %s51
      %p412 = scmp.eq.s32.totalorder %s411, 0
      %s414 = sadd.s32 %s413, 1
      %s415 = scalar_select %p412, %s413, %s414
      %p418 = pneg %p412
      %p419 = scmp.eq.s32.totalorder %s36, 3
      %p420 = por %p418, %p419
      %p421 = scmp.ne.s32.totalorder %s413, %s416
      %p422 = scmp.eq.s32.totalorder %s36, 0
      %p423 = por %p421, %p422
      %p424 = scmp.ne.s32.totalorder %s413, %s416
      %p425 = scmp.eq.s32.totalorder %s41, 3
      %p426 = por %p424, %p425
      %p427 = scmp.ne.s32.totalorder %s416, %s417
      %p428 = scmp.eq.s32.totalorder %s41, 0
      %p429 = por %p427, %p428
      %p430 = scmp.ne.s32.totalorder %s416, %s417
      %p431 = scmp.eq.s32.totalorder %s42, 3
      %p432 = por %p430, %p431
      %p434 = scmp.ne.s32.totalorder %s417, %s433
      %p435 = scmp.eq.s32.totalorder %s42, 0
      %p436 = por %p434, %p435
      %s437 = ssub.s32 %s44, %s51
      %p438 = scmp.eq.s32.totalorder %s437, 0
      %s440 = sadd.s32 %s439, 1
      %s441 = scalar_select %p438, %s439, %s440
      %p444 = pneg %p438
      %p445 = scmp.eq.s32.totalorder %s36, 3
      %p446 = por %p444, %p445
      %p447 = scmp.ne.s32.totalorder %s439, %s442
      %p448 = scmp.eq.s32.totalorder %s36, 0
      %p449 = por %p447, %p448
      %p450 = scmp.ne.s32.totalorder %s439, %s442
      %p451 = scmp.eq.s32.totalorder %s41, 3
      %p452 = por %p450, %p451
      %p453 = scmp.ne.s32.totalorder %s442, %s443
      %p454 = scmp.eq.s32.totalorder %s41, 0
      %p455 = por %p453, %p454
      %p456 = scmp.ne.s32.totalorder %s442, %s443
      %p457 = scmp.eq.s32.totalorder %s42, 3
      %p458 = por %p456, %p457
      %p460 = scmp.ne.s32.totalorder %s443, %s459
      %p461 = scmp.eq.s32.totalorder %s42, 0
      %p462 = por %p460, %p461
      %s463 = ssub.s32 %s44, %s51
      %p464 = scmp.eq.s32.totalorder %s463, 0
      %s466 = sadd.s32 %s465, 1
      %s467 = scalar_select %p464, %s465, %s466
      %p470 = pneg %p464
      %p471 = scmp.eq.s32.totalorder %s36, 3
      %p472 = por %p470, %p471
      %p473 = scmp.ne.s32.totalorder %s465, %s468
      %p474 = scmp.eq.s32.totalorder %s36, 0
      %p475 = por %p473, %p474
      %p476 = scmp.ne.s32.totalorder %s465, %s468
      %p477 = scmp.eq.s32.totalorder %s41, 3
      %p478 = por %p476, %p477
      %p479 = scmp.ne.s32.totalorder %s468, %s469
      %p480 = scmp.eq.s32.totalorder %s41, 0
      %p481 = por %p479, %p480
      %p482 = scmp.ne.s32.totalorder %s468, %s469
      %p483 = scmp.eq.s32.totalorder %s42, 3
      %p484 = por %p482, %p483
      %p486 = scmp.ne.s32.totalorder %s469, %s485
      %p487 = scmp.eq.s32.totalorder %s42, 0
      %p488 = por %p486, %p487
      %s489 = ssub.s32 %s44, %s51
      %p490 = scmp.eq.s32.totalorder %s489, 0
      %s492 = sadd.s32 %s491, 1
      %s493 = scalar_select %p490, %s491, %s492
      %p496 = pneg %p490
      %p497 = scmp.eq.s32.totalorder %s36, 3
      %p498 = por %p496, %p497
      %p499 = scmp.ne.s32.totalorder %s491, %s494
      %p500 = scmp.eq.s32.totalorder %s36, 0
      %p501 = por %p499, %p500
      %p502 = scmp.ne.s32.totalorder %s491, %s494
      %p503 = scmp.eq.s32.totalorder %s41, 3
      %p504 = por %p502, %p503
      %p505 = scmp.ne.s32.totalorder %s494, %s495
      %p506 = scmp.eq.s32.totalorder %s41, 0
      %p507 = por %p505, %p506
      %p508 = scmp.ne.s32.totalorder %s494, %s495
      %p509 = scmp.eq.s32.totalorder %s42, 3
      %p510 = por %p508, %p509
      %p512 = scmp.ne.s32.totalorder %s495, %s511
      %p513 = scmp.eq.s32.totalorder %s42, 0
      %p514 = por %p512, %p513
      %s515 = ssub.s32 %s44, %s51
      %p516 = scmp.eq.s32.totalorder %s515, 0
      %s518 = sadd.s32 %s517, 1
      %s519 = scalar_select %p516, %s517, %s518
      %p522 = pneg %p516
      %p523 = scmp.eq.s32.totalorder %s36, 3
      %p524 = por %p522, %p523
      %p525 = scmp.ne.s32.totalorder %s517, %s520
      %p526 = scmp.eq.s32.totalorder %s36, 0
      %p527 = por %p525, %p526
      %p528 = scmp.ne.s32.totalorder %s517, %s520
      %p529 = scmp.eq.s32.totalorder %s41, 3
      %p530 = por %p528, %p529
      %p531 = scmp.ne.s32.totalorder %s520, %s521
      %p532 = scmp.eq.s32.totalorder %s41, 0
      %p533 = por %p531, %p532
      %p534 = scmp.ne.s32.totalorder %s520, %s521
      %p535 = scmp.eq.s32.totalorder %s42, 3
      %p536 = por %p534, %p535
      %p538 = scmp.ne.s32.totalorder %s521, %s537
      %p539 = scmp.eq.s32.totalorder %s42, 0
      %p540 = por %p538, %p539
      %s541 = ssub.s32 %s44, %s51
      %p542 = scmp.eq.s32.totalorder %s541, 0
      %s544 = sadd.s32 %s543, 1
      %s545 = scalar_select %p542, %s543, %s544
      %p548 = pneg %p542
      %p549 = scmp.eq.s32.totalorder %s36, 3
      %p550 = por %p548, %p549
      %p551 = scmp.ne.s32.totalorder %s543, %s546
      %p552 = scmp.eq.s32.totalorder %s36, 0
      %p553 = por %p551, %p552
      %p554 = scmp.ne.s32.totalorder %s543, %s546
      %p555 = scmp.eq.s32.totalorder %s41, 3
      %p556 = por %p554, %p555
      %p557 = scmp.ne.s32.totalorder %s546, %s547
      %p558 = scmp.eq.s32.totalorder %s41, 0
      %p559 = por %p557, %p558
      %p560 = scmp.ne.s32.totalorder %s546, %s547
      %p561 = scmp.eq.s32.totalorder %s42, 3
      %p562 = por %p560, %p561
      %p564 = scmp.ne.s32.totalorder %s547, %s563
      %p565 = scmp.eq.s32.totalorder %s42, 0
      %p566 = por %p564, %p565
      %s567 = ssub.s32 %s44, %s51
      %p568 = scmp.eq.s32.totalorder %s567, 0
      %s570 = sadd.s32 %s569, 1
      %s571 = scalar_select %p568, %s569, %s570
      %p574 = pneg %p568
      %p575 = scmp.eq.s32.totalorder %s36, 3
      %p576 = por %p574, %p575
      %p577 = scmp.ne.s32.totalorder %s569, %s572
      %p578 = scmp.eq.s32.totalorder %s36, 0
      %p579 = por %p577, %p578
      %p580 = scmp.ne.s32.totalorder %s569, %s572
      %p581 = scmp.eq.s32.totalorder %s41, 3
      %p582 = por %p580, %p581
      %p583 = scmp.ne.s32.totalorder %s572, %s573
      %p584 = scmp.eq.s32.totalorder %s41, 0
      %p585 = por %p583, %p584
      %p586 = scmp.ne.s32.totalorder %s572, %s573
      %p587 = scmp.eq.s32.totalorder %s42, 3
      %p588 = por %p586, %p587
      %p590 = scmp.ne.s32.totalorder %s573, %s589
      %p591 = scmp.eq.s32.totalorder %s42, 0
      %p592 = por %p590, %p591
      %s593 = ssub.s32 %s44, %s51
      %p594 = scmp.eq.s32.totalorder %s593, 0
      %s596 = sadd.s32 %s595, 1
      %s597 = scalar_select %p594, %s595, %s596
      %p600 = pneg %p594
      %p601 = scmp.eq.s32.totalorder %s36, 3
      %p602 = por %p600, %p601
      %p603 = scmp.ne.s32.totalorder %s595, %s598
      %p604 = scmp.eq.s32.totalorder %s36, 0
      %p605 = por %p603, %p604
      %p606 = scmp.ne.s32.totalorder %s595, %s598
      %p607 = scmp.eq.s32.totalorder %s41, 3
      %p608 = por %p606, %p607
      %p609 = scmp.ne.s32.totalorder %s598, %s599
      %p610 = scmp.eq.s32.totalorder %s41, 0
      %p611 = por %p609, %p610
      %p612 = scmp.ne.s32.totalorder %s598, %s599
      %p613 = scmp.eq.s32.totalorder %s42, 3
      %p614 = por %p612, %p613
      %p616 = scmp.ne.s32.totalorder %s599, %s615
      %p617 = scmp.eq.s32.totalorder %s42, 0
      %p618 = por %p616, %p617
      %s619 = ssub.s32 %s44, %s51
      %p620 = scmp.eq.s32.totalorder %s619, 0
      %s622 = sadd.s32 %s621, 1
      %s623 = scalar_select %p620, %s621, %s622
      %p626 = pneg %p620
      %p627 = scmp.eq.s32.totalorder %s36, 3
      %p628 = por %p626, %p627
      %p629 = scmp.ne.s32.totalorder %s621, %s624
      %p630 = scmp.eq.s32.totalorder %s36, 0
      %p631 = por %p629, %p630
      %p632 = scmp.ne.s32.totalorder %s621, %s624
      %p633 = scmp.eq.s32.totalorder %s41, 3
      %p634 = por %p632, %p633
      %p635 = scmp.ne.s32.totalorder %s624, %s625
      %p636 = scmp.eq.s32.totalorder %s41, 0
      %p637 = por %p635, %p636
      %p638 = scmp.ne.s32.totalorder %s624, %s625
      %p639 = scmp.eq.s32.totalorder %s42, 3
      %p640 = por %p638, %p639
      %p642 = scmp.ne.s32.totalorder %s625, %s641
      %p643 = scmp.eq.s32.totalorder %s42, 0
      %p644 = por %p642, %p643
      %s645 = ssub.s32 %s43, %s55
      %p646 = scmp.eq.s32.totalorder %s645, 0
      %s648 = sadd.s32 %s647, 1
      %s649 = scalar_select %p646, %s647, %s648
      %p652 = pneg %p646
      %p653 = scmp.eq.s32.totalorder %s36, 3
      %p654 = por %p652, %p653
      %p655 = scmp.ne.s32.totalorder %s647, %s650
      %p656 = scmp.eq.s32.totalorder %s36, 0
      %p657 = por %p655, %p656
      %p658 = scmp.ne.s32.totalorder %s647, %s650
      %p659 = scmp.eq.s32.totalorder %s41, 3
      %p660 = por %p658, %p659
      %p661 = scmp.ne.s32.totalorder %s650, %s651
      %p662 = scmp.eq.s32.totalorder %s41, 0
      %p663 = por %p661, %p662
      %p664 = scmp.ne.s32.totalorder %s650, %s651
      %p665 = scmp.eq.s32.totalorder %s42, 3
      %p666 = por %p664, %p665
      %p668 = scmp.ne.s32.totalorder %s651, %s667
      %p669 = scmp.eq.s32.totalorder %s42, 0
      %p670 = por %p668, %p669
      %p671 = scmp.le.s32.totalorder 1, %s36
      %p672 = scmp.lt.s32.totalorder %s36, 5
      %p673 = pnand %p671, %p672
      %p674 = pneg %p673
      // Predicated region
      $region9: #{tpu_custom_call.1} parent=5 // pred_check
        _
      $region10: #{tpu_custom_call.1} parent=5 // pred_check_branch
        %676 = sbr.rel (%p673) target = $region12
      $region11: #{tpu_custom_call.1} parent=5 // pred_region
        %s677 = ssub.s32 %s36, 1
        // Predicated region
        $region13: #{tpu_custom_call.1} parent=11 // pred_check
          %p678 = pneg %p121
        $region14: #{tpu_custom_call.1} parent=11 // pred_check_branch
          %680 = sbr.rel (%p678) target = $region16
        $region15: #{tpu_custom_call.1} parent=11 // pred_region
          %s682 = ssub.s32 512, 512
          %683 = vsyncadd [#allocation7], %s682
          %s684 = sshll.u32 [#allocation6], 4
          %s685 = int_to_ptr.vmem [resolvable:$true] %s684
          %690 = dma.hbm_to_vmem [thread:$0]  %s2, 512, %s685, [#allocation7], 128, 128, 8
        $region16: #{tpu_custom_call.1} parent=11 // pred_fallthru
          _
        // Predicated region
        $region17: #{tpu_custom_call.1} parent=11 // pred_check
          %p691 = pneg %p142
        $region18: #{tpu_custom_call.1} parent=11 // pred_check_branch
          %693 = sbr.rel (%p691) target = $region20
        $region19: #{tpu_custom_call.1} parent=11 // pred_region
          _
        $region20: #{tpu_custom_call.1} parent=11 // pred_fallthru
          _
        // Predicated region
        $region21: #{tpu_custom_call.1} parent=11 // pred_check
          %p694 = pneg %p163
        $region22: #{tpu_custom_call.1} parent=11 // pred_check_branch
          %696 = sbr.rel (%p694) target = $region24
        $region23: #{tpu_custom_call.1} parent=11 // pred_region
          %s698 = ssub.s32 16, 16
          %699 = vsyncadd [#allocation10], %s698
          %s701 = sshll.u32 [#allocation9], 4
          %s702 = int_to_ptr.vmem [resolvable:$true] %s701
          %704 = dma.hbm_to_vmem [thread:$0]  %s4, 16, %s702, [#allocation10]
        $region24: #{tpu_custom_call.1} parent=11 // pred_fallthru
          _
        // Predicated region
        $region25: #{tpu_custom_call.1} parent=11 // pred_check
          %p705 = pneg %p184
        $region26: #{tpu_custom_call.1} parent=11 // pred_check_branch
          %707 = sbr.rel (%p705) target = $region28
        $region27: #{tpu_custom_call.1} parent=11 // pred_region
          _
        $region28: #{tpu_custom_call.1} parent=11 // pred_fallthru
          _
        // Predicated region
        $region29: #{tpu_custom_call.1} parent=11 // pred_check
          %p708 = pneg %p205
        $region30: #{tpu_custom_call.1} parent=11 // pred_check_branch
          %710 = sbr.rel (%p708) target = $region32
        $region31: #{tpu_custom_call.1} parent=11 // pred_region
          _
        $region32: #{tpu_custom_call.1} parent=11 // pred_fallthru
          _
        // Predicated region
        $region33: #{tpu_custom_call.1} parent=11 // pred_check
          %p711 = pneg %p226
        $region34: #{tpu_custom_call.1} parent=11 // pred_check_branch
          %713 = sbr.rel (%p711) target = $region36
        $region35: #{tpu_custom_call.1} parent=11 // pred_region
          %s715 = ssub.s32 512, 512
          %716 = vsyncadd [#allocation10], %s715
          %s717 = sshll.u32 [#allocation11], 4
          %s718 = int_to_ptr.vmem [resolvable:$true] %s717
          %723 = dma.hbm_to_vmem [thread:$0]  %s7, 512, %s718, [#allocation10], 128, 128, 8
        $region36: #{tpu_custom_call.1} parent=11 // pred_fallthru
          _
        // Predicated region
        $region37: #{tpu_custom_call.1} parent=11 // pred_check
          %p724 = pneg %p247
        $region38: #{tpu_custom_call.1} parent=11 // pred_check_branch
          %726 = sbr.rel (%p724) target = $region40
        $region39: #{tpu_custom_call.1} parent=11 // pred_region
          %s728 = ssub.s32 16, 16
          %729 = vsyncadd [#allocation13], %s728
          %s731 = sshll.u32 [#allocation12], 4
          %s732 = int_to_ptr.vmem [resolvable:$true] %s731
          %734 = dma.hbm_to_vmem [thread:$0]  %s8, 16, %s732, [#allocation13]
        $region40: #{tpu_custom_call.1} parent=11 // pred_fallthru
          _
      $region12: #{tpu_custom_call.1} parent=5 // pred_fallthru
        _
      %p735 = scmp.lt.s32.totalorder %s36, 4
      // Predicated region
      $region41: #{tpu_custom_call.1} parent=5 // pred_check
        %p736 = pneg %p735
      $region42: #{tpu_custom_call.1} parent=5 // pred_check_branch
        %738 = sbr.rel (%p736) target = $region44
      $region43: #{tpu_custom_call.1} parent=5 // pred_region
        // Predicated region
        $region45: #{tpu_custom_call.1} parent=43 // pred_check
          %p739 = pneg %p68
        $region46: #{tpu_custom_call.1} parent=43 // pred_check_branch
          %741 = sbr.rel (%p739) target = $region48
        $region47: #{tpu_custom_call.1} parent=43 // pred_region
          %p742 = scmp.lt.s32.totalorder %s43, 1
          %s743 = scalar_select %p742, %s43, 1
          %s744 = smul.addr %s743, 2
          %s745 = smul.addr %s744, 8
          %s746 = scalar_lea.vmem %s0, %s745
        $region48: #{tpu_custom_call.1} parent=43 // pred_fallthru
          _
        // Predicated region
        $region49: #{tpu_custom_call.1} parent=43 // pred_check
          %p747 = pneg %p94
        $region50: #{tpu_custom_call.1} parent=43 // pred_check_branch
          %749 = sbr.rel (%p747) target = $region52
        $region51: #{tpu_custom_call.1} parent=43 // pred_region
          %p750 = scmp.lt.s32.totalorder %s43, 1
          %s751 = scalar_select %p750, %s43, 1
          %s752 = smul.addr %s751, 2
          %s753 = smul.addr %s752, 8
          %s754 = scalar_lea.vmem %s1, %s753
        $region52: #{tpu_custom_call.1} parent=43 // pred_fallthru
          _
        // Predicated region
        $region53: #{tpu_custom_call.1} parent=43 // pred_check
          %p755 = pneg %p267
        $region54: #{tpu_custom_call.1} parent=43 // pred_check_branch
          %757 = sbr.rel (%p755) target = $region56
        $region55: #{tpu_custom_call.1} parent=43 // pred_region
          %p758 = scmp.lt.s32.totalorder %s44, 1
          %s759 = scalar_select %p758, %s44, 1
          %s760 = scalar_lea.vmem %s9, %s759
        $region56: #{tpu_custom_call.1} parent=43 // pred_fallthru
          _
        // Predicated region
        $region57: #{tpu_custom_call.1} parent=43 // pred_check
          %p761 = pneg %p293
        $region58: #{tpu_custom_call.1} parent=43 // pred_check_branch
          %763 = sbr.rel (%p761) target = $region60
        $region59: #{tpu_custom_call.1} parent=43 // pred_region
          %p764 = scmp.lt.s32.totalorder %s44, 1
          %s765 = scalar_select %p764, %s44, 1
          %s766 = scalar_lea.vmem %s10, %s765
        $region60: #{tpu_custom_call.1} parent=43 // pred_fallthru
          _
        // Predicated region
        $region61: #{tpu_custom_call.1} parent=43 // pred_check
          %p767 = pneg %p319
        $region62: #{tpu_custom_call.1} parent=43 // pred_check_branch
          %769 = sbr.rel (%p767) target = $region64
        $region63: #{tpu_custom_call.1} parent=43 // pred_region
          %p770 = scmp.lt.s32.totalorder %s44, 1
          %s771 = scalar_select %p770, %s44, 1
          %s772 = smul.addr %s771, 4
          %s773 = smul.addr %s772, 8
          %s774 = scalar_lea.vmem %s11, %s773
        $region64: #{tpu_custom_call.1} parent=43 // pred_fallthru
          _
        // Predicated region
        $region65: #{tpu_custom_call.1} parent=43 // pred_check
          %p775 = pneg %p345
        $region66: #{tpu_custom_call.1} parent=43 // pred_check_branch
          %777 = sbr.rel (%p775) target = $region68
        $region67: #{tpu_custom_call.1} parent=43 // pred_region
          %p778 = scmp.lt.s32.totalorder %s44, 1
          %s779 = scalar_select %p778, %s44, 1
          %s780 = scalar_lea.vmem %s12, %s779
        $region68: #{tpu_custom_call.1} parent=43 // pred_fallthru
          _
        // Predicated region
        $region69: #{tpu_custom_call.1} parent=43 // pred_check
          %p781 = pneg %p371
        $region70: #{tpu_custom_call.1} parent=43 // pred_check_branch
          %783 = sbr.rel (%p781) target = $region72
        $region71: #{tpu_custom_call.1} parent=43 // pred_region
          %p784 = scmp.lt.s32.totalorder %s44, 1
          %s785 = scalar_select %p784, %s44, 1
          %s786 = smul.addr %s785, 4
          %s787 = smul.addr %s786, 8
          %s788 = scalar_lea.vmem %s13, %s787
        $region72: #{tpu_custom_call.1} parent=43 // pred_fallthru
          _
        // Predicated region
        $region73: #{tpu_custom_call.1} parent=43 // pred_check
          %p789 = pneg %p397
        $region74: #{tpu_custom_call.1} parent=43 // pred_check_branch
          %791 = sbr.rel (%p789) target = $region76
        $region75: #{tpu_custom_call.1} parent=43 // pred_region
          %p792 = scmp.lt.s32.totalorder %s44, 1
          %s793 = scalar_select %p792, %s44, 1
          %s794 = smul.addr %s793, 4
          %s795 = smul.addr %s794, 8
          %s796 = scalar_lea.vmem %s14, %s795
        $region76: #{tpu_custom_call.1} parent=43 // pred_fallthru
          _
        // Predicated region
        $region77: #{tpu_custom_call.1} parent=43 // pred_check
          %p797 = pneg %p423
        $region78: #{tpu_custom_call.1} parent=43 // pred_check_branch
          %799 = sbr.rel (%p797) target = $region80
        $region79: #{tpu_custom_call.1} parent=43 // pred_region
          %p800 = scmp.lt.s32.totalorder %s44, 1
          %s801 = scalar_select %p800, %s44, 1
          %s802 = scalar_lea.vmem %s15, %s801
        $region80: #{tpu_custom_call.1} parent=43 // pred_fallthru
          _
        // Predicated region
        $region81: #{tpu_custom_call.1} parent=43 // pred_check
          %p803 = pneg %p449
        $region82: #{tpu_custom_call.1} parent=43 // pred_check_branch
          %805 = sbr.rel (%p803) target = $region84
        $region83: #{tpu_custom_call.1} parent=43 // pred_region
          %p806 = scmp.lt.s32.totalorder %s44, 1
          %s807 = scalar_select %p806, %s44, 1
          %s808 = smul.addr %s807, 4
          %s809 = smul.addr %s808, 8
          %s810 = scalar_lea.vmem %s16, %s809
        $region84: #{tpu_custom_call.1} parent=43 // pred_fallthru
          _
        // Predicated region
        $region85: #{tpu_custom_call.1} parent=43 // pred_check
          %p811 = pneg %p475
        $region86: #{tpu_custom_call.1} parent=43 // pred_check_branch
          %813 = sbr.rel (%p811) target = $region88
        $region87: #{tpu_custom_call.1} parent=43 // pred_region
          %p814 = scmp.lt.s32.totalorder %s44, 1
          %s815 = scalar_select %p814, %s44, 1
          %s816 = scalar_lea.vmem %s17, %s815
        $region88: #{tpu_custom_call.1} parent=43 // pred_fallthru
          _
        // Predicated region
        $region89: #{tpu_custom_call.1} parent=43 // pred_check
          %p817 = pneg %p501
        $region90: #{tpu_custom_call.1} parent=43 // pred_check_branch
          %819 = sbr.rel (%p817) target = $region92
        $region91: #{tpu_custom_call.1} parent=43 // pred_region
          %p820 = scmp.lt.s32.totalorder %s44, 1
          %s821 = scalar_select %p820, %s44, 1
          %s822 = scalar_lea.vmem %s18, %s821
        $region92: #{tpu_custom_call.1} parent=43 // pred_fallthru
          _
        // Predicated region
        $region93: #{tpu_custom_call.1} parent=43 // pred_check
          %p823 = pneg %p527
        $region94: #{tpu_custom_call.1} parent=43 // pred_check_branch
          %825 = sbr.rel (%p823) target = $region96
        $region95: #{tpu_custom_call.1} parent=43 // pred_region
          %p826 = scmp.lt.s32.totalorder %s44, 1
          %s827 = scalar_select %p826, %s44, 1
          %s828 = scalar_lea.vmem %s19, %s827
        $region96: #{tpu_custom_call.1} parent=43 // pred_fallthru
          _
        // Predicated region
        $region97: #{tpu_custom_call.1} parent=43 // pred_check
          %p829 = pneg %p553
        $region98: #{tpu_custom_call.1} parent=43 // pred_check_branch
          %831 = sbr.rel (%p829) target = $region100
        $region99: #{tpu_custom_call.1} parent=43 // pred_region
          %p832 = scmp.lt.s32.totalorder %s44, 1
          %s833 = scalar_select %p832, %s44, 1
          %s834 = smul.addr %s833, 4
          %s835 = smul.addr %s834, 8
          %s836 = scalar_lea.vmem %s20, %s835
        $region100: #{tpu_custom_call.1} parent=43 // pred_fallthru
          _
        // Predicated region
        $region101: #{tpu_custom_call.1} parent=43 // pred_check
          %p837 = pneg %p579
        $region102: #{tpu_custom_call.1} parent=43 // pred_check_branch
          %839 = sbr.rel (%p837) target = $region104
        $region103: #{tpu_custom_call.1} parent=43 // pred_region
          %p840 = scmp.lt.s32.totalorder %s44, 1
          %s841 = scalar_select %p840, %s44, 1
          %s842 = scalar_lea.vmem %s21, %s841
        $region104: #{tpu_custom_call.1} parent=43 // pred_fallthru
          _
        // Predicated region
        $region105: #{tpu_custom_call.1} parent=43 // pred_check
          %p843 = pneg %p605
        $region106: #{tpu_custom_call.1} parent=43 // pred_check_branch
          %845 = sbr.rel (%p843) target = $region108
        $region107: #{tpu_custom_call.1} parent=43 // pred_region
          %p846 = scmp.lt.s32.totalorder %s44, 1
          %s847 = scalar_select %p846, %s44, 1
          %s848 = smul.addr %s847, 16
          %s849 = smul.addr %s848, 8
          %s850 = scalar_lea.vmem %s22, %s849
        $region108: #{tpu_custom_call.1} parent=43 // pred_fallthru
          _
        // Predicated region
        $region109: #{tpu_custom_call.1} parent=43 // pred_check
          %p851 = pneg %p631
        $region110: #{tpu_custom_call.1} parent=43 // pred_check_branch
          %853 = sbr.rel (%p851) target = $region112
        $region111: #{tpu_custom_call.1} parent=43 // pred_region
          %p854 = scmp.lt.s32.totalorder %s44, 1
          %s855 = scalar_select %p854, %s44, 1
          %s856 = scalar_lea.vmem %s23, %s855
        $region112: #{tpu_custom_call.1} parent=43 // pred_fallthru
          _
      $region44: #{tpu_custom_call.1} parent=5 // pred_fallthru
        _
      %p857 = scmp.le.s32.totalorder 1, %s36
      %p858 = scmp.lt.s32.totalorder %s36, 5
      %p859 = pnand %p857, %p858
      %p860 = pneg %p859
      // Predicated region
      $region113: #{tpu_custom_call.1} parent=5 // pred_check
        _
      $region114: #{tpu_custom_call.1} parent=5 // pred_check_branch
        %862 = sbr.rel (%p859) target = $region116
      $region115: #{tpu_custom_call.1} parent=5 // pred_region
        %s863 = ssub.s32 %s36, 1
        // Predicated region
        $region117: #{tpu_custom_call.1} parent=115 // pred_check
          %p864 = pneg %p121
        $region118: #{tpu_custom_call.1} parent=115 // pred_check_branch
          %866 = sbr.rel (%p864) target = $region120
        $region119: #{tpu_custom_call.1} parent=115 // pred_region
          %867 = dma.done [#allocation7], 512
        $region120: #{tpu_custom_call.1} parent=115 // pred_fallthru
          _
        // Predicated region
        $region121: #{tpu_custom_call.1} parent=115 // pred_check
          %p868 = pneg %p163
        $region122: #{tpu_custom_call.1} parent=115 // pred_check_branch
          %870 = sbr.rel (%p868) target = $region124
        $region123: #{tpu_custom_call.1} parent=115 // pred_region
          %871 = dma.done [#allocation10], 16
        $region124: #{tpu_custom_call.1} parent=115 // pred_fallthru
          _
        // Predicated region
        $region125: #{tpu_custom_call.1} parent=115 // pred_check
          %p872 = pneg %p226
        $region126: #{tpu_custom_call.1} parent=115 // pred_check_branch
          %874 = sbr.rel (%p872) target = $region128
        $region127: #{tpu_custom_call.1} parent=115 // pred_region
          %875 = dma.done [#allocation10], 512
        $region128: #{tpu_custom_call.1} parent=115 // pred_fallthru
          _
        // Predicated region
        $region129: #{tpu_custom_call.1} parent=115 // pred_check
          %p876 = pneg %p247
        $region130: #{tpu_custom_call.1} parent=115 // pred_check_branch
          %878 = sbr.rel (%p876) target = $region132
        $region131: #{tpu_custom_call.1} parent=115 // pred_region
          %879 = dma.done [#allocation13], 16
        $region132: #{tpu_custom_call.1} parent=115 // pred_fallthru
          _
        %p880 = scmp.lt.s32.totalorder %s45, 1
        %s881 = scalar_select %p880, %s45, 1
        %s882 = smul.addr %s881, 2
        %s883 = smul.addr %s882, 8
        %s884 = scalar_lea.vmem %s0, %s883
        %p885 = pneg %p74
        %p886 = pneg %p71
        %p887 = scmp.lt.s32.totalorder %s45, 1
        %s888 = scalar_select %p887, %s45, 1
        %s889 = smul.addr %s888, 2
        %s890 = smul.addr %s889, 8
        %s891 = scalar_lea.vmem %s1, %s890
        %p892 = pneg %p100
        %p893 = pneg %p97
        %p894 = pneg %p121
        %p895 = pneg %p118
        %p896 = pneg %p142
        %p897 = pneg %p139
        %p898 = pneg %p163
        %p899 = pneg %p160
        %p900 = pneg %p184
        %p901 = pneg %p181
        %p902 = pneg %p205
        %p903 = pneg %p202
        %p904 = pneg %p226
        %p905 = pneg %p223
        %p906 = pneg %p247
        %p907 = pneg %p244
        %p908 = scmp.lt.s32.totalorder %s46, 1
        %s909 = scalar_select %p908, %s46, 1
        %s910 = scalar_lea.vmem %s9, %s909
        %p911 = pneg %p273
        %p912 = pneg %p270
        %p913 = scmp.lt.s32.totalorder %s46, 1
        %s914 = scalar_select %p913, %s46, 1
        %s915 = scalar_lea.vmem %s10, %s914
        %p916 = pneg %p299
        %p917 = pneg %p296
        %p918 = scmp.lt.s32.totalorder %s46, 1
        %s919 = scalar_select %p918, %s46, 1
        %s920 = smul.addr %s919, 4
        %s921 = smul.addr %s920, 8
        %s922 = scalar_lea.vmem %s11, %s921
        %p923 = pneg %p325
        %p924 = pneg %p322
        %p925 = scmp.lt.s32.totalorder %s46, 1
        %s926 = scalar_select %p925, %s46, 1
        %s927 = scalar_lea.vmem %s12, %s926
        %p928 = pneg %p351
        %p929 = pneg %p348
        %p930 = scmp.lt.s32.totalorder %s46, 1
        %s931 = scalar_select %p930, %s46, 1
        %s932 = smul.addr %s931, 4
        %s933 = smul.addr %s932, 8
        %s934 = scalar_lea.vmem %s13, %s933
        %p935 = pneg %p377
        %p936 = pneg %p374
        %p937 = scmp.lt.s32.totalorder %s46, 1
        %s938 = scalar_select %p937, %s46, 1
        %s939 = smul.addr %s938, 4
        %s940 = smul.addr %s939, 8
        %s941 = scalar_lea.vmem %s14, %s940
        %p942 = pneg %p403
        %p943 = pneg %p400
        %p944 = scmp.lt.s32.totalorder %s46, 1
        %s945 = scalar_select %p944, %s46, 1
        %s946 = scalar_lea.vmem %s15, %s945
        %p947 = pneg %p429
        %p948 = pneg %p426
        %p949 = scmp.lt.s32.totalorder %s46, 1
        %s950 = scalar_select %p949, %s46, 1
        %s951 = smul.addr %s950, 4
        %s952 = smul.addr %s951, 8
        %s953 = scalar_lea.vmem %s16, %s952
        %p954 = pneg %p455
        %p955 = pneg %p452
        %p956 = scmp.lt.s32.totalorder %s46, 1
        %s957 = scalar_select %p956, %s46, 1
        %s958 = scalar_lea.vmem %s17, %s957
        %p959 = pneg %p481
        %p960 = pneg %p478
        %p961 = scmp.lt.s32.totalorder %s46, 1
        %s962 = scalar_select %p961, %s46, 1
        %s963 = scalar_lea.vmem %s18, %s962
        %p964 = pneg %p507
        %p965 = pneg %p504
        %p966 = scmp.lt.s32.totalorder %s46, 1
        %s967 = scalar_select %p966, %s46, 1
        %s968 = scalar_lea.vmem %s19, %s967
        %p969 = pneg %p533
        %p970 = pneg %p530
        %p971 = scmp.lt.s32.totalorder %s46, 1
        %s972 = scalar_select %p971, %s46, 1
        %s973 = smul.addr %s972, 4
        %s974 = smul.addr %s973, 8
        %s975 = scalar_lea.vmem %s20, %s974
        %p976 = pneg %p559
        %p977 = pneg %p556
        %p978 = scmp.lt.s32.totalorder %s46, 1
        %s979 = scalar_select %p978, %s46, 1
        %s980 = scalar_lea.vmem %s21, %s979
        %p981 = pneg %p585
        %p982 = pneg %p582
        %p983 = scmp.lt.s32.totalorder %s46, 1
        %s984 = scalar_select %p983, %s46, 1
        %s985 = smul.addr %s984, 16
        %s986 = smul.addr %s985, 8
        %s987 = scalar_lea.vmem %s22, %s986
        %p988 = pneg %p611
        %p989 = pneg %p608
        %p990 = scmp.lt.s32.totalorder %s46, 1
        %s991 = scalar_select %p990, %s46, 1
        %s992 = scalar_lea.vmem %s23, %s991
        %p993 = pneg %p637
        %p994 = pneg %p634
        %p995 = pneg %p663
        %p996 = pneg %p660
        %s997 = sand.u32 %s650, 1
        %s998 = scalar_lea.sflag [#allocation8], %s997
        %s999 = sand.u32 %s650, 1
        %s1000 = smul.addr %s999, 16
        %s1001 = scalar_lea.vmem [#allocation14], %s1000
        %p1002 = scmp.lt.s32.totalorder %s45, 1
        %s1003 = scalar_select %p1002, %s45, 1
        %s1004 = smul.addr %s1003, 2
        %s1005 = smul.addr %s1004, 8
        %s1006 = scalar_lea.vmem %s0, %s1005
        %p1007 = scmp.lt.s32.totalorder %s45, 1
        %s1008 = scalar_select %p1007, %s45, 1
        %s1009 = smul.addr %s1008, 2
        %s1010 = smul.addr %s1009, 8
        %s1011 = scalar_lea.vmem %s1, %s1010
        %p1012 = scmp.lt.s32.totalorder %s46, 1
        %s1013 = scalar_select %p1012, %s46, 1
        %s1014 = scalar_lea.vmem %s9, %s1013
        %p1015 = scmp.lt.s32.totalorder %s46, 1
        %s1016 = scalar_select %p1015, %s46, 1
        %s1017 = scalar_lea.vmem %s10, %s1016
        %p1018 = scmp.lt.s32.totalorder %s46, 1
        %s1019 = scalar_select %p1018, %s46, 1
        %s1020 = smul.addr %s1019, 4
        %s1021 = smul.addr %s1020, 8
        %s1022 = scalar_lea.vmem %s11, %s1021
        %p1023 = scmp.lt.s32.totalorder %s46, 1
        %s1024 = scalar_select %p1023, %s46, 1
        %s1025 = scalar_lea.vmem %s12, %s1024
        %p1026 = scmp.lt.s32.totalorder %s46, 1
        %s1027 = scalar_select %p1026, %s46, 1
        %s1028 = smul.addr %s1027, 4
        %s1029 = smul.addr %s1028, 8
        %s1030 = scalar_lea.vmem %s13, %s1029
        %p1031 = scmp.lt.s32.totalorder %s46, 1
        %s1032 = scalar_select %p1031, %s46, 1
        %s1033 = smul.addr %s1032, 4
        %s1034 = smul.addr %s1033, 8
        %s1035 = scalar_lea.vmem %s14, %s1034
        %p1036 = scmp.lt.s32.totalorder %s46, 1
        %s1037 = scalar_select %p1036, %s46, 1
        %s1038 = scalar_lea.vmem %s15, %s1037
        %p1039 = scmp.lt.s32.totalorder %s46, 1
        %s1040 = scalar_select %p1039, %s46, 1
        %s1041 = smul.addr %s1040, 4
        %s1042 = smul.addr %s1041, 8
        %s1043 = scalar_lea.vmem %s16, %s1042
        %p1044 = scmp.lt.s32.totalorder %s46, 1
        %s1045 = scalar_select %p1044, %s46, 1
        %s1046 = scalar_lea.vmem %s17, %s1045
        %p1047 = scmp.lt.s32.totalorder %s46, 1
        %s1048 = scalar_select %p1047, %s46, 1
        %s1049 = scalar_lea.vmem %s18, %s1048
        %p1050 = scmp.lt.s32.totalorder %s46, 1
        %s1051 = scalar_select %p1050, %s46, 1
        %s1052 = scalar_lea.vmem %s19, %s1051
        %p1053 = scmp.lt.s32.totalorder %s46, 1
        %s1054 = scalar_select %p1053, %s46, 1
        %s1055 = smul.addr %s1054, 4
        %s1056 = smul.addr %s1055, 8
        %s1057 = scalar_lea.vmem %s20, %s1056
        %p1058 = scmp.lt.s32.totalorder %s46, 1
        %s1059 = scalar_select %p1058, %s46, 1
        %s1060 = scalar_lea.vmem %s21, %s1059
        %p1061 = scmp.lt.s32.totalorder %s46, 1
        %s1062 = scalar_select %p1061, %s46, 1
        %s1063 = smul.addr %s1062, 16
        %s1064 = smul.addr %s1063, 8
        %s1065 = scalar_lea.vmem %s22, %s1064
        %p1066 = scmp.lt.s32.totalorder %s46, 1
        %s1067 = scalar_select %p1066, %s46, 1
        %s1068 = scalar_lea.vmem %s23, %s1067
        %p1069 = scmp.eq.s32.totalorder %s46, 0
        // Predicated region
        $region133: #{tpu_custom_call.1} parent=115 // pred_check
          %p1070 = pneg %p1069
        $region134: #{tpu_custom_call.1} parent=115 // pred_check_branch
          %1072 = sbr.rel (%p1070) target = $region136
        $region135: #{tpu_custom_call.1} parent=115 // pred_region
          %v1073 = vld [vmem:[%s1006] sm:$0xff]
          %v1074 = vld [vmem:[%s1006 + $0x8] sm:$0xff]
          %v1075 = vld [vmem:[%s1011] sm:$0xff]
          %v1076 = vld [vmem:[%s1011 + $0x8] sm:$0xff]
          %v1077 = vld [vmem:[#allocation6] sm:$0xff]
          %v1078 = vld [vmem:[#allocation6 + $0x8] sm:$0xff]
          %v1079 = vld [vmem:[#allocation6 + $0x10] sm:$0xff]
          %v1080 = vld [vmem:[#allocation6 + $0x18] sm:$0xff]
          %v1081 = vld [vmem:[%s3] sm:$0x1]
          %v1083 = vlaneseq
          %v1084 = vshrl.u32 %v1083, 7
          %v1085 = vsub.s32 0, %v1084
          %v1086 = vrot.slane %v1081, %v1085
          %vm1088 = vcmask 261120
          %v1090 = vsel %vm1088, %v1073, 0
          %v1093 = vsel %vm1088, %v1074, 0
          %1095 = vmatprep.subr.mxu0 0.0
          %1096 = vmatpush1.msra.mxu0 %v1077
          %1097 = vmatprep.subr.mxu0 0.0
          %1098 = vmatpush1.msra.mxu0 %v1078
          %1099 = vmatprep.subr.mxu0 0.0
          %1100 = vmatpush1.msra.mxu0 %v1079
          %1101 = vmatprep.subr.mxu0 0.0
          %1102 = vmatpush1.msra.mxu0 %v1080
          %1103 = vmatprep.subr.mxu0 0.0
          %1104 = vmatpush1.msra.mxu0 0.0
          %1105 = vmatprep.subr.mxu0 0.0
          %1106 = vmatpush1.msra.mxu0 0.0
          %1107 = vmatprep.subr.mxu0 0.0
          %1108 = vmatpush1.msra.mxu0 0.0
          %1109 = vmatprep.subr.mxu0 0.0
          %1110 = vmatpush1.msra.mxu0 0.0
          %1111 = vmatprep.subr.mxu0 0.0
          %1112 = vmatpush1.msra.mxu0 0.0
          %1113 = vmatprep.subr.mxu0 0.0
          %1114 = vmatpush1.msra.mxu0 0.0
          %1115 = vmatprep.subr.mxu0 0.0
          %1116 = vmatpush1.msra.mxu0 0.0
          %1117 = vmatprep.subr.mxu0 0.0
          %1118 = vmatpush1.msra.mxu0 0.0
          %1119 = vmatprep.subr.mxu0 0.0
          %1120 = vmatpush1.msra.mxu0 0.0
          %1121 = vmatprep.subr.mxu0 0.0
          %1122 = vmatpush1.msra.mxu0 0.0
          %1123 = vmatprep.subr.mxu0 0.0
          %1124 = vmatpush1.msra.mxu0 0.0
          %1125 = vmatprep.subr.mxu0 0.0
          %1126 = vmatpush1.msra.mxu0 0.0
          %1127 = vmatprep.subr.mxu0 0.0
          %1128 = vmatpush1.msra.mxu0 0.0
          %1129 = vmatprep.subr.mxu0 0.0
          %1130 = vmatpush1.msra.mxu0 0.0
          %1131 = vmatprep.subr.mxu0 0.0
          %1132 = vmatpush1.msra.mxu0 0.0
          %1133 = vmatprep.subr.mxu0 0.0
          %1134 = vmatpush1.msra.mxu0 0.0
          %1135 = vmatprep.subr.mxu0 0.0
          %1136 = vmatpush1.msra.mxu0 0.0
          %1137 = vmatprep.subr.mxu0 0.0
          %1138 = vmatpush1.msra.mxu0 0.0
          %1139 = vmatprep.subr.mxu0 0.0
          %1140 = vmatpush1.msra.mxu0 0.0
          %1141 = vmatprep.subr.mxu0 0.0
          %1142 = vmatpush1.msra.mxu0 0.0
          %1143 = vmatprep.subr.mxu0 0.0
          %1144 = vmatpush1.msra.mxu0 0.0
          %1145 = vmatprep.subr.mxu0 0.0
          %1146 = vmatpush1.msra.mxu0 0.0
          %1147 = vmatprep.subr.mxu0 0.0
          %1148 = vmatpush1.msra.mxu0 0.0
          %1149 = vmatprep.subr.mxu0 0.0
          %1150 = vmatpush1.msra.mxu0 0.0
          %1151 = vmatprep.subr.mxu0 0.0
          %1152 = vmatpush1.msra.mxu0 0.0
          %1153 = vmatprep.subr.mxu0 0.0
          %1154 = vmatpush1.msra.mxu0 0.0
          %1155 = vmatprep.subr.mxu0 0.0
          %1156 = vmatpush1.msra.mxu0 0.0
          %1157 = vmatprep.subr.mxu0 0.0
          %1158 = vmatpush1.msra.mxu0 0.0
          %1159 = vmatprep.mubr.f32.mxu0 0.0
          %1160 = vmatmul.mubr.f32.gmra.mrb[0].mxu0 %v1090
          %v1161 = vpop.f32.mrb[0].mxu0
          %v1162 = vadd.f32 %v1086, %v1161
          %v1163 = vpop.f32.mrb[0].mxu0
          %1164 = vmatprep.mubr.f32.mxu0 0.0
          %1165 = vmatmul.mubr.f32.gmra.mrb[0].mxu0 %v1093
          %v1166 = vpop.f32.mrb[0].mxu0
          %v1167 = vadd.f32 %v1086, %v1166
          %v1168 = vpop.f32.mrb[0].mxu0
          %1169 = vdwg.mxu0
          %v1170 = vsub.f32 1.0, %v1075
          %v1171 = vsub.f32 1.0, %v1076
          %1173 = vset.pattern.permute.xlu0 0
          %1174 = vperm.xlu0 %1173, %v1170
          %v1175 = vpop.permute.xlu0 %1174
          %1178 = vset.pattern.permute.xlu0 0
          %1179 = vperm.xlu0 %1178, %v1171
          %v1180 = vpop.permute.xlu0 %1179
          %v1182 = vmul.f32 %v1162, %v1175
          %v1183 = vmul.f32 %v1167, %v1180
          %v1184 = vld [vmem:[#allocation9] sm:$0x1]
          %v1186 = vlaneseq
          %v1187 = vshrl.u32 %v1186, 7
          %v1188 = vsub.s32 0, %v1187
          %v1189 = vrot.slane %v1184, %v1188
          %1192 = vset.pattern.permute.xlu0 0
          %1193 = vperm.xlu0 %1192, %v1075
          %v1194 = vpop.permute.xlu0 %1193
          %1197 = vset.pattern.permute.xlu0 0
          %1198 = vperm.xlu0 %1197, %v1076
          %v1199 = vpop.permute.xlu0 %1198
          %v1201 = vmul.f32 %v1189, %v1194
          %v1202 = vmul.f32 %v1189, %v1199
          %v1203 = vadd.f32 %v1182, %v1201
          %v1204 = vadd.f32 %v1183, %v1202
          %1205 = vst.msk [vmem:[#allocation2] sm:$0xff] %vm1088, %v1203
          %1206 = vst.msk [vmem:[#allocation2 + $0x8] sm:$0xff] %vm1088, %v1204
        $region136: #{tpu_custom_call.1} parent=115 // pred_fallthru
          _
        %v1207 = vld [vmem:[#allocation2] sm:$0xff]
        %v1208 = vld [vmem:[#allocation2 + $0x8] sm:$0xff]
        %v1209 = vld [vmem:[%s1014] sm:$0x1]
        %v1210 = vld [vmem:[%s1017] sm:$0x1]
        %vm1211 = vcmask 261120
        %v1212 = vsel %vm1211, %v1207, 0.0
        %1213 = vadd.xlane.f32.xlu0 %v1212
        %v1214 = vpop.xlane.xlu0 %1213
        %v1215 = vsel %vm1211, %v1208, 0.0
        %1216 = vadd.xlane.f32.xlu0 %v1215
        %v1217 = vpop.xlane.xlu0 %1216
        %v1218 = vrcp.pop 32.0
        %v1219 = vmul.f32 %v1214, %v1218
        %v1220 = vmul.f32 %v1217, %v1218
        %v1221 = vsub.f32 %v1207, %v1219
        %v1222 = vsub.f32 %v1208, %v1220
        %v1223 = vmul.f32 %v1221, %v1221
        %v1224 = vmul.f32 %v1222, %v1222
        %v1225 = vsel %vm1211, %v1223, 0.0
        %1226 = vadd.xlane.f32.xlu0 %v1225
        %v1227 = vpop.xlane.xlu0 %1226
        %v1228 = vsel %vm1211, %v1224, 0.0
        %1229 = vadd.xlane.f32.xlu0 %v1228
        %v1230 = vpop.xlane.xlu0 %1229
        %v1231 = vmul.f32 %v1227, %v1218
        %v1232 = vmul.f32 %v1230, %v1218
        %v1233 = vadd.f32 %v1231, 1e-05
        %v1234 = vadd.f32 %v1232, 1e-05
        %v1235 = vrsqrt.pop %v1233
        %v1236 = vrsqrt.pop %v1234
        %v1237 = vmul.f32 %v1221, %v1235
        %v1238 = vmul.f32 %v1222, %v1236
        %v1240 = vlaneseq
        %v1241 = vshrl.u32 %v1240, 7
        %v1242 = vsub.s32 0, %v1241
        %v1243 = vrot.slane %v1209, %v1242
        %v1245 = vmul.f32 %v1237, %v1243
        %v1246 = vmul.f32 %v1238, %v1243
        %v1248 = vlaneseq
        %v1249 = vshrl.u32 %v1248, 7
        %v1250 = vsub.s32 0, %v1249
        %v1251 = vrot.slane %v1210, %v1250
        %v1253 = vadd.f32 %v1245, %v1251
        %v1254 = vadd.f32 %v1246, %v1251
        %v1255 = vld [vmem:[%s1022] sm:$0xff]
        %v1256 = vld [vmem:[%s1022 + $0x8] sm:$0xff]
        %v1257 = vld [vmem:[%s1022 + $0x10] sm:$0xff]
        %v1258 = vld [vmem:[%s1022 + $0x18] sm:$0xff]
        %v1259 = vld [vmem:[%s1025] sm:$0x1]
        %v1261 = vlaneseq
        %v1262 = vshrl.u32 %v1261, 7
        %v1263 = vsub.s32 0, %v1262
        %v1264 = vrot.slane %v1259, %v1263
        %v1267 = vsel %vm1211, %v1253, 0
        %v1270 = vsel %vm1211, %v1254, 0
        %1272 = vmatprep.subr.mxu0 0.0
        %1273 = vmatpush1.msra.mxu0 %v1255
        %1274 = vmatprep.subr.mxu0 0.0
        %1275 = vmatpush1.msra.mxu0 %v1256
        %1276 = vmatprep.subr.mxu0 0.0
        %1277 = vmatpush1.msra.mxu0 %v1257
        %1278 = vmatprep.subr.mxu0 0.0
        %1279 = vmatpush1.msra.mxu0 %v1258
        %1280 = vmatprep.subr.mxu0 0.0
        %1281 = vmatpush1.msra.mxu0 0.0
        %1282 = vmatprep.subr.mxu0 0.0
        %1283 = vmatpush1.msra.mxu0 0.0
        %1284 = vmatprep.subr.mxu0 0.0
        %1285 = vmatpush1.msra.mxu0 0.0
        %1286 = vmatprep.subr.mxu0 0.0
        %1287 = vmatpush1.msra.mxu0 0.0
        %1288 = vmatprep.subr.mxu0 0.0
        %1289 = vmatpush1.msra.mxu0 0.0
        %1290 = vmatprep.subr.mxu0 0.0
        %1291 = vmatpush1.msra.mxu0 0.0
        %1292 = vmatprep.subr.mxu0 0.0
        %1293 = vmatpush1.msra.mxu0 0.0
        %1294 = vmatprep.subr.mxu0 0.0
        %1295 = vmatpush1.msra.mxu0 0.0
        %1296 = vmatprep.subr.mxu0 0.0
        %1297 = vmatpush1.msra.mxu0 0.0
        %1298 = vmatprep.subr.mxu0 0.0
        %1299 = vmatpush1.msra.mxu0 0.0
        %1300 = vmatprep.subr.mxu0 0.0
        %1301 = vmatpush1.msra.mxu0 0.0
        %1302 = vmatprep.subr.mxu0 0.0
        %1303 = vmatpush1.msra.mxu0 0.0
        %1304 = vmatprep.subr.mxu0 0.0
        %1305 = vmatpush1.msra.mxu0 0.0
        %1306 = vmatprep.subr.mxu0 0.0
        %1307 = vmatpush1.msra.mxu0 0.0
        %1308 = vmatprep.subr.mxu0 0.0
        %1309 = vmatpush1.msra.mxu0 0.0
        %1310 = vmatprep.subr.mxu0 0.0
        %1311 = vmatpush1.msra.mxu0 0.0
        %1312 = vmatprep.subr.mxu0 0.0
        %1313 = vmatpush1.msra.mxu0 0.0
        %1314 = vmatprep.subr.mxu0 0.0
        %1315 = vmatpush1.msra.mxu0 0.0
        %1316 = vmatprep.subr.mxu0 0.0
        %1317 = vmatpush1.msra.mxu0 0.0
        %1318 = vmatprep.subr.mxu0 0.0
        %1319 = vmatpush1.msra.mxu0 0.0
        %1320 = vmatprep.subr.mxu0 0.0
        %1321 = vmatpush1.msra.mxu0 0.0
        %1322 = vmatprep.subr.mxu0 0.0
        %1323 = vmatpush1.msra.mxu0 0.0
        %1324 = vmatprep.subr.mxu0 0.0
        %1325 = vmatpush1.msra.mxu0 0.0
        %1326 = vmatprep.subr.mxu0 0.0
        %1327 = vmatpush1.msra.mxu0 0.0
        %1328 = vmatprep.subr.mxu0 0.0
        %1329 = vmatpush1.msra.mxu0 0.0
        %1330 = vmatprep.subr.mxu0 0.0
        %1331 = vmatpush1.msra.mxu0 0.0
        %1332 = vmatprep.subr.mxu0 0.0
        %1333 = vmatpush1.msra.mxu0 0.0
        %1334 = vmatprep.subr.mxu0 0.0
        %1335 = vmatpush1.msra.mxu0 0.0
        %1336 = vmatprep.mubr.f32.mxu0 0.0
        %1337 = vmatmul.mubr.f32.gmra.mrb[0].mxu0 %v1267
        %v1338 = vpop.f32.mrb[0].mxu0
        %v1339 = vadd.f32 %v1264, %v1338
        %v1340 = vpop.f32.mrb[0].mxu0
        %1341 = vmatprep.mubr.f32.mxu0 0.0
        %1342 = vmatmul.mubr.f32.gmra.mrb[0].mxu0 %v1270
        %v1343 = vpop.f32.mrb[0].mxu0
        %v1344 = vadd.f32 %v1264, %v1343
        %v1345 = vpop.f32.mrb[0].mxu0
        %1346 = vdwg.mxu0
        %v1347 = vld [vmem:[%s1030] sm:$0xff]
        %v1348 = vld [vmem:[%s1030 + $0x8] sm:$0xff]
        %v1349 = vld [vmem:[%s1030 + $0x10] sm:$0xff]
        %v1350 = vld [vmem:[%s1030 + $0x18] sm:$0xff]
        %1351 = vmatprep.subr.mxu0 0.0
        %1352 = vmatpush1.msra.mxu0 %v1347
        %1353 = vmatprep.subr.mxu0 0.0
        %1354 = vmatpush1.msra.mxu0 %v1348
        %1355 = vmatprep.subr.mxu0 0.0
        %1356 = vmatpush1.msra.mxu0 %v1349
        %1357 = vmatprep.subr.mxu0 0.0
        %1358 = vmatpush1.msra.mxu0 %v1350
        %1359 = vmatprep.subr.mxu0 0.0
        %1360 = vmatpush1.msra.mxu0 0.0
        %1361 = vmatprep.subr.mxu0 0.0
        %1362 = vmatpush1.msra.mxu0 0.0
        %1363 = vmatprep.subr.mxu0 0.0
        %1364 = vmatpush1.msra.mxu0 0.0
        %1365 = vmatprep.subr.mxu0 0.0
        %1366 = vmatpush1.msra.mxu0 0.0
        %1367 = vmatprep.subr.mxu0 0.0
        %1368 = vmatpush1.msra.mxu0 0.0
        %1369 = vmatprep.subr.mxu0 0.0
        %1370 = vmatpush1.msra.mxu0 0.0
        %1371 = vmatprep.subr.mxu0 0.0
        %1372 = vmatpush1.msra.mxu0 0.0
        %1373 = vmatprep.subr.mxu0 0.0
        %1374 = vmatpush1.msra.mxu0 0.0
        %1375 = vmatprep.subr.mxu0 0.0
        %1376 = vmatpush1.msra.mxu0 0.0
        %1377 = vmatprep.subr.mxu0 0.0
        %1378 = vmatpush1.msra.mxu0 0.0
        %1379 = vmatprep.subr.mxu0 0.0
        %1380 = vmatpush1.msra.mxu0 0.0
        %1381 = vmatprep.subr.mxu0 0.0
        %1382 = vmatpush1.msra.mxu0 0.0
        %1383 = vmatprep.subr.mxu0 0.0
        %1384 = vmatpush1.msra.mxu0 0.0
        %1385 = vmatprep.subr.mxu0 0.0
        %1386 = vmatpush1.msra.mxu0 0.0
        %1387 = vmatprep.subr.mxu0 0.0
        %1388 = vmatpush1.msra.mxu0 0.0
        %1389 = vmatprep.subr.mxu0 0.0
        %1390 = vmatpush1.msra.mxu0 0.0
        %1391 = vmatprep.subr.mxu0 0.0
        %1392 = vmatpush1.msra.mxu0 0.0
        %1393 = vmatprep.subr.mxu0 0.0
        %1394 = vmatpush1.msra.mxu0 0.0
        %1395 = vmatprep.subr.mxu0 0.0
        %1396 = vmatpush1.msra.mxu0 0.0
        %1397 = vmatprep.subr.mxu0 0.0
        %1398 = vmatpush1.msra.mxu0 0.0
        %1399 = vmatprep.subr.mxu0 0.0
        %1400 = vmatpush1.msra.mxu0 0.0
        %1401 = vmatprep.subr.mxu0 0.0
        %1402 = vmatpush1.msra.mxu0 0.0
        %1403 = vmatprep.subr.mxu0 0.0
        %1404 = vmatpush1.msra.mxu0 0.0
        %1405 = vmatprep.subr.mxu0 0.0
        %1406 = vmatpush1.msra.mxu0 0.0
        %1407 = vmatprep.subr.mxu0 0.0
        %1408 = vmatpush1.msra.mxu0 0.0
        %1409 = vmatprep.subr.mxu0 0.0
        %1410 = vmatpush1.msra.mxu0 0.0
        %1411 = vmatprep.subr.mxu0 0.0
        %1412 = vmatpush1.msra.mxu0 0.0
        %1413 = vmatprep.subr.mxu0 0.0
        %1414 = vmatpush1.msra.mxu0 0.0
        %1415 = vmatprep.mubr.f32.mxu0 0.0
        %1416 = vmatmul.mubr.f32.gmra.mrb[0].mxu0 %v1267
        %v1417 = vpop.f32.mrb[0].mxu0
        %v1418 = vadd.f32 0.0, %v1417
        %v1419 = vpop.f32.mrb[0].mxu0
        %1420 = vmatprep.mubr.f32.mxu0 0.0
        %1421 = vmatmul.mubr.f32.gmra.mrb[0].mxu0 %v1270
        %v1422 = vpop.f32.mrb[0].mxu0
        %v1423 = vadd.f32 0.0, %v1422
        %v1424 = vpop.f32.mrb[0].mxu0
        %1425 = vdwg.mxu0
        %v1426 = vld [vmem:[%s1035] sm:$0xff]
        %v1427 = vld [vmem:[%s1035 + $0x8] sm:$0xff]
        %v1428 = vld [vmem:[%s1035 + $0x10] sm:$0xff]
        %v1429 = vld [vmem:[%s1035 + $0x18] sm:$0xff]
        %v1430 = vld [vmem:[%s1038] sm:$0x1]
        %v1432 = vlaneseq
        %v1433 = vshrl.u32 %v1432, 7
        %v1434 = vsub.s32 0, %v1433
        %v1435 = vrot.slane %v1430, %v1434
        %1437 = vmatprep.subr.mxu0 0.0
        %1438 = vmatpush1.msra.mxu0 %v1426
        %1439 = vmatprep.subr.mxu0 0.0
        %1440 = vmatpush1.msra.mxu0 %v1427
        %1441 = vmatprep.subr.mxu0 0.0
        %1442 = vmatpush1.msra.mxu0 %v1428
        %1443 = vmatprep.subr.mxu0 0.0
        %1444 = vmatpush1.msra.mxu0 %v1429
        %1445 = vmatprep.subr.mxu0 0.0
        %1446 = vmatpush1.msra.mxu0 0.0
        %1447 = vmatprep.subr.mxu0 0.0
        %1448 = vmatpush1.msra.mxu0 0.0
        %1449 = vmatprep.subr.mxu0 0.0
        %1450 = vmatpush1.msra.mxu0 0.0
        %1451 = vmatprep.subr.mxu0 0.0
        %1452 = vmatpush1.msra.mxu0 0.0
        %1453 = vmatprep.subr.mxu0 0.0
        %1454 = vmatpush1.msra.mxu0 0.0
        %1455 = vmatprep.subr.mxu0 0.0
        %1456 = vmatpush1.msra.mxu0 0.0
        %1457 = vmatprep.subr.mxu0 0.0
        %1458 = vmatpush1.msra.mxu0 0.0
        %1459 = vmatprep.subr.mxu0 0.0
        %1460 = vmatpush1.msra.mxu0 0.0
        %1461 = vmatprep.subr.mxu0 0.0
        %1462 = vmatpush1.msra.mxu0 0.0
        %1463 = vmatprep.subr.mxu0 0.0
        %1464 = vmatpush1.msra.mxu0 0.0
        %1465 = vmatprep.subr.mxu0 0.0
        %1466 = vmatpush1.msra.mxu0 0.0
        %1467 = vmatprep.subr.mxu0 0.0
        %1468 = vmatpush1.msra.mxu0 0.0
        %1469 = vmatprep.subr.mxu0 0.0
        %1470 = vmatpush1.msra.mxu0 0.0
        %1471 = vmatprep.subr.mxu0 0.0
        %1472 = vmatpush1.msra.mxu0 0.0
        %1473 = vmatprep.subr.mxu0 0.0
        %1474 = vmatpush1.msra.mxu0 0.0
        %1475 = vmatprep.subr.mxu0 0.0
        %1476 = vmatpush1.msra.mxu0 0.0
        %1477 = vmatprep.subr.mxu0 0.0
        %1478 = vmatpush1.msra.mxu0 0.0
        %1479 = vmatprep.subr.mxu0 0.0
        %1480 = vmatpush1.msra.mxu0 0.0
        %1481 = vmatprep.subr.mxu0 0.0
        %1482 = vmatpush1.msra.mxu0 0.0
        %1483 = vmatprep.subr.mxu0 0.0
        %1484 = vmatpush1.msra.mxu0 0.0
        %1485 = vmatprep.subr.mxu0 0.0
        %1486 = vmatpush1.msra.mxu0 0.0
        %1487 = vmatprep.subr.mxu0 0.0
        %1488 = vmatpush1.msra.mxu0 0.0
        %1489 = vmatprep.subr.mxu0 0.0
        %1490 = vmatpush1.msra.mxu0 0.0
        %1491 = vmatprep.subr.mxu0 0.0
        %1492 = vmatpush1.msra.mxu0 0.0
        %1493 = vmatprep.subr.mxu0 0.0
        %1494 = vmatpush1.msra.mxu0 0.0
        %1495 = vmatprep.subr.mxu0 0.0
        %1496 = vmatpush1.msra.mxu0 0.0
        %1497 = vmatprep.subr.mxu0 0.0
        %1498 = vmatpush1.msra.mxu0 0.0
        %1499 = vmatprep.subr.mxu0 0.0
        %1500 = vmatpush1.msra.mxu0 0.0
        %1501 = vmatprep.mubr.f32.mxu0 0.0
        %1502 = vmatmul.mubr.f32.gmra.mrb[0].mxu0 %v1267
        %v1503 = vpop.f32.mrb[0].mxu0
        %v1504 = vadd.f32 %v1435, %v1503
        %v1505 = vpop.f32.mrb[0].mxu0
        %1506 = vmatprep.mubr.f32.mxu0 0.0
        %1507 = vmatmul.mubr.f32.gmra.mrb[0].mxu0 %v1270
        %v1508 = vpop.f32.mrb[0].mxu0
        %v1509 = vadd.f32 %v1435, %v1508
        %v1510 = vpop.f32.mrb[0].mxu0
        %1511 = vdwg.mxu0
        %vm1512 = vcmask 64512
        %1513 = vst.msk [vmem:[#allocation3] sm:$0xff] %vm1512, %v1418
        %1514 = vst.msk [vmem:[#allocation3 + $0x8] sm:$0xff] %vm1512, %v1423
        %1515 = vst.msk [vmem:[#allocation4] sm:$0xff] %vm1512, %v1504
        %1516 = vst.msk [vmem:[#allocation4 + $0x8] sm:$0xff] %vm1512, %v1509
        loop: start=0, step=1, limit=2
        $region137: #{tpu_custom_call.1} parent=115 // loop_pre_header
          _
        $region138: #{tpu_custom_call.1} parent=115 // loop_header
          %s1518 = sphi 0, %s1522
          %p1519 = scmp.ge.s32.totalorder %s1518, 2
          %v1523 = vphi -1e+30, %v1624
          %v1524 = vphi -1e+30, %v1625
          %v1525 = vphi 0.0, %v1646
          %v1526 = vphi 0.0, %v1647
          %v1527 = vphi 0.0, %v1731
          %v1528 = vphi 0.0, %v1732
        $region139: #{tpu_custom_call.1} parent=115 // loop_header_branch
          %1521 = sbr.rel (%p1519) target = $region143
        $region140: #{tpu_custom_call.1} parent=115 // loop_body
          %s1529 = smul.u32 %s1518, 8
          %s1530 = scalar_lea.vmem [#allocation3], %s1529
          %v1531 = vld [vmem:[%s1530] sm:$0xff]
          %s1532 = scalar_lea.vmem [#allocation4], %s1529
          %v1533 = vld [vmem:[%s1532] sm:$0xff]
          %v1535 = vsel %vm1512, %v1339, 0
          %v1538 = vsel %vm1512, %v1344, 0
          %v1541 = vsel %vm1512, %v1531, 0
          %1543 = vmatprep.subr.mxu0 0.0
          %1544 = vmatpush1.xpose.msra.mxu0 %v1541
          %1545 = vmatprep.subr.mxu0 0.0
          %1546 = vmatpush1.xpose.msra.mxu0 0.0
          %1547 = vmatprep.subr.mxu0 0.0
          %1548 = vmatpush1.xpose.msra.mxu0 0.0
          %1549 = vmatprep.subr.mxu0 0.0
          %1550 = vmatpush1.xpose.msra.mxu0 0.0
          %1551 = vmatprep.subr.mxu0 0.0
          %1552 = vmatpush1.xpose.msra.mxu0 0.0
          %1553 = vmatprep.subr.mxu0 0.0
          %1554 = vmatpush1.xpose.msra.mxu0 0.0
          %1555 = vmatprep.subr.mxu0 0.0
          %1556 = vmatpush1.xpose.msra.mxu0 0.0
          %1557 = vmatprep.subr.mxu0 0.0
          %1558 = vmatpush1.xpose.msra.mxu0 0.0
          %1559 = vmatprep.subr.mxu0 0.0
          %1560 = vmatpush1.xpose.msra.mxu0 0.0
          %1561 = vmatprep.subr.mxu0 0.0
          %1562 = vmatpush1.xpose.msra.mxu0 0.0
          %1563 = vmatprep.subr.mxu0 0.0
          %1564 = vmatpush1.xpose.msra.mxu0 0.0
          %1565 = vmatprep.subr.mxu0 0.0
          %1566 = vmatpush1.xpose.msra.mxu0 0.0
          %1567 = vmatprep.subr.mxu0 0.0
          %1568 = vmatpush1.xpose.msra.mxu0 0.0
          %1569 = vmatprep.subr.mxu0 0.0
          %1570 = vmatpush1.xpose.msra.mxu0 0.0
          %1571 = vmatprep.subr.mxu0 0.0
          %1572 = vmatpush1.xpose.msra.mxu0 0.0
          %1573 = vmatprep.subr.mxu0 0.0
          %1574 = vmatpush1.xpose.msra.mxu0 0.0
          %1575 = vmatprep.subr.mxu0 0.0
          %1576 = vmatpush1.xpose.msra.mxu0 0.0
          %1577 = vmatprep.subr.mxu0 0.0
          %1578 = vmatpush1.xpose.msra.mxu0 0.0
          %1579 = vmatprep.subr.mxu0 0.0
          %1580 = vmatpush1.xpose.msra.mxu0 0.0
          %1581 = vmatprep.subr.mxu0 0.0
          %1582 = vmatpush1.xpose.msra.mxu0 0.0
          %1583 = vmatprep.subr.mxu0 0.0
          %1584 = vmatpush1.xpose.msra.mxu0 0.0
          %1585 = vmatprep.subr.mxu0 0.0
          %1586 = vmatpush1.xpose.msra.mxu0 0.0
          %1587 = vmatprep.subr.mxu0 0.0
          %1588 = vmatpush1.xpose.msra.mxu0 0.0
          %1589 = vmatprep.subr.mxu0 0.0
          %1590 = vmatpush1.xpose.msra.mxu0 0.0
          %1591 = vmatprep.subr.mxu0 0.0
          %1592 = vmatpush1.xpose.msra.mxu0 0.0
          %1593 = vmatprep.subr.mxu0 0.0
          %1594 = vmatpush1.xpose.msra.mxu0 0.0
          %1595 = vmatprep.subr.mxu0 0.0
          %1596 = vmatpush1.xpose.msra.mxu0 0.0
          %1597 = vmatprep.subr.mxu0 0.0
          %1598 = vmatpush1.xpose.msra.mxu0 0.0
          %1599 = vmatprep.subr.mxu0 0.0
          %1600 = vmatpush1.xpose.msra.mxu0 0.0
          %1601 = vmatprep.subr.mxu0 0.0
          %1602 = vmatpush1.xpose.msra.mxu0 0.0
          %1603 = vmatprep.subr.mxu0 0.0
          %1604 = vmatpush1.xpose.msra.mxu0 0.0
          %1605 = vmatprep.subr.mxu0 0.0
          %1606 = vmatpush1.xpose.msra.mxu0 0.0
          %1607 = vmatprep.mubr.f32.mxu0 0.0
          %1608 = vmatmul.mubr.f32.gmra.mrb[0].mxu0 %v1535
          %v1609 = vpop.f32.mrb[0].mxu0
          %v1610 = vadd.f32 0.0, %v1609
          %v1611 = vpop.f32.mrb[0].mxu0
          %1612 = vmatprep.mubr.f32.mxu0 0.0
          %1613 = vmatmul.mubr.f32.gmra.mrb[0].mxu0 %v1538
          %v1614 = vpop.f32.mrb[0].mxu0
          %v1615 = vadd.f32 0.0, %v1614
          %v1616 = vpop.f32.mrb[0].mxu0
          %1617 = vdwg.mxu0
          %v1618 = vsel %vm1512, %v1610, -inf
          %1619 = vmax.xlane.f32.xlu0 %v1618
          %v1620 = vpop.xlane.xlu0 %1619
          %v1621 = vsel %vm1512, %v1615, -inf
          %1622 = vmax.xlane.f32.xlu0 %v1621
          %v1623 = vpop.xlane.xlu0 %1622
          %v1624 = vmax.f32 %v1523, %v1620
          %v1625 = vmax.f32 %v1524, %v1623
          %v1626 = vsub.f32 %v1523, %v1624
          %v1627 = vsub.f32 %v1524, %v1625
          %v1628 = vmul.f32 %v1626, 1.442695
          %v1629 = vpow.pop %v1628
          %v1630 = vmul.f32 %v1627, 1.442695
          %v1631 = vpow.pop %v1630
          %v1632 = vsub.f32 %v1610, %v1624
          %v1633 = vsub.f32 %v1615, %v1625
          %v1634 = vmul.f32 %v1632, 1.442695
          %v1635 = vpow.pop %v1634
          %v1636 = vmul.f32 %v1633, 1.442695
          %v1637 = vpow.pop %v1636
          %v1638 = vmul.f32 %v1629, %v1525
          %v1639 = vmul.f32 %v1631, %v1526
          %v1640 = vsel %vm1512, %v1635, 0.0
          %1641 = vadd.xlane.f32.xlu0 %v1640
          %v1642 = vpop.xlane.xlu0 %1641
          %v1643 = vsel %vm1512, %v1637, 0.0
          %1644 = vadd.xlane.f32.xlu0 %v1643
          %v1645 = vpop.xlane.xlu0 %1644
          %v1646 = vadd.f32 %v1638, %v1642
          %v1647 = vadd.f32 %v1639, %v1645
          %v1648 = vmul.f32 %v1629, %v1527
          %v1649 = vmul.f32 %v1631, %v1528
          %v1651 = vsel %vm1512, %v1635, 0
          %v1654 = vsel %vm1512, %v1637, 0
          %1656 = vmatprep.subr.mxu0 0.0
          %1657 = vmatpush1.msra.mxu0 %v1533
          %1658 = vmatprep.subr.mxu0 0.0
          %1659 = vmatpush1.msra.mxu0 0.0
          %1660 = vmatprep.subr.mxu0 0.0
          %1661 = vmatpush1.msra.mxu0 0.0
          %1662 = vmatprep.subr.mxu0 0.0
          %1663 = vmatpush1.msra.mxu0 0.0
          %1664 = vmatprep.subr.mxu0 0.0
          %1665 = vmatpush1.msra.mxu0 0.0
          %1666 = vmatprep.subr.mxu0 0.0
          %1667 = vmatpush1.msra.mxu0 0.0
          %1668 = vmatprep.subr.mxu0 0.0
          %1669 = vmatpush1.msra.mxu0 0.0
          %1670 = vmatprep.subr.mxu0 0.0
          %1671 = vmatpush1.msra.mxu0 0.0
          %1672 = vmatprep.subr.mxu0 0.0
          %1673 = vmatpush1.msra.mxu0 0.0
          %1674 = vmatprep.subr.mxu0 0.0
          %1675 = vmatpush1.msra.mxu0 0.0
          %1676 = vmatprep.subr.mxu0 0.0
          %1677 = vmatpush1.msra.mxu0 0.0
          %1678 = vmatprep.subr.mxu0 0.0
          %1679 = vmatpush1.msra.mxu0 0.0
          %1680 = vmatprep.subr.mxu0 0.0
          %1681 = vmatpush1.msra.mxu0 0.0
          %1682 = vmatprep.subr.mxu0 0.0
          %1683 = vmatpush1.msra.mxu0 0.0
          %1684 = vmatprep.subr.mxu0 0.0
          %1685 = vmatpush1.msra.mxu0 0.0
          %1686 = vmatprep.subr.mxu0 0.0
          %1687 = vmatpush1.msra.mxu0 0.0
          %1688 = vmatprep.subr.mxu0 0.0
          %1689 = vmatpush1.msra.mxu0 0.0
          %1690 = vmatprep.subr.mxu0 0.0
          %1691 = vmatpush1.msra.mxu0 0.0
          %1692 = vmatprep.subr.mxu0 0.0
          %1693 = vmatpush1.msra.mxu0 0.0
          %1694 = vmatprep.subr.mxu0 0.0
          %1695 = vmatpush1.msra.mxu0 0.0
          %1696 = vmatprep.subr.mxu0 0.0
          %1697 = vmatpush1.msra.mxu0 0.0
          %1698 = vmatprep.subr.mxu0 0.0
          %1699 = vmatpush1.msra.mxu0 0.0
          %1700 = vmatprep.subr.mxu0 0.0
          %1701 = vmatpush1.msra.mxu0 0.0
          %1702 = vmatprep.subr.mxu0 0.0
          %1703 = vmatpush1.msra.mxu0 0.0
          %1704 = vmatprep.subr.mxu0 0.0
          %1705 = vmatpush1.msra.mxu0 0.0
          %1706 = vmatprep.subr.mxu0 0.0
          %1707 = vmatpush1.msra.mxu0 0.0
          %1708 = vmatprep.subr.mxu0 0.0
          %1709 = vmatpush1.msra.mxu0 0.0
          %1710 = vmatprep.subr.mxu0 0.0
          %1711 = vmatpush1.msra.mxu0 0.0
          %1712 = vmatprep.subr.mxu0 0.0
          %1713 = vmatpush1.msra.mxu0 0.0
          %1714 = vmatprep.subr.mxu0 0.0
          %1715 = vmatpush1.msra.mxu0 0.0
          %1716 = vmatprep.subr.mxu0 0.0
          %1717 = vmatpush1.msra.mxu0 0.0
          %1718 = vmatprep.subr.mxu0 0.0
          %1719 = vmatpush1.msra.mxu0 0.0
          %1720 = vmatprep.mubr.f32.mxu0 0.0
          %1721 = vmatmul.mubr.f32.gmra.mrb[0].mxu0 %v1651
          %v1722 = vpop.f32.mrb[0].mxu0
          %v1723 = vadd.f32 0.0, %v1722
          %v1724 = vpop.f32.mrb[0].mxu0
          %1725 = vmatprep.mubr.f32.mxu0 0.0
          %1726 = vmatmul.mubr.f32.gmra.mrb[0].mxu0 %v1654
          %v1727 = vpop.f32.mrb[0].mxu0
          %v1728 = vadd.f32 0.0, %v1727
          %v1729 = vpop.f32.mrb[0].mxu0
          %1730 = vdwg.mxu0
          %v1731 = vadd.f32 %v1648, %v1723
          %v1732 = vadd.f32 %v1649, %v1728
        $region141: #{tpu_custom_call.1} parent=115 // loop_footer
          %s1522 = sadd.s32 1, %s1518
        $region142: #{tpu_custom_call.1} parent=115 // loop_footer_branch
          %1517 = sbr.rel target = $region138
        $region143: #{tpu_custom_call.1} parent=115 // loop_exit
          _
        %v1733 = vrcp.pop %v1525
        %v1734 = vmul.f32 %v1527, %v1733
        %v1735 = vrcp.pop %v1526
        %v1736 = vmul.f32 %v1528, %v1735
        %1737 = vst.msk [vmem:[#allocation5] sm:$0xff] %vm1512, %v1734
        %1738 = vst.msk [vmem:[#allocation5 + $0x8] sm:$0xff] %vm1512, %v1736
        %1741 = vrot.lane.b32.xlu0 %v1418, 120
        %v1742 = vpop.permute.xlu0 %1741
        %1743 = vrot.lane.b32.xlu0 %v1423, 120
        %v1744 = vpop.permute.xlu0 %1743
        %1747 = vst.msk [vmem:[#allocation3] sm:$0xff] %vm1512, %v1742
        %1748 = vst.msk [vmem:[#allocation3 + $0x8] sm:$0xff] %vm1512, %v1744
        %1751 = vrot.lane.b32.xlu0 %v1504, 120
        %v1752 = vpop.permute.xlu0 %1751
        %1753 = vrot.lane.b32.xlu0 %v1509, 120
        %v1754 = vpop.permute.xlu0 %1753
        %1757 = vst.msk [vmem:[#allocation4] sm:$0xff] %vm1512, %v1752
        %1758 = vst.msk [vmem:[#allocation4 + $0x8] sm:$0xff] %vm1512, %v1754
        loop: start=0, step=1, limit=2
        $region144: #{tpu_custom_call.1} parent=115 // loop_pre_header
          _
        $region145: #{tpu_custom_call.1} parent=115 // loop_header
          %s1760 = sphi 0, %s1764
          %p1761 = scmp.ge.s32.totalorder %s1760, 2
          %v1765 = vphi -1e+30, %v1870
          %v1766 = vphi -1e+30, %v1871
          %v1767 = vphi 0.0, %v1892
          %v1768 = vphi 0.0, %v1893
          %v1769 = vphi 0.0, %v1977
          %v1770 = vphi 0.0, %v1978
        $region146: #{tpu_custom_call.1} parent=115 // loop_header_branch
          %1763 = sbr.rel (%p1761) target = $region150
        $region147: #{tpu_custom_call.1} parent=115 // loop_body
          %s1771 = smul.u32 %s1760, 8
          %s1772 = scalar_lea.vmem [#allocation3], %s1771
          %v1773 = vld [vmem:[%s1772] sm:$0xff]
          %s1774 = scalar_lea.vmem [#allocation4], %s1771
          %v1775 = vld [vmem:[%s1774] sm:$0xff]
          %1778 = vrot.lane.b32.xlu0 %v1339, 120
          %v1779 = vpop.permute.xlu0 %1778
          %1780 = vrot.lane.b32.xlu0 %v1344, 120
          %v1781 = vpop.permute.xlu0 %1780
          %v1782 = vsel %vm1512, %v1779, 0
          %v1784 = vsel %vm1512, %v1781, 0
          %v1787 = vsel %vm1512, %v1773, 0
          %1789 = vmatprep.subr.mxu0 0.0
          %1790 = vmatpush1.xpose.msra.mxu0 %v1787
          %1791 = vmatprep.subr.mxu0 0.0
          %1792 = vmatpush1.xpose.msra.mxu0 0.0
          %1793 = vmatprep.subr.mxu0 0.0
          %1794 = vmatpush1.xpose.msra.mxu0 0.0
          %1795 = vmatprep.subr.mxu0 0.0
          %1796 = vmatpush1.xpose.msra.mxu0 0.0
          %1797 = vmatprep.subr.mxu0 0.0
          %1798 = vmatpush1.xpose.msra.mxu0 0.0
          %1799 = vmatprep.subr.mxu0 0.0
          %1800 = vmatpush1.xpose.msra.mxu0 0.0
          %1801 = vmatprep.subr.mxu0 0.0
          %1802 = vmatpush1.xpose.msra.mxu0 0.0
          %1803 = vmatprep.subr.mxu0 0.0
          %1804 = vmatpush1.xpose.msra.mxu0 0.0
          %1805 = vmatprep.subr.mxu0 0.0
          %1806 = vmatpush1.xpose.msra.mxu0 0.0
          %1807 = vmatprep.subr.mxu0 0.0
          %1808 = vmatpush1.xpose.msra.mxu0 0.0
          %1809 = vmatprep.subr.mxu0 0.0
          %1810 = vmatpush1.xpose.msra.mxu0 0.0
          %1811 = vmatprep.subr.mxu0 0.0
          %1812 = vmatpush1.xpose.msra.mxu0 0.0
          %1813 = vmatprep.subr.mxu0 0.0
          %1814 = vmatpush1.xpose.msra.mxu0 0.0
          %1815 = vmatprep.subr.mxu0 0.0
          %1816 = vmatpush1.xpose.msra.mxu0 0.0
          %1817 = vmatprep.subr.mxu0 0.0
          %1818 = vmatpush1.xpose.msra.mxu0 0.0
          %1819 = vmatprep.subr.mxu0 0.0
          %1820 = vmatpush1.xpose.msra.mxu0 0.0
          %1821 = vmatprep.subr.mxu0 0.0
          %1822 = vmatpush1.xpose.msra.mxu0 0.0
          %1823 = vmatprep.subr.mxu0 0.0
          %1824 = vmatpush1.xpose.msra.mxu0 0.0
          %1825 = vmatprep.subr.mxu0 0.0
          %1826 = vmatpush1.xpose.msra.mxu0 0.0
          %1827 = vmatprep.subr.mxu0 0.0
          %1828 = vmatpush1.xpose.msra.mxu0 0.0
          %1829 = vmatprep.subr.mxu0 0.0
          %1830 = vmatpush1.xpose.msra.mxu0 0.0
          %1831 = vmatprep.subr.mxu0 0.0
          %1832 = vmatpush1.xpose.msra.mxu0 0.0
          %1833 = vmatprep.subr.mxu0 0.0
          %1834 = vmatpush1.xpose.msra.mxu0 0.0
          %1835 = vmatprep.subr.mxu0 0.0
          %1836 = vmatpush1.xpose.msra.mxu0 0.0
          %1837 = vmatprep.subr.mxu0 0.0
          %1838 = vmatpush1.xpose.msra.mxu0 0.0
          %1839 = vmatprep.subr.mxu0 0.0
          %1840 = vmatpush1.xpose.msra.mxu0 0.0
          %1841 = vmatprep.subr.mxu0 0.0
          %1842 = vmatpush1.xpose.msra.mxu0 0.0
          %1843 = vmatprep.subr.mxu0 0.0
          %1844 = vmatpush1.xpose.msra.mxu0 0.0
          %1845 = vmatprep.subr.mxu0 0.0
          %1846 = vmatpush1.xpose.msra.mxu0 0.0
          %1847 = vmatprep.subr.mxu0 0.0
          %1848 = vmatpush1.xpose.msra.mxu0 0.0
          %1849 = vmatprep.subr.mxu0 0.0
          %1850 = vmatpush1.xpose.msra.mxu0 0.0
          %1851 = vmatprep.subr.mxu0 0.0
          %1852 = vmatpush1.xpose.msra.mxu0 0.0
          %1853 = vmatprep.mubr.f32.mxu0 0.0
          %1854 = vmatmul.mubr.f32.gmra.mrb[0].mxu0 %v1782
          %v1855 = vpop.f32.mrb[0].mxu0
          %v1856 = vadd.f32 0.0, %v1855
          %v1857 = vpop.f32.mrb[0].mxu0
          %1858 = vmatprep.mubr.f32.mxu0 0.0
          %1859 = vmatmul.mubr.f32.gmra.mrb[0].mxu0 %v1784
          %v1860 = vpop.f32.mrb[0].mxu0
          %v1861 = vadd.f32 0.0, %v1860
          %v1862 = vpop.f32.mrb[0].mxu0
          %1863 = vdwg.mxu0
          %v1864 = vsel %vm1512, %v1856, -inf
          %1865 = vmax.xlane.f32.xlu0 %v1864
          %v1866 = vpop.xlane.xlu0 %1865
          %v1867 = vsel %vm1512, %v1861, -inf
          %1868 = vmax.xlane.f32.xlu0 %v1867
          %v1869 = vpop.xlane.xlu0 %1868
          %v1870 = vmax.f32 %v1765, %v1866
          %v1871 = vmax.f32 %v1766, %v1869
          %v1872 = vsub.f32 %v1765, %v1870
          %v1873 = vsub.f32 %v1766, %v1871
          %v1874 = vmul.f32 %v1872, 1.442695
          %v1875 = vpow.pop %v1874
          %v1876 = vmul.f32 %v1873, 1.442695
          %v1877 = vpow.pop %v1876
          %v1878 = vsub.f32 %v1856, %v1870
          %v1879 = vsub.f32 %v1861, %v1871
          %v1880 = vmul.f32 %v1878, 1.442695
          %v1881 = vpow.pop %v1880
          %v1882 = vmul.f32 %v1879, 1.442695
          %v1883 = vpow.pop %v1882
          %v1884 = vmul.f32 %v1875, %v1767
          %v1885 = vmul.f32 %v1877, %v1768
          %v1886 = vsel %vm1512, %v1881, 0.0
          %1887 = vadd.xlane.f32.xlu0 %v1886
          %v1888 = vpop.xlane.xlu0 %1887
          %v1889 = vsel %vm1512, %v1883, 0.0
          %1890 = vadd.xlane.f32.xlu0 %v1889
          %v1891 = vpop.xlane.xlu0 %1890
          %v1892 = vadd.f32 %v1884, %v1888
          %v1893 = vadd.f32 %v1885, %v1891
          %v1894 = vmul.f32 %v1875, %v1769
          %v1895 = vmul.f32 %v1877, %v1770
          %v1897 = vsel %vm1512, %v1881, 0
          %v1900 = vsel %vm1512, %v1883, 0
          %1902 = vmatprep.subr.mxu0 0.0
          %1903 = vmatpush1.msra.mxu0 %v1775
          %1904 = vmatprep.subr.mxu0 0.0
          %1905 = vmatpush1.msra.mxu0 0.0
          %1906 = vmatprep.subr.mxu0 0.0
          %1907 = vmatpush1.msra.mxu0 0.0
          %1908 = vmatprep.subr.mxu0 0.0
          %1909 = vmatpush1.msra.mxu0 0.0
          %1910 = vmatprep.subr.mxu0 0.0
          %1911 = vmatpush1.msra.mxu0 0.0
          %1912 = vmatprep.subr.mxu0 0.0
          %1913 = vmatpush1.msra.mxu0 0.0
          %1914 = vmatprep.subr.mxu0 0.0
          %1915 = vmatpush1.msra.mxu0 0.0
          %1916 = vmatprep.subr.mxu0 0.0
          %1917 = vmatpush1.msra.mxu0 0.0
          %1918 = vmatprep.subr.mxu0 0.0
          %1919 = vmatpush1.msra.mxu0 0.0
          %1920 = vmatprep.subr.mxu0 0.0
          %1921 = vmatpush1.msra.mxu0 0.0
          %1922 = vmatprep.subr.mxu0 0.0
          %1923 = vmatpush1.msra.mxu0 0.0
          %1924 = vmatprep.subr.mxu0 0.0
          %1925 = vmatpush1.msra.mxu0 0.0
          %1926 = vmatprep.subr.mxu0 0.0
          %1927 = vmatpush1.msra.mxu0 0.0
          %1928 = vmatprep.subr.mxu0 0.0
          %1929 = vmatpush1.msra.mxu0 0.0
          %1930 = vmatprep.subr.mxu0 0.0
          %1931 = vmatpush1.msra.mxu0 0.0
          %1932 = vmatprep.subr.mxu0 0.0
          %1933 = vmatpush1.msra.mxu0 0.0
          %1934 = vmatprep.subr.mxu0 0.0
          %1935 = vmatpush1.msra.mxu0 0.0
          %1936 = vmatprep.subr.mxu0 0.0
          %1937 = vmatpush1.msra.mxu0 0.0
          %1938 = vmatprep.subr.mxu0 0.0
          %1939 = vmatpush1.msra.mxu0 0.0
          %1940 = vmatprep.subr.mxu0 0.0
          %1941 = vmatpush1.msra.mxu0 0.0
          %1942 = vmatprep.subr.mxu0 0.0
          %1943 = vmatpush1.msra.mxu0 0.0
          %1944 = vmatprep.subr.mxu0 0.0
          %1945 = vmatpush1.msra.mxu0 0.0
          %1946 = vmatprep.subr.mxu0 0.0
          %1947 = vmatpush1.msra.mxu0 0.0
          %1948 = vmatprep.subr.mxu0 0.0
          %1949 = vmatpush1.msra.mxu0 0.0
          %1950 = vmatprep.subr.mxu0 0.0
          %1951 = vmatpush1.msra.mxu0 0.0
          %1952 = vmatprep.subr.mxu0 0.0
          %1953 = vmatpush1.msra.mxu0 0.0
          %1954 = vmatprep.subr.mxu0 0.0
          %1955 = vmatpush1.msra.mxu0 0.0
          %1956 = vmatprep.subr.mxu0 0.0
          %1957 = vmatpush1.msra.mxu0 0.0
          %1958 = vmatprep.subr.mxu0 0.0
          %1959 = vmatpush1.msra.mxu0 0.0
          %1960 = vmatprep.subr.mxu0 0.0
          %1961 = vmatpush1.msra.mxu0 0.0
          %1962 = vmatprep.subr.mxu0 0.0
          %1963 = vmatpush1.msra.mxu0 0.0
          %1964 = vmatprep.subr.mxu0 0.0
          %1965 = vmatpush1.msra.mxu0 0.0
          %1966 = vmatprep.mubr.f32.mxu0 0.0
          %1967 = vmatmul.mubr.f32.gmra.mrb[0].mxu0 %v1897
          %v1968 = vpop.f32.mrb[0].mxu0
          %v1969 = vadd.f32 0.0, %v1968
          %v1970 = vpop.f32.mrb[0].mxu0
          %1971 = vmatprep.mubr.f32.mxu0 0.0
          %1972 = vmatmul.mubr.f32.gmra.mrb[0].mxu0 %v1900
          %v1973 = vpop.f32.mrb[0].mxu0
          %v1974 = vadd.f32 0.0, %v1973
          %v1975 = vpop.f32.mrb[0].mxu0
          %1976 = vdwg.mxu0
          %v1977 = vadd.f32 %v1894, %v1969
          %v1978 = vadd.f32 %v1895, %v1974
        $region148: #{tpu_custom_call.1} parent=115 // loop_footer
          %s1764 = sadd.s32 1, %s1760
        $region149: #{tpu_custom_call.1} parent=115 // loop_footer_branch
          %1759 = sbr.rel target = $region145
        $region150: #{tpu_custom_call.1} parent=115 // loop_exit
          _
        %v1979 = vrcp.pop %v1767
        %v1980 = vmul.f32 %v1769, %v1979
        %v1981 = vrcp.pop %v1768
        %v1982 = vmul.f32 %v1770, %v1981
        %1985 = vrot.lane.b32.xlu0 %v1980, 8
        %v1986 = vpop.permute.xlu0 %1985
        %1987 = vrot.lane.b32.xlu0 %v1982, 8
        %v1988 = vpop.permute.xlu0 %1987
        %vm1991 = vcmask 130112
        %1992 = vst.msk [vmem:[#allocation5] sm:$0xff] %vm1991, %v1986
        %1993 = vst.msk [vmem:[#allocation5 + $0x8] sm:$0xff] %vm1991, %v1988
        %1994 = vrot.lane.b32.xlu0 %v1418, 112
        %v1995 = vpop.permute.xlu0 %1994
        %1996 = vrot.lane.b32.xlu0 %v1423, 112
        %v1997 = vpop.permute.xlu0 %1996
        %2000 = vst.msk [vmem:[#allocation3] sm:$0xff] %vm1512, %v1995
        %2001 = vst.msk [vmem:[#allocation3 + $0x8] sm:$0xff] %vm1512, %v1997
        %2002 = vrot.lane.b32.xlu0 %v1504, 112
        %v2003 = vpop.permute.xlu0 %2002
        %2004 = vrot.lane.b32.xlu0 %v1509, 112
        %v2005 = vpop.permute.xlu0 %2004
        %2008 = vst.msk [vmem:[#allocation4] sm:$0xff] %vm1512, %v2003
        %2009 = vst.msk [vmem:[#allocation4 + $0x8] sm:$0xff] %vm1512, %v2005
        loop: start=0, step=1, limit=2
        $region151: #{tpu_custom_call.1} parent=115 // loop_pre_header
          _
        $region152: #{tpu_custom_call.1} parent=115 // loop_header
          %s2011 = sphi 0, %s2015
          %p2012 = scmp.ge.s32.totalorder %s2011, 2
          %v2016 = vphi -1e+30, %v2121
          %v2017 = vphi -1e+30, %v2122
          %v2018 = vphi 0.0, %v2143
          %v2019 = vphi 0.0, %v2144
          %v2020 = vphi 0.0, %v2228
          %v2021 = vphi 0.0, %v2229
        $region153: #{tpu_custom_call.1} parent=115 // loop_header_branch
          %2014 = sbr.rel (%p2012) target = $region157
        $region154: #{tpu_custom_call.1} parent=115 // loop_body
          %s2022 = smul.u32 %s2011, 8
          %s2023 = scalar_lea.vmem [#allocation3], %s2022
          %v2024 = vld [vmem:[%s2023] sm:$0xff]
          %s2025 = scalar_lea.vmem [#allocation4], %s2022
          %v2026 = vld [vmem:[%s2025] sm:$0xff]
          %2029 = vrot.lane.b32.xlu0 %v1339, 112
          %v2030 = vpop.permute.xlu0 %2029
          %2031 = vrot.lane.b32.xlu0 %v1344, 112
          %v2032 = vpop.permute.xlu0 %2031
          %v2033 = vsel %vm1512, %v2030, 0
          %v2035 = vsel %vm1512, %v2032, 0
          %v2038 = vsel %vm1512, %v2024, 0
          %2040 = vmatprep.subr.mxu0 0.0
          %2041 = vmatpush1.xpose.msra.mxu0 %v2038
          %2042 = vmatprep.subr.mxu0 0.0
          %2043 = vmatpush1.xpose.msra.mxu0 0.0
          %2044 = vmatprep.subr.mxu0 0.0
          %2045 = vmatpush1.xpose.msra.mxu0 0.0
          %2046 = vmatprep.subr.mxu0 0.0
          %2047 = vmatpush1.xpose.msra.mxu0 0.0
          %2048 = vmatprep.subr.mxu0 0.0
          %2049 = vmatpush1.xpose.msra.mxu0 0.0
          %2050 = vmatprep.subr.mxu0 0.0
          %2051 = vmatpush1.xpose.msra.mxu0 0.0
          %2052 = vmatprep.subr.mxu0 0.0
          %2053 = vmatpush1.xpose.msra.mxu0 0.0
          %2054 = vmatprep.subr.mxu0 0.0
          %2055 = vmatpush1.xpose.msra.mxu0 0.0
          %2056 = vmatprep.subr.mxu0 0.0
          %2057 = vmatpush1.xpose.msra.mxu0 0.0
          %2058 = vmatprep.subr.mxu0 0.0
          %2059 = vmatpush1.xpose.msra.mxu0 0.0
          %2060 = vmatprep.subr.mxu0 0.0
          %2061 = vmatpush1.xpose.msra.mxu0 0.0
          %2062 = vmatprep.subr.mxu0 0.0
          %2063 = vmatpush1.xpose.msra.mxu0 0.0
          %2064 = vmatprep.subr.mxu0 0.0
          %2065 = vmatpush1.xpose.msra.mxu0 0.0
          %2066 = vmatprep.subr.mxu0 0.0
          %2067 = vmatpush1.xpose.msra.mxu0 0.0
          %2068 = vmatprep.subr.mxu0 0.0
          %2069 = vmatpush1.xpose.msra.mxu0 0.0
          %2070 = vmatprep.subr.mxu0 0.0
          %2071 = vmatpush1.xpose.msra.mxu0 0.0
          %2072 = vmatprep.subr.mxu0 0.0
          %2073 = vmatpush1.xpose.msra.mxu0 0.0
          %2074 = vmatprep.subr.mxu0 0.0
          %2075 = vmatpush1.xpose.msra.mxu0 0.0
          %2076 = vmatprep.subr.mxu0 0.0
          %2077 = vmatpush1.xpose.msra.mxu0 0.0
          %2078 = vmatprep.subr.mxu0 0.0
          %2079 = vmatpush1.xpose.msra.mxu0 0.0
          %2080 = vmatprep.subr.mxu0 0.0
          %2081 = vmatpush1.xpose.msra.mxu0 0.0
          %2082 = vmatprep.subr.mxu0 0.0
          %2083 = vmatpush1.xpose.msra.mxu0 0.0
          %2084 = vmatprep.subr.mxu0 0.0
          %2085 = vmatpush1.xpose.msra.mxu0 0.0
          %2086 = vmatprep.subr.mxu0 0.0
          %2087 = vmatpush1.xpose.msra.mxu0 0.0
          %2088 = vmatprep.subr.mxu0 0.0
          %2089 = vmatpush1.xpose.msra.mxu0 0.0
          %2090 = vmatprep.subr.mxu0 0.0
          %2091 = vmatpush1.xpose.msra.mxu0 0.0
          %2092 = vmatprep.subr.mxu0 0.0
          %2093 = vmatpush1.xpose.msra.mxu0 0.0
          %2094 = vmatprep.subr.mxu0 0.0
          %2095 = vmatpush1.xpose.msra.mxu0 0.0
          %2096 = vmatprep.subr.mxu0 0.0
          %2097 = vmatpush1.xpose.msra.mxu0 0.0
          %2098 = vmatprep.subr.mxu0 0.0
          %2099 = vmatpush1.xpose.msra.mxu0 0.0
          %2100 = vmatprep.subr.mxu0 0.0
          %2101 = vmatpush1.xpose.msra.mxu0 0.0
          %2102 = vmatprep.subr.mxu0 0.0
          %2103 = vmatpush1.xpose.msra.mxu0 0.0
          %2104 = vmatprep.mubr.f32.mxu0 0.0
          %2105 = vmatmul.mubr.f32.gmra.mrb[0].mxu0 %v2033
          %v2106 = vpop.f32.mrb[0].mxu0
          %v2107 = vadd.f32 0.0, %v2106
          %v2108 = vpop.f32.mrb[0].mxu0
          %2109 = vmatprep.mubr.f32.mxu0 0.0
          %2110 = vmatmul.mubr.f32.gmra.mrb[0].mxu0 %v2035
          %v2111 = vpop.f32.mrb[0].mxu0
          %v2112 = vadd.f32 0.0, %v2111
          %v2113 = vpop.f32.mrb[0].mxu0
          %2114 = vdwg.mxu0
          %v2115 = vsel %vm1512, %v2107, -inf
          %2116 = vmax.xlane.f32.xlu0 %v2115
          %v2117 = vpop.xlane.xlu0 %2116
          %v2118 = vsel %vm1512, %v2112, -inf
          %2119 = vmax.xlane.f32.xlu0 %v2118
          %v2120 = vpop.xlane.xlu0 %2119
          %v2121 = vmax.f32 %v2016, %v2117
          %v2122 = vmax.f32 %v2017, %v2120
          %v2123 = vsub.f32 %v2016, %v2121
          %v2124 = vsub.f32 %v2017, %v2122
          %v2125 = vmul.f32 %v2123, 1.442695
          %v2126 = vpow.pop %v2125
          %v2127 = vmul.f32 %v2124, 1.442695
          %v2128 = vpow.pop %v2127
          %v2129 = vsub.f32 %v2107, %v2121
          %v2130 = vsub.f32 %v2112, %v2122
          %v2131 = vmul.f32 %v2129, 1.442695
          %v2132 = vpow.pop %v2131
          %v2133 = vmul.f32 %v2130, 1.442695
          %v2134 = vpow.pop %v2133
          %v2135 = vmul.f32 %v2126, %v2018
          %v2136 = vmul.f32 %v2128, %v2019
          %v2137 = vsel %vm1512, %v2132, 0.0
          %2138 = vadd.xlane.f32.xlu0 %v2137
          %v2139 = vpop.xlane.xlu0 %2138
          %v2140 = vsel %vm1512, %v2134, 0.0
          %2141 = vadd.xlane.f32.xlu0 %v2140
          %v2142 = vpop.xlane.xlu0 %2141
          %v2143 = vadd.f32 %v2135, %v2139
          %v2144 = vadd.f32 %v2136, %v2142
          %v2145 = vmul.f32 %v2126, %v2020
          %v2146 = vmul.f32 %v2128, %v2021
          %v2148 = vsel %vm1512, %v2132, 0
          %v2151 = vsel %vm1512, %v2134, 0
          %2153 = vmatprep.subr.mxu0 0.0
          %2154 = vmatpush1.msra.mxu0 %v2026
          %2155 = vmatprep.subr.mxu0 0.0
          %2156 = vmatpush1.msra.mxu0 0.0
          %2157 = vmatprep.subr.mxu0 0.0
          %2158 = vmatpush1.msra.mxu0 0.0
          %2159 = vmatprep.subr.mxu0 0.0
          %2160 = vmatpush1.msra.mxu0 0.0
          %2161 = vmatprep.subr.mxu0 0.0
          %2162 = vmatpush1.msra.mxu0 0.0
          %2163 = vmatprep.subr.mxu0 0.0
          %2164 = vmatpush1.msra.mxu0 0.0
          %2165 = vmatprep.subr.mxu0 0.0
          %2166 = vmatpush1.msra.mxu0 0.0
          %2167 = vmatprep.subr.mxu0 0.0
          %2168 = vmatpush1.msra.mxu0 0.0
          %2169 = vmatprep.subr.mxu0 0.0
          %2170 = vmatpush1.msra.mxu0 0.0
          %2171 = vmatprep.subr.mxu0 0.0
          %2172 = vmatpush1.msra.mxu0 0.0
          %2173 = vmatprep.subr.mxu0 0.0
          %2174 = vmatpush1.msra.mxu0 0.0
          %2175 = vmatprep.subr.mxu0 0.0
          %2176 = vmatpush1.msra.mxu0 0.0
          %2177 = vmatprep.subr.mxu0 0.0
          %2178 = vmatpush1.msra.mxu0 0.0
          %2179 = vmatprep.subr.mxu0 0.0
          %2180 = vmatpush1.msra.mxu0 0.0
          %2181 = vmatprep.subr.mxu0 0.0
          %2182 = vmatpush1.msra.mxu0 0.0
          %2183 = vmatprep.subr.mxu0 0.0
          %2184 = vmatpush1.msra.mxu0 0.0
          %2185 = vmatprep.subr.mxu0 0.0
          %2186 = vmatpush1.msra.mxu0 0.0
          %2187 = vmatprep.subr.mxu0 0.0
          %2188 = vmatpush1.msra.mxu0 0.0
          %2189 = vmatprep.subr.mxu0 0.0
          %2190 = vmatpush1.msra.mxu0 0.0
          %2191 = vmatprep.subr.mxu0 0.0
          %2192 = vmatpush1.msra.mxu0 0.0
          %2193 = vmatprep.subr.mxu0 0.0
          %2194 = vmatpush1.msra.mxu0 0.0
          %2195 = vmatprep.subr.mxu0 0.0
          %2196 = vmatpush1.msra.mxu0 0.0
          %2197 = vmatprep.subr.mxu0 0.0
          %2198 = vmatpush1.msra.mxu0 0.0
          %2199 = vmatprep.subr.mxu0 0.0
          %2200 = vmatpush1.msra.mxu0 0.0
          %2201 = vmatprep.subr.mxu0 0.0
          %2202 = vmatpush1.msra.mxu0 0.0
          %2203 = vmatprep.subr.mxu0 0.0
          %2204 = vmatpush1.msra.mxu0 0.0
          %2205 = vmatprep.subr.mxu0 0.0
          %2206 = vmatpush1.msra.mxu0 0.0
          %2207 = vmatprep.subr.mxu0 0.0
          %2208 = vmatpush1.msra.mxu0 0.0
          %2209 = vmatprep.subr.mxu0 0.0
          %2210 = vmatpush1.msra.mxu0 0.0
          %2211 = vmatprep.subr.mxu0 0.0
          %2212 = vmatpush1.msra.mxu0 0.0
          %2213 = vmatprep.subr.mxu0 0.0
          %2214 = vmatpush1.msra.mxu0 0.0
          %2215 = vmatprep.subr.mxu0 0.0
          %2216 = vmatpush1.msra.mxu0 0.0
          %2217 = vmatprep.mubr.f32.mxu0 0.0
          %2218 = vmatmul.mubr.f32.gmra.mrb[0].mxu0 %v2148
          %v2219 = vpop.f32.mrb[0].mxu0
          %v2220 = vadd.f32 0.0, %v2219
          %v2221 = vpop.f32.mrb[0].mxu0
          %2222 = vmatprep.mubr.f32.mxu0 0.0
          %2223 = vmatmul.mubr.f32.gmra.mrb[0].mxu0 %v2151
          %v2224 = vpop.f32.mrb[0].mxu0
          %v2225 = vadd.f32 0.0, %v2224
          %v2226 = vpop.f32.mrb[0].mxu0
          %2227 = vdwg.mxu0
          %v2228 = vadd.f32 %v2145, %v2220
          %v2229 = vadd.f32 %v2146, %v2225
        $region155: #{tpu_custom_call.1} parent=115 // loop_footer
          %s2015 = sadd.s32 1, %s2011
        $region156: #{tpu_custom_call.1} parent=115 // loop_footer_branch
          %2010 = sbr.rel target = $region152
        $region157: #{tpu_custom_call.1} parent=115 // loop_exit
          _
        %v2230 = vrcp.pop %v2018
        %v2231 = vmul.f32 %v2020, %v2230
        %v2232 = vrcp.pop %v2019
        %v2233 = vmul.f32 %v2021, %v2232
        %2236 = vrot.lane.b32.xlu0 %v2231, 16
        %v2237 = vpop.permute.xlu0 %2236
        %2238 = vrot.lane.b32.xlu0 %v2233, 16
        %v2239 = vpop.permute.xlu0 %2238
        %vm2242 = vcmask 195712
        %2243 = vst.msk [vmem:[#allocation5] sm:$0xff] %vm2242, %v2237
        %2244 = vst.msk [vmem:[#allocation5 + $0x8] sm:$0xff] %vm2242, %v2239
        %2245 = vrot.lane.b32.xlu0 %v1418, 104
        %v2246 = vpop.permute.xlu0 %2245
        %2247 = vrot.lane.b32.xlu0 %v1423, 104
        %v2248 = vpop.permute.xlu0 %2247
        %2251 = vst.msk [vmem:[#allocation3] sm:$0xff] %vm1512, %v2246
        %2252 = vst.msk [vmem:[#allocation3 + $0x8] sm:$0xff] %vm1512, %v2248
        %2253 = vrot.lane.b32.xlu0 %v1504, 104
        %v2254 = vpop.permute.xlu0 %2253
        %2255 = vrot.lane.b32.xlu0 %v1509, 104
        %v2256 = vpop.permute.xlu0 %2255
        %2259 = vst.msk [vmem:[#allocation4] sm:$0xff] %vm1512, %v2254
        %2260 = vst.msk [vmem:[#allocation4 + $0x8] sm:$0xff] %vm1512, %v2256
        loop: start=0, step=1, limit=2
        $region158: #{tpu_custom_call.1} parent=115 // loop_pre_header
          _
        $region159: #{tpu_custom_call.1} parent=115 // loop_header
          %s2262 = sphi 0, %s2266
          %p2263 = scmp.ge.s32.totalorder %s2262, 2
          %v2267 = vphi -1e+30, %v2372
          %v2268 = vphi -1e+30, %v2373
          %v2269 = vphi 0.0, %v2394
          %v2270 = vphi 0.0, %v2395
          %v2271 = vphi 0.0, %v2479
          %v2272 = vphi 0.0, %v2480
        $region160: #{tpu_custom_call.1} parent=115 // loop_header_branch
          %2265 = sbr.rel (%p2263) target = $region164
        $region161: #{tpu_custom_call.1} parent=115 // loop_body
          %s2273 = smul.u32 %s2262, 8
          %s2274 = scalar_lea.vmem [#allocation3], %s2273
          %v2275 = vld [vmem:[%s2274] sm:$0xff]
          %s2276 = scalar_lea.vmem [#allocation4], %s2273
          %v2277 = vld [vmem:[%s2276] sm:$0xff]
          %2280 = vrot.lane.b32.xlu0 %v1339, 104
          %v2281 = vpop.permute.xlu0 %2280
          %2282 = vrot.lane.b32.xlu0 %v1344, 104
          %v2283 = vpop.permute.xlu0 %2282
          %v2284 = vsel %vm1512, %v2281, 0
          %v2286 = vsel %vm1512, %v2283, 0
          %v2289 = vsel %vm1512, %v2275, 0
          %2291 = vmatprep.subr.mxu0 0.0
          %2292 = vmatpush1.xpose.msra.mxu0 %v2289
          %2293 = vmatprep.subr.mxu0 0.0
          %2294 = vmatpush1.xpose.msra.mxu0 0.0
          %2295 = vmatprep.subr.mxu0 0.0
          %2296 = vmatpush1.xpose.msra.mxu0 0.0
          %2297 = vmatprep.subr.mxu0 0.0
          %2298 = vmatpush1.xpose.msra.mxu0 0.0
          %2299 = vmatprep.subr.mxu0 0.0
          %2300 = vmatpush1.xpose.msra.mxu0 0.0
          %2301 = vmatprep.subr.mxu0 0.0
          %2302 = vmatpush1.xpose.msra.mxu0 0.0
          %2303 = vmatprep.subr.mxu0 0.0
          %2304 = vmatpush1.xpose.msra.mxu0 0.0
          %2305 = vmatprep.subr.mxu0 0.0
          %2306 = vmatpush1.xpose.msra.mxu0 0.0
          %2307 = vmatprep.subr.mxu0 0.0
          %2308 = vmatpush1.xpose.msra.mxu0 0.0
          %2309 = vmatprep.subr.mxu0 0.0
          %2310 = vmatpush1.xpose.msra.mxu0 0.0
          %2311 = vmatprep.subr.mxu0 0.0
          %2312 = vmatpush1.xpose.msra.mxu0 0.0
          %2313 = vmatprep.subr.mxu0 0.0
          %2314 = vmatpush1.xpose.msra.mxu0 0.0
          %2315 = vmatprep.subr.mxu0 0.0
          %2316 = vmatpush1.xpose.msra.mxu0 0.0
          %2317 = vmatprep.subr.mxu0 0.0
          %2318 = vmatpush1.xpose.msra.mxu0 0.0
          %2319 = vmatprep.subr.mxu0 0.0
          %2320 = vmatpush1.xpose.msra.mxu0 0.0
          %2321 = vmatprep.subr.mxu0 0.0
          %2322 = vmatpush1.xpose.msra.mxu0 0.0
          %2323 = vmatprep.subr.mxu0 0.0
          %2324 = vmatpush1.xpose.msra.mxu0 0.0
          %2325 = vmatprep.subr.mxu0 0.0
          %2326 = vmatpush1.xpose.msra.mxu0 0.0
          %2327 = vmatprep.subr.mxu0 0.0
          %2328 = vmatpush1.xpose.msra.mxu0 0.0
          %2329 = vmatprep.subr.mxu0 0.0
          %2330 = vmatpush1.xpose.msra.mxu0 0.0
          %2331 = vmatprep.subr.mxu0 0.0
          %2332 = vmatpush1.xpose.msra.mxu0 0.0
          %2333 = vmatprep.subr.mxu0 0.0
          %2334 = vmatpush1.xpose.msra.mxu0 0.0
          %2335 = vmatprep.subr.mxu0 0.0
          %2336 = vmatpush1.xpose.msra.mxu0 0.0
          %2337 = vmatprep.subr.mxu0 0.0
          %2338 = vmatpush1.xpose.msra.mxu0 0.0
          %2339 = vmatprep.subr.mxu0 0.0
          %2340 = vmatpush1.xpose.msra.mxu0 0.0
          %2341 = vmatprep.subr.mxu0 0.0
          %2342 = vmatpush1.xpose.msra.mxu0 0.0
          %2343 = vmatprep.subr.mxu0 0.0
          %2344 = vmatpush1.xpose.msra.mxu0 0.0
          %2345 = vmatprep.subr.mxu0 0.0
          %2346 = vmatpush1.xpose.msra.mxu0 0.0
          %2347 = vmatprep.subr.mxu0 0.0
          %2348 = vmatpush1.xpose.msra.mxu0 0.0
          %2349 = vmatprep.subr.mxu0 0.0
          %2350 = vmatpush1.xpose.msra.mxu0 0.0
          %2351 = vmatprep.subr.mxu0 0.0
          %2352 = vmatpush1.xpose.msra.mxu0 0.0
          %2353 = vmatprep.subr.mxu0 0.0
          %2354 = vmatpush1.xpose.msra.mxu0 0.0
          %2355 = vmatprep.mubr.f32.mxu0 0.0
          %2356 = vmatmul.mubr.f32.gmra.mrb[0].mxu0 %v2284
          %v2357 = vpop.f32.mrb[0].mxu0
          %v2358 = vadd.f32 0.0, %v2357
          %v2359 = vpop.f32.mrb[0].mxu0
          %2360 = vmatprep.mubr.f32.mxu0 0.0
          %2361 = vmatmul.mubr.f32.gmra.mrb[0].mxu0 %v2286
          %v2362 = vpop.f32.mrb[0].mxu0
          %v2363 = vadd.f32 0.0, %v2362
          %v2364 = vpop.f32.mrb[0].mxu0
          %2365 = vdwg.mxu0
          %v2366 = vsel %vm1512, %v2358, -inf
          %2367 = vmax.xlane.f32.xlu0 %v2366
          %v2368 = vpop.xlane.xlu0 %2367
          %v2369 = vsel %vm1512, %v2363, -inf
          %2370 = vmax.xlane.f32.xlu0 %v2369
          %v2371 = vpop.xlane.xlu0 %2370
          %v2372 = vmax.f32 %v2267, %v2368
          %v2373 = vmax.f32 %v2268, %v2371
          %v2374 = vsub.f32 %v2267, %v2372
          %v2375 = vsub.f32 %v2268, %v2373
          %v2376 = vmul.f32 %v2374, 1.442695
          %v2377 = vpow.pop %v2376
          %v2378 = vmul.f32 %v2375, 1.442695
          %v2379 = vpow.pop %v2378
          %v2380 = vsub.f32 %v2358, %v2372
          %v2381 = vsub.f32 %v2363, %v2373
          %v2382 = vmul.f32 %v2380, 1.442695
          %v2383 = vpow.pop %v2382
          %v2384 = vmul.f32 %v2381, 1.442695
          %v2385 = vpow.pop %v2384
          %v2386 = vmul.f32 %v2377, %v2269
          %v2387 = vmul.f32 %v2379, %v2270
          %v2388 = vsel %vm1512, %v2383, 0.0
          %2389 = vadd.xlane.f32.xlu0 %v2388
          %v2390 = vpop.xlane.xlu0 %2389
          %v2391 = vsel %vm1512, %v2385, 0.0
          %2392 = vadd.xlane.f32.xlu0 %v2391
          %v2393 = vpop.xlane.xlu0 %2392
          %v2394 = vadd.f32 %v2386, %v2390
          %v2395 = vadd.f32 %v2387, %v2393
          %v2396 = vmul.f32 %v2377, %v2271
          %v2397 = vmul.f32 %v2379, %v2272
          %v2399 = vsel %vm1512, %v2383, 0
          %v2402 = vsel %vm1512, %v2385, 0
          %2404 = vmatprep.subr.mxu0 0.0
          %2405 = vmatpush1.msra.mxu0 %v2277
          %2406 = vmatprep.subr.mxu0 0.0
          %2407 = vmatpush1.msra.mxu0 0.0
          %2408 = vmatprep.subr.mxu0 0.0
          %2409 = vmatpush1.msra.mxu0 0.0
          %2410 = vmatprep.subr.mxu0 0.0
          %2411 = vmatpush1.msra.mxu0 0.0
          %2412 = vmatprep.subr.mxu0 0.0
          %2413 = vmatpush1.msra.mxu0 0.0
          %2414 = vmatprep.subr.mxu0 0.0
          %2415 = vmatpush1.msra.mxu0 0.0
          %2416 = vmatprep.subr.mxu0 0.0
          %2417 = vmatpush1.msra.mxu0 0.0
          %2418 = vmatprep.subr.mxu0 0.0
          %2419 = vmatpush1.msra.mxu0 0.0
          %2420 = vmatprep.subr.mxu0 0.0
          %2421 = vmatpush1.msra.mxu0 0.0
          %2422 = vmatprep.subr.mxu0 0.0
          %2423 = vmatpush1.msra.mxu0 0.0
          %2424 = vmatprep.subr.mxu0 0.0
          %2425 = vmatpush1.msra.mxu0 0.0
          %2426 = vmatprep.subr.mxu0 0.0
          %2427 = vmatpush1.msra.mxu0 0.0
          %2428 = vmatprep.subr.mxu0 0.0
          %2429 = vmatpush1.msra.mxu0 0.0
          %2430 = vmatprep.subr.mxu0 0.0
          %2431 = vmatpush1.msra.mxu0 0.0
          %2432 = vmatprep.subr.mxu0 0.0
          %2433 = vmatpush1.msra.mxu0 0.0
          %2434 = vmatprep.subr.mxu0 0.0
          %2435 = vmatpush1.msra.mxu0 0.0
          %2436 = vmatprep.subr.mxu0 0.0
          %2437 = vmatpush1.msra.mxu0 0.0
          %2438 = vmatprep.subr.mxu0 0.0
          %2439 = vmatpush1.msra.mxu0 0.0
          %2440 = vmatprep.subr.mxu0 0.0
          %2441 = vmatpush1.msra.mxu0 0.0
          %2442 = vmatprep.subr.mxu0 0.0
          %2443 = vmatpush1.msra.mxu0 0.0
          %2444 = vmatprep.subr.mxu0 0.0
          %2445 = vmatpush1.msra.mxu0 0.0
          %2446 = vmatprep.subr.mxu0 0.0
          %2447 = vmatpush1.msra.mxu0 0.0
          %2448 = vmatprep.subr.mxu0 0.0
          %2449 = vmatpush1.msra.mxu0 0.0
          %2450 = vmatprep.subr.mxu0 0.0
          %2451 = vmatpush1.msra.mxu0 0.0
          %2452 = vmatprep.subr.mxu0 0.0
          %2453 = vmatpush1.msra.mxu0 0.0
          %2454 = vmatprep.subr.mxu0 0.0
          %2455 = vmatpush1.msra.mxu0 0.0
          %2456 = vmatprep.subr.mxu0 0.0
          %2457 = vmatpush1.msra.mxu0 0.0
          %2458 = vmatprep.subr.mxu0 0.0
          %2459 = vmatpush1.msra.mxu0 0.0
          %2460 = vmatprep.subr.mxu0 0.0
          %2461 = vmatpush1.msra.mxu0 0.0
          %2462 = vmatprep.subr.mxu0 0.0
          %2463 = vmatpush1.msra.mxu0 0.0
          %2464 = vmatprep.subr.mxu0 0.0
          %2465 = vmatpush1.msra.mxu0 0.0
          %2466 = vmatprep.subr.mxu0 0.0
          %2467 = vmatpush1.msra.mxu0 0.0
          %2468 = vmatprep.mubr.f32.mxu0 0.0
          %2469 = vmatmul.mubr.f32.gmra.mrb[0].mxu0 %v2399
          %v2470 = vpop.f32.mrb[0].mxu0
          %v2471 = vadd.f32 0.0, %v2470
          %v2472 = vpop.f32.mrb[0].mxu0
          %2473 = vmatprep.mubr.f32.mxu0 0.0
          %2474 = vmatmul.mubr.f32.gmra.mrb[0].mxu0 %v2402
          %v2475 = vpop.f32.mrb[0].mxu0
          %v2476 = vadd.f32 0.0, %v2475
          %v2477 = vpop.f32.mrb[0].mxu0
          %2478 = vdwg.mxu0
          %v2479 = vadd.f32 %v2396, %v2471
          %v2480 = vadd.f32 %v2397, %v2476
        $region162: #{tpu_custom_call.1} parent=115 // loop_footer
          %s2266 = sadd.s32 1, %s2262
        $region163: #{tpu_custom_call.1} parent=115 // loop_footer_branch
          %2261 = sbr.rel target = $region159
        $region164: #{tpu_custom_call.1} parent=115 // loop_exit
          _
        %v2481 = vrcp.pop %v2269
        %v2482 = vmul.f32 %v2271, %v2481
        %v2483 = vrcp.pop %v2270
        %v2484 = vmul.f32 %v2272, %v2483
        %2487 = vrot.lane.b32.xlu0 %v2482, 24
        %v2488 = vpop.permute.xlu0 %2487
        %2489 = vrot.lane.b32.xlu0 %v2484, 24
        %v2490 = vpop.permute.xlu0 %2489
        %vm2493 = vcmask 261312
        %2494 = vst.msk [vmem:[#allocation5] sm:$0xff] %vm2493, %v2488
        %2495 = vst.msk [vmem:[#allocation5 + $0x8] sm:$0xff] %vm2493, %v2490
        %v2496 = vld [vmem:[#allocation5] sm:$0xff]
        %v2497 = vld [vmem:[#allocation5 + $0x8] sm:$0xff]
        %v2498 = vld [vmem:[%s1043] sm:$0xff]
        %v2499 = vld [vmem:[%s1043 + $0x8] sm:$0xff]
        %v2500 = vld [vmem:[%s1043 + $0x10] sm:$0xff]
        %v2501 = vld [vmem:[%s1043 + $0x18] sm:$0xff]
        %v2502 = vld [vmem:[%s1046] sm:$0x1]
        %v2504 = vlaneseq
        %v2505 = vshrl.u32 %v2504, 7
        %v2506 = vsub.s32 0, %v2505
        %v2507 = vrot.slane %v2502, %v2506
        %v2510 = vsel %vm1211, %v2496, 0
        %v2513 = vsel %vm1211, %v2497, 0
        %2515 = vmatprep.subr.mxu0 0.0
        %2516 = vmatpush1.msra.mxu0 %v2498
        %2517 = vmatprep.subr.mxu0 0.0
        %2518 = vmatpush1.msra.mxu0 %v2499
        %2519 = vmatprep.subr.mxu0 0.0
        %2520 = vmatpush1.msra.mxu0 %v2500
        %2521 = vmatprep.subr.mxu0 0.0
        %2522 = vmatpush1.msra.mxu0 %v2501
        %2523 = vmatprep.subr.mxu0 0.0
        %2524 = vmatpush1.msra.mxu0 0.0
        %2525 = vmatprep.subr.mxu0 0.0
        %2526 = vmatpush1.msra.mxu0 0.0
        %2527 = vmatprep.subr.mxu0 0.0
        %2528 = vmatpush1.msra.mxu0 0.0
        %2529 = vmatprep.subr.mxu0 0.0
        %2530 = vmatpush1.msra.mxu0 0.0
        %2531 = vmatprep.subr.mxu0 0.0
        %2532 = vmatpush1.msra.mxu0 0.0
        %2533 = vmatprep.subr.mxu0 0.0
        %2534 = vmatpush1.msra.mxu0 0.0
        %2535 = vmatprep.subr.mxu0 0.0
        %2536 = vmatpush1.msra.mxu0 0.0
        %2537 = vmatprep.subr.mxu0 0.0
        %2538 = vmatpush1.msra.mxu0 0.0
        %2539 = vmatprep.subr.mxu0 0.0
        %2540 = vmatpush1.msra.mxu0 0.0
        %2541 = vmatprep.subr.mxu0 0.0
        %2542 = vmatpush1.msra.mxu0 0.0
        %2543 = vmatprep.subr.mxu0 0.0
        %2544 = vmatpush1.msra.mxu0 0.0
        %2545 = vmatprep.subr.mxu0 0.0
        %2546 = vmatpush1.msra.mxu0 0.0
        %2547 = vmatprep.subr.mxu0 0.0
        %2548 = vmatpush1.msra.mxu0 0.0
        %2549 = vmatprep.subr.mxu0 0.0
        %2550 = vmatpush1.msra.mxu0 0.0
        %2551 = vmatprep.subr.mxu0 0.0
        %2552 = vmatpush1.msra.mxu0 0.0
        %2553 = vmatprep.subr.mxu0 0.0
        %2554 = vmatpush1.msra.mxu0 0.0
        %2555 = vmatprep.subr.mxu0 0.0
        %2556 = vmatpush1.msra.mxu0 0.0
        %2557 = vmatprep.subr.mxu0 0.0
        %2558 = vmatpush1.msra.mxu0 0.0
        %2559 = vmatprep.subr.mxu0 0.0
        %2560 = vmatpush1.msra.mxu0 0.0
        %2561 = vmatprep.subr.mxu0 0.0
        %2562 = vmatpush1.msra.mxu0 0.0
        %2563 = vmatprep.subr.mxu0 0.0
        %2564 = vmatpush1.msra.mxu0 0.0
        %2565 = vmatprep.subr.mxu0 0.0
        %2566 = vmatpush1.msra.mxu0 0.0
        %2567 = vmatprep.subr.mxu0 0.0
        %2568 = vmatpush1.msra.mxu0 0.0
        %2569 = vmatprep.subr.mxu0 0.0
        %2570 = vmatpush1.msra.mxu0 0.0
        %2571 = vmatprep.subr.mxu0 0.0
        %2572 = vmatpush1.msra.mxu0 0.0
        %2573 = vmatprep.subr.mxu0 0.0
        %2574 = vmatpush1.msra.mxu0 0.0
        %2575 = vmatprep.subr.mxu0 0.0
        %2576 = vmatpush1.msra.mxu0 0.0
        %2577 = vmatprep.subr.mxu0 0.0
        %2578 = vmatpush1.msra.mxu0 0.0
        %2579 = vmatprep.mubr.f32.mxu0 0.0
        %2580 = vmatmul.mubr.f32.gmra.mrb[0].mxu0 %v2510
        %v2581 = vpop.f32.mrb[0].mxu0
        %v2582 = vadd.f32 %v2507, %v2581
        %v2583 = vpop.f32.mrb[0].mxu0
        %2584 = vmatprep.mubr.f32.mxu0 0.0
        %2585 = vmatmul.mubr.f32.gmra.mrb[0].mxu0 %v2513
        %v2586 = vpop.f32.mrb[0].mxu0
        %v2587 = vadd.f32 %v2507, %v2586
        %v2588 = vpop.f32.mrb[0].mxu0
        %2589 = vdwg.mxu0
        %v2590 = vadd.f32 %v1207, %v2582
        %v2591 = vadd.f32 %v1208, %v2587
        %v2592 = vld [vmem:[%s1049] sm:$0x1]
        %v2593 = vld [vmem:[%s1052] sm:$0x1]
        %v2594 = vsel %vm1211, %v2590, 0.0
        %2595 = vadd.xlane.f32.xlu0 %v2594
        %v2596 = vpop.xlane.xlu0 %2595
        %v2597 = vsel %vm1211, %v2591, 0.0
        %2598 = vadd.xlane.f32.xlu0 %v2597
        %v2599 = vpop.xlane.xlu0 %2598
        %v2600 = vmul.f32 %v2596, %v1218
        %v2601 = vmul.f32 %v2599, %v1218
        %v2602 = vsub.f32 %v2590, %v2600
        %v2603 = vsub.f32 %v2591, %v2601
        %v2604 = vmul.f32 %v2602, %v2602
        %v2605 = vmul.f32 %v2603, %v2603
        %v2606 = vsel %vm1211, %v2604, 0.0
        %2607 = vadd.xlane.f32.xlu0 %v2606
        %v2608 = vpop.xlane.xlu0 %2607
        %v2609 = vsel %vm1211, %v2605, 0.0
        %2610 = vadd.xlane.f32.xlu0 %v2609
        %v2611 = vpop.xlane.xlu0 %2610
        %v2612 = vmul.f32 %v2608, %v1218
        %v2613 = vmul.f32 %v2611, %v1218
        %v2614 = vadd.f32 %v2612, 1e-05
        %v2615 = vadd.f32 %v2613, 1e-05
        %v2616 = vrsqrt.pop %v2614
        %v2617 = vrsqrt.pop %v2615
        %v2618 = vmul.f32 %v2602, %v2616
        %v2619 = vmul.f32 %v2603, %v2617
        %v2621 = vlaneseq
        %v2622 = vshrl.u32 %v2621, 7
        %v2623 = vsub.s32 0, %v2622
        %v2624 = vrot.slane %v2592, %v2623
        %v2626 = vmul.f32 %v2618, %v2624
        %v2627 = vmul.f32 %v2619, %v2624
        %v2629 = vlaneseq
        %v2630 = vshrl.u32 %v2629, 7
        %v2631 = vsub.s32 0, %v2630
        %v2632 = vrot.slane %v2593, %v2631
        %v2634 = vadd.f32 %v2626, %v2632
        %v2635 = vadd.f32 %v2627, %v2632
        %v2636 = vld [vmem:[%s1057] sm:$0xff]
        %v2637 = vld [vmem:[%s1057 + $0x8] sm:$0xff]
        %v2638 = vld [vmem:[%s1057 + $0x10] sm:$0xff]
        %v2639 = vld [vmem:[%s1057 + $0x18] sm:$0xff]
        %v2640 = vld [vmem:[%s1060] sm:$0x1]
        %v2642 = vlaneseq
        %v2643 = vshrl.u32 %v2642, 7
        %v2644 = vsub.s32 0, %v2643
        %v2645 = vrot.slane %v2640, %v2644
        %v2648 = vsel %vm1211, %v2634, 0
        %v2651 = vsel %vm1211, %v2635, 0
        %2653 = vmatprep.subr.mxu0 0.0
        %2654 = vmatpush1.msra.mxu0 %v2636
        %2655 = vmatprep.subr.mxu0 0.0
        %2656 = vmatpush1.msra.mxu0 %v2637
        %2657 = vmatprep.subr.mxu0 0.0
        %2658 = vmatpush1.msra.mxu0 %v2638
        %2659 = vmatprep.subr.mxu0 0.0
        %2660 = vmatpush1.msra.mxu0 %v2639
        %2661 = vmatprep.subr.mxu0 0.0
        %2662 = vmatpush1.msra.mxu0 0.0
        %2663 = vmatprep.subr.mxu0 0.0
        %2664 = vmatpush1.msra.mxu0 0.0
        %2665 = vmatprep.subr.mxu0 0.0
        %2666 = vmatpush1.msra.mxu0 0.0
        %2667 = vmatprep.subr.mxu0 0.0
        %2668 = vmatpush1.msra.mxu0 0.0
        %2669 = vmatprep.subr.mxu0 0.0
        %2670 = vmatpush1.msra.mxu0 0.0
        %2671 = vmatprep.subr.mxu0 0.0
        %2672 = vmatpush1.msra.mxu0 0.0
        %2673 = vmatprep.subr.mxu0 0.0
        %2674 = vmatpush1.msra.mxu0 0.0
        %2675 = vmatprep.subr.mxu0 0.0
        %2676 = vmatpush1.msra.mxu0 0.0
        %2677 = vmatprep.subr.mxu0 0.0
        %2678 = vmatpush1.msra.mxu0 0.0
        %2679 = vmatprep.subr.mxu0 0.0
        %2680 = vmatpush1.msra.mxu0 0.0
        %2681 = vmatprep.subr.mxu0 0.0
        %2682 = vmatpush1.msra.mxu0 0.0
        %2683 = vmatprep.subr.mxu0 0.0
        %2684 = vmatpush1.msra.mxu0 0.0
        %2685 = vmatprep.subr.mxu0 0.0
        %2686 = vmatpush1.msra.mxu0 0.0
        %2687 = vmatprep.subr.mxu0 0.0
        %2688 = vmatpush1.msra.mxu0 0.0
        %2689 = vmatprep.subr.mxu0 0.0
        %2690 = vmatpush1.msra.mxu0 0.0
        %2691 = vmatprep.subr.mxu0 0.0
        %2692 = vmatpush1.msra.mxu0 0.0
        %2693 = vmatprep.subr.mxu0 0.0
        %2694 = vmatpush1.msra.mxu0 0.0
        %2695 = vmatprep.subr.mxu0 0.0
        %2696 = vmatpush1.msra.mxu0 0.0
        %2697 = vmatprep.subr.mxu0 0.0
        %2698 = vmatpush1.msra.mxu0 0.0
        %2699 = vmatprep.subr.mxu0 0.0
        %2700 = vmatpush1.msra.mxu0 0.0
        %2701 = vmatprep.subr.mxu0 0.0
        %2702 = vmatpush1.msra.mxu0 0.0
        %2703 = vmatprep.subr.mxu0 0.0
        %2704 = vmatpush1.msra.mxu0 0.0
        %2705 = vmatprep.subr.mxu0 0.0
        %2706 = vmatpush1.msra.mxu0 0.0
        %2707 = vmatprep.subr.mxu0 0.0
        %2708 = vmatpush1.msra.mxu0 0.0
        %2709 = vmatprep.subr.mxu0 0.0
        %2710 = vmatpush1.msra.mxu0 0.0
        %2711 = vmatprep.subr.mxu0 0.0
        %2712 = vmatpush1.msra.mxu0 0.0
        %2713 = vmatprep.subr.mxu0 0.0
        %2714 = vmatpush1.msra.mxu0 0.0
        %2715 = vmatprep.subr.mxu0 0.0
        %2716 = vmatpush1.msra.mxu0 0.0
        %2717 = vmatprep.mubr.f32.mxu0 0.0
        %2718 = vmatmul.mubr.f32.gmra.mrb[0].mxu0 %v2648
        %v2719 = vpop.f32.mrb[0].mxu0
        %v2720 = vadd.f32 %v2645, %v2719
        %v2721 = vpop.f32.mrb[0].mxu0
        %2722 = vmatprep.mubr.f32.mxu0 0.0
        %2723 = vmatmul.mubr.f32.gmra.mrb[0].mxu0 %v2651
        %v2724 = vpop.f32.mrb[0].mxu0
        %v2725 = vadd.f32 %v2645, %v2724
        %v2726 = vpop.f32.mrb[0].mxu0
        %2727 = vdwg.mxu0
        %v2728 = vmul.f32 %v2720, 0.5
        %v2729 = vmul.f32 %v2725, 0.5
        %v2730 = vmul.f32 %v2720, 0.70710677
        %v2731 = vmul.f32 %v2725, 0.70710677
        %v2732 = verf.f32.pop %v2730
        %v2733 = verf.f32.pop %v2731
        %v2734 = vadd.f32 %v2732, 1.0
        %v2735 = vadd.f32 %v2733, 1.0
        %v2736 = vmul.f32 %v2728, %v2734
        %v2737 = vmul.f32 %v2729, %v2735
        %v2738 = vld [vmem:[%s1065] sm:$0xff]
        %v2739 = vld [vmem:[%s1065 + $0x8] sm:$0xff]
        %v2740 = vld [vmem:[%s1065 + $0x10] sm:$0xff]
        %v2741 = vld [vmem:[%s1065 + $0x18] sm:$0xff]
        %v2742 = vld [vmem:[%s1065 + $0x20] sm:$0xff]
        %v2743 = vld [vmem:[%s1065 + $0x28] sm:$0xff]
        %v2744 = vld [vmem:[%s1065 + $0x30] sm:$0xff]
        %v2745 = vld [vmem:[%s1065 + $0x38] sm:$0xff]
        %v2746 = vld [vmem:[%s1065 + $0x40] sm:$0xff]
        %v2747 = vld [vmem:[%s1065 + $0x48] sm:$0xff]
        %v2748 = vld [vmem:[%s1065 + $0x50] sm:$0xff]
        %v2749 = vld [vmem:[%s1065 + $0x58] sm:$0xff]
        %v2750 = vld [vmem:[%s1065 + $0x60] sm:$0xff]
        %v2751 = vld [vmem:[%s1065 + $0x68] sm:$0xff]
        %v2752 = vld [vmem:[%s1065 + $0x70] sm:$0xff]
        %v2753 = vld [vmem:[%s1065 + $0x78] sm:$0xff]
        %v2754 = vld [vmem:[%s1068] sm:$0x1]
        %v2756 = vlaneseq
        %v2757 = vshrl.u32 %v2756, 7
        %v2758 = vsub.s32 0, %v2757
        %v2759 = vrot.slane %v2754, %v2758
        %2761 = vmatprep.subr.mxu0 0.0
        %2762 = vmatpush1.msra.mxu0 %v2738
        %2763 = vmatprep.subr.mxu0 0.0
        %2764 = vmatpush1.msra.mxu0 %v2739
        %2765 = vmatprep.subr.mxu0 0.0
        %2766 = vmatpush1.msra.mxu0 %v2740
        %2767 = vmatprep.subr.mxu0 0.0
        %2768 = vmatpush1.msra.mxu0 %v2741
        %2769 = vmatprep.subr.mxu0 0.0
        %2770 = vmatpush1.msra.mxu0 %v2742
        %2771 = vmatprep.subr.mxu0 0.0
        %2772 = vmatpush1.msra.mxu0 %v2743
        %2773 = vmatprep.subr.mxu0 0.0
        %2774 = vmatpush1.msra.mxu0 %v2744
        %2775 = vmatprep.subr.mxu0 0.0
        %2776 = vmatpush1.msra.mxu0 %v2745
        %2777 = vmatprep.subr.mxu0 0.0
        %2778 = vmatpush1.msra.mxu0 %v2746
        %2779 = vmatprep.subr.mxu0 0.0
        %2780 = vmatpush1.msra.mxu0 %v2747
        %2781 = vmatprep.subr.mxu0 0.0
        %2782 = vmatpush1.msra.mxu0 %v2748
        %2783 = vmatprep.subr.mxu0 0.0
        %2784 = vmatpush1.msra.mxu0 %v2749
        %2785 = vmatprep.subr.mxu0 0.0
        %2786 = vmatpush1.msra.mxu0 %v2750
        %2787 = vmatprep.subr.mxu0 0.0
        %2788 = vmatpush1.msra.mxu0 %v2751
        %2789 = vmatprep.subr.mxu0 0.0
        %2790 = vmatpush1.msra.mxu0 %v2752
        %2791 = vmatprep.subr.mxu0 0.0
        %2792 = vmatpush1.msra.mxu0 %v2753
        %2793 = vmatprep.subr.mxu0 0.0
        %2794 = vmatpush1.msra.mxu0 0.0
        %2795 = vmatprep.subr.mxu0 0.0
        %2796 = vmatpush1.msra.mxu0 0.0
        %2797 = vmatprep.subr.mxu0 0.0
        %2798 = vmatpush1.msra.mxu0 0.0
        %2799 = vmatprep.subr.mxu0 0.0
        %2800 = vmatpush1.msra.mxu0 0.0
        %2801 = vmatprep.subr.mxu0 0.0
        %2802 = vmatpush1.msra.mxu0 0.0
        %2803 = vmatprep.subr.mxu0 0.0
        %2804 = vmatpush1.msra.mxu0 0.0
        %2805 = vmatprep.subr.mxu0 0.0
        %2806 = vmatpush1.msra.mxu0 0.0
        %2807 = vmatprep.subr.mxu0 0.0
        %2808 = vmatpush1.msra.mxu0 0.0
        %2809 = vmatprep.subr.mxu0 0.0
        %2810 = vmatpush1.msra.mxu0 0.0
        %2811 = vmatprep.subr.mxu0 0.0
        %2812 = vmatpush1.msra.mxu0 0.0
        %2813 = vmatprep.subr.mxu0 0.0
        %2814 = vmatpush1.msra.mxu0 0.0
        %2815 = vmatprep.subr.mxu0 0.0
        %2816 = vmatpush1.msra.mxu0 0.0
        %2817 = vmatprep.subr.mxu0 0.0
        %2818 = vmatpush1.msra.mxu0 0.0
        %2819 = vmatprep.subr.mxu0 0.0
        %2820 = vmatpush1.msra.mxu0 0.0
        %2821 = vmatprep.subr.mxu0 0.0
        %2822 = vmatpush1.msra.mxu0 0.0
        %2823 = vmatprep.subr.mxu0 0.0
        %2824 = vmatpush1.msra.mxu0 0.0
        %2825 = vmatprep.mubr.f32.mxu0 0.0
        %2826 = vmatmul.mubr.f32.gmra.mrb[0].mxu0 %v2736
        %v2827 = vpop.f32.mrb[0].mxu0
        %v2828 = vadd.f32 %v2759, %v2827
        %v2829 = vpop.f32.mrb[0].mxu0
        %2830 = vmatprep.mubr.f32.mxu0 0.0
        %2831 = vmatmul.mubr.f32.gmra.mrb[0].mxu0 %v2737
        %v2832 = vpop.f32.mrb[0].mxu0
        %v2833 = vadd.f32 %v2759, %v2832
        %v2834 = vpop.f32.mrb[0].mxu0
        %2835 = vdwg.mxu0
        %v2836 = vadd.f32 %v2590, %v2828
        %v2837 = vadd.f32 %v2591, %v2833
        %2838 = vst.msk [vmem:[#allocation2] sm:$0xff] %vm1211, %v2836
        %2839 = vst.msk [vmem:[#allocation2 + $0x8] sm:$0xff] %vm1211, %v2837
        %p2840 = scmp.eq.s32.totalorder %s46, 1
        // Predicated region
        $region165: #{tpu_custom_call.1} parent=115 // pred_check
          %p2841 = pneg %p2840
        $region166: #{tpu_custom_call.1} parent=115 // pred_check_branch
          %2843 = sbr.rel (%p2841) target = $region168
        $region167: #{tpu_custom_call.1} parent=115 // pred_region
          %v2844 = vld [vmem:[%s5] sm:$0x1]
          %v2845 = vld [vmem:[%s6] sm:$0x1]
          %v2846 = vsel %vm1211, %v2836, 0.0
          %2847 = vadd.xlane.f32.xlu0 %v2846
          %v2848 = vpop.xlane.xlu0 %2847
          %v2849 = vsel %vm1211, %v2837, 0.0
          %2850 = vadd.xlane.f32.xlu0 %v2849
          %v2851 = vpop.xlane.xlu0 %2850
          %v2852 = vmul.f32 %v2848, %v1218
          %v2853 = vmul.f32 %v2851, %v1218
          %v2854 = vsub.f32 %v2836, %v2852
          %v2855 = vsub.f32 %v2837, %v2853
          %v2856 = vmul.f32 %v2854, %v2854
          %v2857 = vmul.f32 %v2855, %v2855
          %v2858 = vsel %vm1211, %v2856, 0.0
          %2859 = vadd.xlane.f32.xlu0 %v2858
          %v2860 = vpop.xlane.xlu0 %2859
          %v2861 = vsel %vm1211, %v2857, 0.0
          %2862 = vadd.xlane.f32.xlu0 %v2861
          %v2863 = vpop.xlane.xlu0 %2862
          %v2864 = vmul.f32 %v2860, %v1218
          %v2865 = vmul.f32 %v2863, %v1218
          %v2866 = vadd.f32 %v2864, 1e-05
          %v2867 = vadd.f32 %v2865, 1e-05
          %v2868 = vrsqrt.pop %v2866
          %v2869 = vrsqrt.pop %v2867
          %v2870 = vmul.f32 %v2854, %v2868
          %v2871 = vmul.f32 %v2855, %v2869
          %v2873 = vlaneseq
          %v2874 = vshrl.u32 %v2873, 7
          %v2875 = vsub.s32 0, %v2874
          %v2876 = vrot.slane %v2844, %v2875
          %v2878 = vmul.f32 %v2870, %v2876
          %v2879 = vmul.f32 %v2871, %v2876
          %v2881 = vlaneseq
          %v2882 = vshrl.u32 %v2881, 7
          %v2883 = vsub.s32 0, %v2882
          %v2884 = vrot.slane %v2845, %v2883
          %v2886 = vadd.f32 %v2878, %v2884
          %v2887 = vadd.f32 %v2879, %v2884
          %v2888 = vld [vmem:[#allocation11] sm:$0xff]
          %v2889 = vld [vmem:[#allocation11 + $0x8] sm:$0xff]
          %v2890 = vld [vmem:[#allocation11 + $0x10] sm:$0xff]
          %v2891 = vld [vmem:[#allocation11 + $0x18] sm:$0xff]
          %v2892 = vld [vmem:[#allocation12] sm:$0x1]
          %v2894 = vlaneseq
          %v2895 = vshrl.u32 %v2894, 7
          %v2896 = vsub.s32 0, %v2895
          %v2897 = vrot.slane %v2892, %v2896
          %v2900 = vsel %vm1211, %v2886, 0
          %v2903 = vsel %vm1211, %v2887, 0
          %2905 = vmatprep.subr.mxu0 0.0
          %2906 = vmatpush1.msra.mxu0 %v2888
          %2907 = vmatprep.subr.mxu0 0.0
          %2908 = vmatpush1.msra.mxu0 %v2889
          %2909 = vmatprep.subr.mxu0 0.0
          %2910 = vmatpush1.msra.mxu0 %v2890
          %2911 = vmatprep.subr.mxu0 0.0
          %2912 = vmatpush1.msra.mxu0 %v2891
          %2913 = vmatprep.subr.mxu0 0.0
          %2914 = vmatpush1.msra.mxu0 0.0
          %2915 = vmatprep.subr.mxu0 0.0
          %2916 = vmatpush1.msra.mxu0 0.0
          %2917 = vmatprep.subr.mxu0 0.0
          %2918 = vmatpush1.msra.mxu0 0.0
          %2919 = vmatprep.subr.mxu0 0.0
          %2920 = vmatpush1.msra.mxu0 0.0
          %2921 = vmatprep.subr.mxu0 0.0
          %2922 = vmatpush1.msra.mxu0 0.0
          %2923 = vmatprep.subr.mxu0 0.0
          %2924 = vmatpush1.msra.mxu0 0.0
          %2925 = vmatprep.subr.mxu0 0.0
          %2926 = vmatpush1.msra.mxu0 0.0
          %2927 = vmatprep.subr.mxu0 0.0
          %2928 = vmatpush1.msra.mxu0 0.0
          %2929 = vmatprep.subr.mxu0 0.0
          %2930 = vmatpush1.msra.mxu0 0.0
          %2931 = vmatprep.subr.mxu0 0.0
          %2932 = vmatpush1.msra.mxu0 0.0
          %2933 = vmatprep.subr.mxu0 0.0
          %2934 = vmatpush1.msra.mxu0 0.0
          %2935 = vmatprep.subr.mxu0 0.0
          %2936 = vmatpush1.msra.mxu0 0.0
          %2937 = vmatprep.subr.mxu0 0.0
          %2938 = vmatpush1.msra.mxu0 0.0
          %2939 = vmatprep.subr.mxu0 0.0
          %2940 = vmatpush1.msra.mxu0 0.0
          %2941 = vmatprep.subr.mxu0 0.0
          %2942 = vmatpush1.msra.mxu0 0.0
          %2943 = vmatprep.subr.mxu0 0.0
          %2944 = vmatpush1.msra.mxu0 0.0
          %2945 = vmatprep.subr.mxu0 0.0
          %2946 = vmatpush1.msra.mxu0 0.0
          %2947 = vmatprep.subr.mxu0 0.0
          %2948 = vmatpush1.msra.mxu0 0.0
          %2949 = vmatprep.subr.mxu0 0.0
          %2950 = vmatpush1.msra.mxu0 0.0
          %2951 = vmatprep.subr.mxu0 0.0
          %2952 = vmatpush1.msra.mxu0 0.0
          %2953 = vmatprep.subr.mxu0 0.0
          %2954 = vmatpush1.msra.mxu0 0.0
          %2955 = vmatprep.subr.mxu0 0.0
          %2956 = vmatpush1.msra.mxu0 0.0
          %2957 = vmatprep.subr.mxu0 0.0
          %2958 = vmatpush1.msra.mxu0 0.0
          %2959 = vmatprep.subr.mxu0 0.0
          %2960 = vmatpush1.msra.mxu0 0.0
          %2961 = vmatprep.subr.mxu0 0.0
          %2962 = vmatpush1.msra.mxu0 0.0
          %2963 = vmatprep.subr.mxu0 0.0
          %2964 = vmatpush1.msra.mxu0 0.0
          %2965 = vmatprep.subr.mxu0 0.0
          %2966 = vmatpush1.msra.mxu0 0.0
          %2967 = vmatprep.subr.mxu0 0.0
          %2968 = vmatpush1.msra.mxu0 0.0
          %2969 = vmatprep.mubr.f32.mxu0 0.0
          %2970 = vmatmul.mubr.f32.gmra.mrb[0].mxu0 %v2900
          %v2971 = vpop.f32.mrb[0].mxu0
          %v2972 = vadd.f32 %v2897, %v2971
          %v2973 = vpop.f32.mrb[0].mxu0
          %2974 = vmatprep.mubr.f32.mxu0 0.0
          %2975 = vmatmul.mubr.f32.gmra.mrb[0].mxu0 %v2903
          %v2976 = vpop.f32.mrb[0].mxu0
          %v2977 = vadd.f32 %v2897, %v2976
          %v2978 = vpop.f32.mrb[0].mxu0
          %2979 = vdwg.mxu0
          %2980 = vst [vmem:[%s1001] sm:$0xff] %v2972
          %2981 = vst [vmem:[%s1001 + $0x8] sm:$0xff] %v2977
        $region168: #{tpu_custom_call.1} parent=115 // pred_fallthru
          _
        %s2982 = sand.u32 %s650, 1
        %s2983 = scalar_lea.sflag [#allocation8], %s2982
        %s2984 = sand.u32 %s650, 1
        %s2985 = smul.addr %s2984, 16
        %s2986 = scalar_lea.vmem [#allocation14], %s2985
        // Predicated region
        $region169: #{tpu_custom_call.1} parent=115 // pred_check
          %p2987 = pneg %p660
        $region170: #{tpu_custom_call.1} parent=115 // pred_check_branch
          %2989 = sbr.rel (%p2987) target = $region172
        $region171: #{tpu_custom_call.1} parent=115 // pred_region
          %s2991 = ssub.s32 256, 256
          %2992 = vsyncadd %s2983, %s2991
          %s2993 = smul.addr %s45, 2
          %s2994 = smul.addr %s2993, 128
          %s2995 = scalar_lea.hbm %s24, %s2994
          %s2996 = sshll.u32 %s2986, 4
          %s2997 = int_to_ptr.vmem [resolvable:$true] %s2996
          %3002 = dma.vmem_to_hbm [thread:$0]  %s2997, 256, %s2995, %s2983, 128, 128, 8
        $region172: #{tpu_custom_call.1} parent=115 // pred_fallthru
          _
      $region116: #{tpu_custom_call.1} parent=5 // pred_fallthru
        _
      %p3003 = scmp.le.s32.totalorder 2, %s36
      // Predicated region
      $region173: #{tpu_custom_call.1} parent=5 // pred_check
        %p3004 = pneg %p3003
      $region174: #{tpu_custom_call.1} parent=5 // pred_check_branch
        %3006 = sbr.rel (%p3004) target = $region176
      $region175: #{tpu_custom_call.1} parent=5 // pred_region
        %s3007 = ssub.s32 %s36, 2
        // Predicated region
        $region177: #{tpu_custom_call.1} parent=175 // pred_check
          %p3008 = pneg %p666
        $region178: #{tpu_custom_call.1} parent=175 // pred_check_branch
          %3010 = sbr.rel (%p3008) target = $region180
        $region179: #{tpu_custom_call.1} parent=175 // pred_region
          %s3011 = sand.u32 %s651, 1
          %s3012 = scalar_lea.sflag [#allocation8], %s3011
          %s3013 = sand.u32 %s651, 1
          %s3014 = smul.addr %s3013, 16
          %s3015 = scalar_lea.vmem [#allocation14], %s3014
          %3016 = dma.done %s3012, 256
        $region180: #{tpu_custom_call.1} parent=175 // pred_fallthru
          _
      $region176: #{tpu_custom_call.1} parent=5 // pred_fallthru
        _
    $region6: #{tpu_custom_call.1} parent=1 // loop_footer
      %s40 = sadd.s32 1, %s36
    $region7: #{tpu_custom_call.1} parent=1 // loop_footer_branch
      %35 = sbr.rel target = $region3
    $region8: #{tpu_custom_call.1} parent=1 // loop_exit
      _
    %3017 = vsyncpa [#allocation7], 1
    %s3018 = scalar_lea.sflag [#allocation7], 1
    %3019 = vsyncpa %s3018, 1
    %3020 = vsyncpa [#allocation10], 1
    %3021 = vsyncpa [#allocation13], 1
    %3022 = vsyncpa [#allocation8], 1
    %s3023 = scalar_lea.sflag [#allocation8], 1
    %3024 = vsyncpa %s3023, 1

</llo_original>
